<compile_context>
chip_gen: v5e
topology: v5e:2x2
jax: 0.10.0
libtpu: 0.0.40
codegen_flags: <defaults>
</compile_context>

<pallas_src>
import jax
import jax.numpy as jnp
from jax import lax
import numpy as np
from jax.experimental import pallas as pl
from jax.experimental.pallas import tpu as pltpu

EPS = 1e-5          # nn.InstanceNorm3d default eps (affine=False)
NEG_SLOPE = 0.01    # nn.LeakyReLU default negative_slope
VMEM_LIMIT = 48 * 1024 * 1024   # within physical VMEM on v5e/v6e (128 MiB) and v7x (64 MiB)


# ------------------------------ Pallas kernels ------------------------------

def _make_stage1_kernel(td, H, W, C):
    """dw1 (depthwise 3x3x3) + pw1 (1x1x1 matmul) + InstanceNorm partial stats."""
    s_t = td * H * W

    def kernel(xt_ref, wdw_ref, wpw_ref, y1_ref, stats_ref):
        t = pl.program_id(1)
        xh = xt_ref[...].astype(jnp.float32)          # (td+2, H+2, W+2, C) halo'd input
        wdw = wdw_ref[...]                            # (27, C) f32 per-channel taps

        # depthwise 3x3x3 = 27 shifted FMAs (biases cancelled by InstanceNorm -> dropped)
        acc = None
        k = 0
        for kd in range(3):
            for kh in range(3):
                for kw in range(3):
                    term = xh[kd:kd + td, kh:kh + H, kw:kw + W, :] * wdw[k:k + 1]
                    acc = term if acc is None else acc + term
                    k += 1

        # pointwise 1x1x1 conv = MXU matmul, bf16 operands, f32 accumulation
        a2d = acc.reshape(s_t, C).astype(jnp.bfloat16)
        y = jnp.dot(a2d, wpw_ref[...], preferred_element_type=jnp.float32)   # (s_t, C)

        # two-phase InstanceNorm: accumulate per-(n, c) sum and sum-of-squares
        @pl.when(t == 0)
        def _():
            stats_ref[...] = jnp.zeros_like(stats_ref)
        rsum = jnp.sum(y, axis=0, keepdims=True)          # (1, C)
        rsq = jnp.sum(y * y, axis=0, keepdims=True)       # (1, C)
        stats_ref[...] += jnp.concatenate([rsum, rsq], axis=0)

        y1_ref[...] = y.reshape(td, H, W, C).astype(y1_ref.dtype)   # bf16 to HBM

    return kernel


def _make_stage2_kernel(td, D, H, W, C):
    """normalize + LeakyReLU (on the fly) + dw2 (depthwise 3x3x3) + pw2 + residual."""
    s_t = td * H * W

    def kernel(y1t_ref, scale_ref, shift_ref, wdw_ref, wpw_ref, beff_ref, xres_ref, o_ref):
        t = pl.program_id(1)
        z = y1t_ref[...].astype(jnp.float32)              # (td+2, H+2, W+2, C)
        # InstanceNorm affine (per n, c) + LeakyReLU, applied to the halo tile in f32
        z = z * scale_ref[...] + shift_ref[...]
        z = jnp.where(z > 0, z, NEG_SLOPE * z)

        # Conv3d padding=1 zero-pads *after* norm+LeakyReLU -> re-zero the pad positions.
        gd = lax.broadcasted_iota(jnp.int32, z.shape, 0) + t * td   # global padded-D index
        ih = lax.broadcasted_iota(jnp.int32, z.shape, 1)
        iw = lax.broadcasted_iota(jnp.int32, z.shape, 2)
        valid = ((gd >= 1) & (gd <= D) & (ih >= 1) & (ih <= H) & (iw >= 1) & (iw <= W))
        z = jnp.where(valid, z, 0.0)

        wdw = wdw_ref[...]                                # (27, C)
        acc = None
        k = 0
        for kd in range(3):
            for kh in range(3):
                for kw in range(3):
                    term = z[kd:kd + td, kh:kh + H, kw:kw + W, :] * wdw[k:k + 1]
                    acc = term if acc is None else acc + term
                    k += 1

        a2d = acc.reshape(s_t, C).astype(jnp.bfloat16)
        y = jnp.dot(a2d, wpw_ref[...], preferred_element_type=jnp.float32)   # (s_t, C)
        y = y + beff_ref[...]                             # pw2 bias (+ folded dw2 bias)
        y = y + xres_ref[...].reshape(s_t, C)             # residual add (f32)
        o_ref[...] = y.reshape(td, H, W, C).astype(o_ref.dtype)

    return kernel


# ------------------------------ pallas_call glue -----------------------------

def _overlap_d_tiles(xp, td):
    """xp: (N, D+2, Hp, Wp, C) padded volume -> (N, nT, td+2, Hp, Wp, C) overlapping
    depth tiles with a 1-plane halo.  Duplication factor (td+2)/td (not 27x)."""
    D = xp.shape[1] - 2
    n_t = D // td
    return jnp.stack([xp[:, t * td: t * td + td + 2] for t in range(n_t)], axis=1)


def _stage1(xt, wdw1, wpw1, N, n_t, td, D, H, W, C):
    kernel = _make_stage1_kernel(td, H, W, C)
    grid_spec = pltpu.PrefetchScalarGridSpec(
        num_scalar_prefetch=0,
        grid=(N, n_t),
        in_specs=[
            pl.BlockSpec((None, None, td + 2, H + 2, W + 2, C),
                         lambda n, t: (n, t, 0, 0, 0, 0)),
            pl.BlockSpec((27, C), lambda n, t: (0, 0)),
            pl.BlockSpec((C, C), lambda n, t: (0, 0)),
        ],
        out_specs=[
            pl.BlockSpec((None, td, H, W, C), lambda n, t: (n, t, 0, 0, 0)),
            pl.BlockSpec((None, 2, C), lambda n, t: (n, 0, 0)),      # resident accumulator
        ],
    )
    return pl.pallas_call(
        kernel,
        out_shape=(jax.ShapeDtypeStruct((N, D, H, W, C), jnp.bfloat16),
                   jax.ShapeDtypeStruct((N, 2, C), jnp.float32)),
        grid_spec=grid_spec,
        compiler_params=pltpu.CompilerParams(
            dimension_semantics=("parallel", "arbitrary"),
            vmem_limit_bytes=VMEM_LIMIT),
    )(xt, wdw1, wpw1)


def _stage2(y1t, scale, shift, wdw2, wpw2, beff, xres, N, n_t, td, D, H, W, C):
    kernel = _make_stage2_kernel(td, D, H, W, C)
    grid_spec = pltpu.PrefetchScalarGridSpec(
        num_scalar_prefetch=0,
        grid=(N, n_t),
        in_specs=[
            pl.BlockSpec((None, None, td + 2, H + 2, W + 2, C),
                         lambda n, t: (n, t, 0, 0, 0, 0)),
            pl.BlockSpec((None, 1, C), lambda n, t: (n, 0, 0)),
            pl.BlockSpec((None, 1, C), lambda n, t: (n, 0, 0)),
            pl.BlockSpec((27, C), lambda n, t: (0, 0)),
            pl.BlockSpec((C, C), lambda n, t: (0, 0)),
            pl.BlockSpec((1, C), lambda n, t: (0, 0)),
            pl.BlockSpec((None, td, H, W, C), lambda n, t: (n, t, 0, 0, 0)),
        ],
        out_specs=pl.BlockSpec((None, td, H, W, C), lambda n, t: (n, t, 0, 0, 0)),
    )
    return pl.pallas_call(
        kernel,
        out_shape=jax.ShapeDtypeStruct((N, D, H, W, C), jnp.float32),
        grid_spec=grid_spec,
        compiler_params=pltpu.CompilerParams(
            dimension_semantics=("parallel", "parallel"),
            vmem_limit_bytes=VMEM_LIMIT),
    )(y1t, scale, shift, wdw2, wpw2, beff, xres)


def _pick_d_tile(D, cap=8):
    if D <= cap:
        return D
    for td in range(cap, 0, -1):
        if D % td == 0:
            return td
    return 1


def bottom_conv(x_ncdhw, w_dw1, b_dw1, w_pw1, b_pw1, w_dw2, b_dw2, w_pw2, b_pw2,
                d_tile=None):
    """x_ncdhw: (N, C, D, H, W); weights in PyTorch Conv3d layouts:
       depthwise (C,1,3,3,3), pointwise (C,C,1,1,1), biases (C,)."""
    x = jnp.transpose(x_ncdhw, (0, 2, 3, 4, 1)).astype(jnp.float32)   # NDHWC
    N, D, H, W, C = x.shape
    td = _pick_d_tile(D) if d_tile is None else d_tile
    if D % td != 0:
        raise ValueError(f"d_tile={td} must divide D={D}")
    n_t = D // td
    S = D * H * W

    # weights -> channels-last forms
    wdw1m = jnp.asarray(w_dw1).reshape(C, 27).T.astype(jnp.float32)       # (27, C)
    wdw2m = jnp.asarray(w_dw2).reshape(C, 27).T.astype(jnp.float32)       # (27, C)
    wpw1m = jnp.asarray(w_pw1).reshape(C, C).T.astype(jnp.bfloat16)       # (Cin, Cout)
    wpw2_f32 = jnp.asarray(w_pw2).reshape(C, C).T.astype(jnp.float32)
    wpw2m = wpw2_f32.astype(jnp.bfloat16)
    # b_dw1 / b_pw1 are exactly cancelled by InstanceNorm (affine=False) -> dropped.
    # b_dw2 folds through the 1x1x1 conv into one effective pw2 bias.
    b_eff2 = (jnp.asarray(b_pw2).astype(jnp.float32)
              + jnp.asarray(b_dw2).astype(jnp.float32) @ wpw2_f32).reshape(1, C)

    # ---- stage 1: dw1 + pw1 + InstanceNorm stats (two-phase reduction over D tiles)
    xp = jnp.pad(x, ((0, 0), (1, 1), (1, 1), (1, 1), (0, 0)))
    xt = _overlap_d_tiles(xp, td).astype(jnp.bfloat16)    # (N, nT, td+2, H+2, W+2, C)
    y1, stats = _stage1(xt, wdw1m, wpw1m, N, n_t, td, D, H, W, C)

    # finalize InstanceNorm stats (tiny (N, C) math, one-pass E[y^2]-mean^2 form)
    mean = stats[:, 0, :] / S
    var = stats[:, 1, :] / S - mean * mean
    inv = lax.rsqrt(var + EPS)
    scale = inv.reshape(N, 1, C)
    shift = (-mean * inv).reshape(N, 1, C)

    # ---- stage 2: norm+LeakyReLU on the fly + dw2 + pw2 + residual
    y1p = jnp.pad(y1, ((0, 0), (1, 1), (1, 1), (1, 1), (0, 0)))
    y1t = _overlap_d_tiles(y1p, td)                       # bf16 halo tiles
    out = _stage2(y1t, scale, shift, wdw2m, wpw2m, b_eff2, x,
                  N, n_t, td, D, H, W, C)
    return jnp.transpose(out, (0, 4, 1, 2, 3))            # back to NCDHW


# --------------------------- pure-JAX reference -----------------------------

def _reference(x_ncdhw, w_dw1, b_dw1, w_pw1, b_pw1, w_dw2, b_dw2, w_pw2, b_pw2):
    x = jnp.transpose(x_ncdhw, (0, 2, 3, 4, 1)).astype(jnp.float32)
    C = x.shape[-1]
    dn = ('NDHWC', 'DHWIO', 'NDHWC')
    hi = lax.Precision.HIGHEST

    def dw(v, w, b):
        wk = jnp.transpose(w, (2, 3, 4, 1, 0))            # (3,3,3,1,C)
        return lax.conv_general_dilated(v, wk, (1, 1, 1), 'SAME', dimension_numbers=dn,
                                        feature_group_count=C, precision=hi) + b

    def pw(v, w, b):
        wk = jnp.transpose(w, (2, 3, 4, 1, 0))            # (1,1,1,Cin,Cout)
        return lax.conv_general_dilated(v, wk, (1, 1, 1), 'SAME', dimension_numbers=dn,
                                        precision=hi) + b

    y = pw(dw(x, w_dw1, b_dw1), w_pw1, b_pw1)
    mean = y.mean(axis=(1, 2, 3), keepdims=True)
    var = ((y - mean) ** 2).mean(axis=(1, 2, 3), keepdims=True)
    y = (y - mean) * lax.rsqrt(var + EPS)
    y = jnp.where(y > 0, y, NEG_SLOPE * y)
    z = pw(dw(y, w_dw2, b_dw2), w_pw2, b_pw2)
    out = z + x
    return jnp.transpose(out, (0, 4, 1, 2, 3))


if __name__ == "__main__":
    key = jax.random.PRNGKey(0)
    ks = jax.random.split(key, 9)

    N, C, D, H, W = 2, 8, 8, 8, 8
    x = jax.random.normal(ks[0], (N, C, D, H, W), jnp.float32)
    w_dw1 = jax.random.normal(ks[1], (C, 1, 3, 3, 3), jnp.float32) * 0.1
    b_dw1 = jax.random.normal(ks[2], (C,), jnp.float32) * 0.1
    w_pw1 = jax.random.normal(ks[3], (C, C, 1, 1, 1), jnp.float32) * 0.1
    b_pw1 = jax.random.normal(ks[4], (C,), jnp.float32) * 0.1
    w_dw2 = jax.random.normal(ks[5], (C, 1, 3, 3, 3), jnp.float32) * 0.1
    b_dw2 = jax.random.normal(ks[6], (C,), jnp.float32) * 0.1
    w_pw2 = jax.random.normal(ks[7], (C, C, 1, 1, 1), jnp.float32) * 0.1
    b_pw2 = jax.random.normal(ks[8], (C,), jnp.float32) * 0.1

    # d_tile=4 -> 2 depth tiles per batch element: exercises the halo handling and the
    # two-phase InstanceNorm accumulator path.
    out = jax.block_until_ready(
        bottom_conv(x, w_dw1, b_dw1, w_pw1, b_pw1, w_dw2, b_dw2, w_pw2, b_pw2, d_tile=4))
    ref = jax.block_until_ready(
        _reference(x, w_dw1, b_dw1, w_pw1, b_pw1, w_dw2, b_dw2, w_pw2, b_pw2))

    # bf16 activations / MXU operands with f32 accumulation -> loosened tolerance.
    np.testing.assert_allclose(np.asarray(out), np.asarray(ref), rtol=2e-2, atol=2e-2)
    print("KERNEL_OK")
</pallas_src>

<mosaic_0001>
module attributes {stable_mosaic.version = 11 : i64} {
  func.func @kernel(%arg0: i32, %arg1: i32, %arg2: memref<1x1x6x10x10x8xbf16, #tpu.memory_space<vmem>>, %arg3: memref<27x8xf32, #tpu.memory_space<vmem>>, %arg4: memref<8x8xbf16, #tpu.memory_space<vmem>>, %arg5: memref<1x4x8x8x8xbf16, #tpu.memory_space<vmem>>, %arg6: memref<1x2x8xf32, #tpu.memory_space<vmem>>) attributes {dimension_semantics = [#tpu.dimension_semantics<parallel>, #tpu.dimension_semantics<arbitrary>], iteration_bounds = array<i64: 2, 2>, scalar_prefetch = 0 : i64, scratch_operands = 0 : i64, tpu.core_type = #tpu.core_type<tc>, window_params = [{transform_indices = @transform_0, window_bounds = array<i64: 1, 1, 6, 10, 10, 8>}, {pipeline_mode = #tpu.pipeline_mode<synchronous>, transform_indices = @transform_1, window_bounds = array<i64: 27, 8>}, {pipeline_mode = #tpu.pipeline_mode<synchronous>, transform_indices = @transform_2, window_bounds = array<i64: 8, 8>}, {transform_indices = @transform_3, window_bounds = array<i64: 1, 4, 8, 8, 8>}, {transform_indices = @transform_4, window_bounds = array<i64: 1, 2, 8>}]} {
    %c0 = arith.constant 0 : index
    %c0_0 = arith.constant 0 : index
    %c0_1 = arith.constant 0 : index
    %c0_2 = arith.constant 0 : index
    %c0_3 = arith.constant 0 : index
    %c0_4 = arith.constant 0 : index
    %0 = vector.load %arg2[%c0, %c0_0, %c0_1, %c0_2, %c0_3, %c0_4] : memref<1x1x6x10x10x8xbf16, #tpu.memory_space<vmem>>, vector<1x1x6x10x10x8xbf16>
    %1 = vector.shape_cast %0 : vector<1x1x6x10x10x8xbf16> to vector<6x10x10x8xbf16>
    %2 = arith.extf %1 : vector<6x10x10x8xbf16> to vector<6x10x10x8xf32>
    %c0_5 = arith.constant 0 : index
    %c0_6 = arith.constant 0 : index
    %3 = vector.load %arg3[%c0_5, %c0_6] : memref<27x8xf32, #tpu.memory_space<vmem>>, vector<27x8xf32>
    %4 = vector.extract_strided_slice %2 {offsets = [0, 0, 0, 0], sizes = [4, 8, 8, 8], strides = [1, 1, 1, 1]} : vector<6x10x10x8xf32> to vector<4x8x8x8xf32>
    %5 = vector.extract_strided_slice %3 {offsets = [0, 0], sizes = [1, 8], strides = [1, 1]} : vector<27x8xf32> to vector<1x8xf32>
    %6 = vector.shape_cast %5 : vector<1x8xf32> to vector<1x1x1x8xf32>
    %7 = vector.broadcast %6 : vector<1x1x1x8xf32> to vector<4x8x8x8xf32>
    %8 = arith.mulf %4, %7 : vector<4x8x8x8xf32>
    %9 = vector.extract_strided_slice %2 {offsets = [0, 0, 1, 0], sizes = [4, 8, 8, 8], strides = [1, 1, 1, 1]} : vector<6x10x10x8xf32> to vector<4x8x8x8xf32>
    %10 = vector.extract_strided_slice %3 {offsets = [1, 0], sizes = [1, 8], strides = [1, 1]} : vector<27x8xf32> to vector<1x8xf32>
    %11 = vector.shape_cast %10 : vector<1x8xf32> to vector<1x1x1x8xf32>
    %12 = vector.broadcast %11 : vector<1x1x1x8xf32> to vector<4x8x8x8xf32>
    %13 = arith.mulf %9, %12 : vector<4x8x8x8xf32>
    %14 = arith.addf %8, %13 : vector<4x8x8x8xf32>
    %15 = vector.extract_strided_slice %2 {offsets = [0, 0, 2, 0], sizes = [4, 8, 8, 8], strides = [1, 1, 1, 1]} : vector<6x10x10x8xf32> to vector<4x8x8x8xf32>
    %16 = vector.extract_strided_slice %3 {offsets = [2, 0], sizes = [1, 8], strides = [1, 1]} : vector<27x8xf32> to vector<1x8xf32>
    %17 = vector.shape_cast %16 : vector<1x8xf32> to vector<1x1x1x8xf32>
    %18 = vector.broadcast %17 : vector<1x1x1x8xf32> to vector<4x8x8x8xf32>
    %19 = arith.mulf %15, %18 : vector<4x8x8x8xf32>
    %20 = arith.addf %14, %19 : vector<4x8x8x8xf32>
    %21 = vector.extract_strided_slice %2 {offsets = [0, 1, 0, 0], sizes = [4, 8, 8, 8], strides = [1, 1, 1, 1]} : vector<6x10x10x8xf32> to vector<4x8x8x8xf32>
    %22 = vector.extract_strided_slice %3 {offsets = [3, 0], sizes = [1, 8], strides = [1, 1]} : vector<27x8xf32> to vector<1x8xf32>
    %23 = vector.shape_cast %22 : vector<1x8xf32> to vector<1x1x1x8xf32>
    %24 = vector.broadcast %23 : vector<1x1x1x8xf32> to vector<4x8x8x8xf32>
    %25 = arith.mulf %21, %24 : vector<4x8x8x8xf32>
    %26 = arith.addf %20, %25 : vector<4x8x8x8xf32>
    %27 = vector.extract_strided_slice %2 {offsets = [0, 1, 1, 0], sizes = [4, 8, 8, 8], strides = [1, 1, 1, 1]} : vector<6x10x10x8xf32> to vector<4x8x8x8xf32>
    %28 = vector.extract_strided_slice %3 {offsets = [4, 0], sizes = [1, 8], strides = [1, 1]} : vector<27x8xf32> to vector<1x8xf32>
    %29 = vector.shape_cast %28 : vector<1x8xf32> to vector<1x1x1x8xf32>
    %30 = vector.broadcast %29 : vector<1x1x1x8xf32> to vector<4x8x8x8xf32>
    %31 = arith.mulf %27, %30 : vector<4x8x8x8xf32>
    %32 = arith.addf %26, %31 : vector<4x8x8x8xf32>
    %33 = vector.extract_strided_slice %2 {offsets = [0, 1, 2, 0], sizes = [4, 8, 8, 8], strides = [1, 1, 1, 1]} : vector<6x10x10x8xf32> to vector<4x8x8x8xf32>
    %34 = vector.extract_strided_slice %3 {offsets = [5, 0], sizes = [1, 8], strides = [1, 1]} : vector<27x8xf32> to vector<1x8xf32>
    %35 = vector.shape_cast %34 : vector<1x8xf32> to vector<1x1x1x8xf32>
    %36 = vector.broadcast %35 : vector<1x1x1x8xf32> to vector<4x8x8x8xf32>
    %37 = arith.mulf %33, %36 : vector<4x8x8x8xf32>
    %38 = arith.addf %32, %37 : vector<4x8x8x8xf32>
    %39 = vector.extract_strided_slice %2 {offsets = [0, 2, 0, 0], sizes = [4, 8, 8, 8], strides = [1, 1, 1, 1]} : vector<6x10x10x8xf32> to vector<4x8x8x8xf32>
    %40 = vector.extract_strided_slice %3 {offsets = [6, 0], sizes = [1, 8], strides = [1, 1]} : vector<27x8xf32> to vector<1x8xf32>
    %41 = vector.shape_cast %40 : vector<1x8xf32> to vector<1x1x1x8xf32>
    %42 = vector.broadcast %41 : vector<1x1x1x8xf32> to vector<4x8x8x8xf32>
    %43 = arith.mulf %39, %42 : vector<4x8x8x8xf32>
    %44 = arith.addf %38, %43 : vector<4x8x8x8xf32>
    %45 = vector.extract_strided_slice %2 {offsets = [0, 2, 1, 0], sizes = [4, 8, 8, 8], strides = [1, 1, 1, 1]} : vector<6x10x10x8xf32> to vector<4x8x8x8xf32>
    %46 = vector.extract_strided_slice %3 {offsets = [7, 0], sizes = [1, 8], strides = [1, 1]} : vector<27x8xf32> to vector<1x8xf32>
    %47 = vector.shape_cast %46 : vector<1x8xf32> to vector<1x1x1x8xf32>
    %48 = vector.broadcast %47 : vector<1x1x1x8xf32> to vector<4x8x8x8xf32>
    %49 = arith.mulf %45, %48 : vector<4x8x8x8xf32>
    %50 = arith.addf %44, %49 : vector<4x8x8x8xf32>
    %51 = vector.extract_strided_slice %2 {offsets = [0, 2, 2, 0], sizes = [4, 8, 8, 8], strides = [1, 1, 1, 1]} : vector<6x10x10x8xf32> to vector<4x8x8x8xf32>
    %52 = vector.extract_strided_slice %3 {offsets = [8, 0], sizes = [1, 8], strides = [1, 1]} : vector<27x8xf32> to vector<1x8xf32>
    %53 = vector.shape_cast %52 : vector<1x8xf32> to vector<1x1x1x8xf32>
    %54 = vector.broadcast %53 : vector<1x1x1x8xf32> to vector<4x8x8x8xf32>
    %55 = arith.mulf %51, %54 : vector<4x8x8x8xf32>
    %56 = arith.addf %50, %55 : vector<4x8x8x8xf32>
    %57 = vector.extract_strided_slice %2 {offsets = [1, 0, 0, 0], sizes = [4, 8, 8, 8], strides = [1, 1, 1, 1]} : vector<6x10x10x8xf32> to vector<4x8x8x8xf32>
    %58 = vector.extract_strided_slice %3 {offsets = [9, 0], sizes = [1, 8], strides = [1, 1]} : vector<27x8xf32> to vector<1x8xf32>
    %59 = vector.shape_cast %58 : vector<1x8xf32> to vector<1x1x1x8xf32>
    %60 = vector.broadcast %59 : vector<1x1x1x8xf32> to vector<4x8x8x8xf32>
    %61 = arith.mulf %57, %60 : vector<4x8x8x8xf32>
    %62 = arith.addf %56, %61 : vector<4x8x8x8xf32>
    %63 = vector.extract_strided_slice %2 {offsets = [1, 0, 1, 0], sizes = [4, 8, 8, 8], strides = [1, 1, 1, 1]} : vector<6x10x10x8xf32> to vector<4x8x8x8xf32>
    %64 = vector.extract_strided_slice %3 {offsets = [10, 0], sizes = [1, 8], strides = [1, 1]} : vector<27x8xf32> to vector<1x8xf32>
    %65 = vector.shape_cast %64 : vector<1x8xf32> to vector<1x1x1x8xf32>
    %66 = vector.broadcast %65 : vector<1x1x1x8xf32> to vector<4x8x8x8xf32>
    %67 = arith.mulf %63, %66 : vector<4x8x8x8xf32>
    %68 = arith.addf %62, %67 : vector<4x8x8x8xf32>
    %69 = vector.extract_strided_slice %2 {offsets = [1, 0, 2, 0], sizes = [4, 8, 8, 8], strides = [1, 1, 1, 1]} : vector<6x10x10x8xf32> to vector<4x8x8x8xf32>
    %70 = vector.extract_strided_slice %3 {offsets = [11, 0], sizes = [1, 8], strides = [1, 1]} : vector<27x8xf32> to vector<1x8xf32>
    %71 = vector.shape_cast %70 : vector<1x8xf32> to vector<1x1x1x8xf32>
    %72 = vector.broadcast %71 : vector<1x1x1x8xf32> to vector<4x8x8x8xf32>
    %73 = arith.mulf %69, %72 : vector<4x8x8x8xf32>
    %74 = arith.addf %68, %73 : vector<4x8x8x8xf32>
    %75 = vector.extract_strided_slice %2 {offsets = [1, 1, 0, 0], sizes = [4, 8, 8, 8], strides = [1, 1, 1, 1]} : vector<6x10x10x8xf32> to vector<4x8x8x8xf32>
    %76 = vector.extract_strided_slice %3 {offsets = [12, 0], sizes = [1, 8], strides = [1, 1]} : vector<27x8xf32> to vector<1x8xf32>
    %77 = vector.shape_cast %76 : vector<1x8xf32> to vector<1x1x1x8xf32>
    %78 = vector.broadcast %77 : vector<1x1x1x8xf32> to vector<4x8x8x8xf32>
    %79 = arith.mulf %75, %78 : vector<4x8x8x8xf32>
    %80 = arith.addf %74, %79 : vector<4x8x8x8xf32>
    %81 = vector.extract_strided_slice %2 {offsets = [1, 1, 1, 0], sizes = [4, 8, 8, 8], strides = [1, 1, 1, 1]} : vector<6x10x10x8xf32> to vector<4x8x8x8xf32>
    %82 = vector.extract_strided_slice %3 {offsets = [13, 0], sizes = [1, 8], strides = [1, 1]} : vector<27x8xf32> to vector<1x8xf32>
    %83 = vector.shape_cast %82 : vector<1x8xf32> to vector<1x1x1x8xf32>
    %84 = vector.broadcast %83 : vector<1x1x1x8xf32> to vector<4x8x8x8xf32>
    %85 = arith.mulf %81, %84 : vector<4x8x8x8xf32>
    %86 = arith.addf %80, %85 : vector<4x8x8x8xf32>
    %87 = vector.extract_strided_slice %2 {offsets = [1, 1, 2, 0], sizes = [4, 8, 8, 8], strides = [1, 1, 1, 1]} : vector<6x10x10x8xf32> to vector<4x8x8x8xf32>
    %88 = vector.extract_strided_slice %3 {offsets = [14, 0], sizes = [1, 8], strides = [1, 1]} : vector<27x8xf32> to vector<1x8xf32>
    %89 = vector.shape_cast %88 : vector<1x8xf32> to vector<1x1x1x8xf32>
    %90 = vector.broadcast %89 : vector<1x1x1x8xf32> to vector<4x8x8x8xf32>
    %91 = arith.mulf %87, %90 : vector<4x8x8x8xf32>
    %92 = arith.addf %86, %91 : vector<4x8x8x8xf32>
    %93 = vector.extract_strided_slice %2 {offsets = [1, 2, 0, 0], sizes = [4, 8, 8, 8], strides = [1, 1, 1, 1]} : vector<6x10x10x8xf32> to vector<4x8x8x8xf32>
    %94 = vector.extract_strided_slice %3 {offsets = [15, 0], sizes = [1, 8], strides = [1, 1]} : vector<27x8xf32> to vector<1x8xf32>
    %95 = vector.shape_cast %94 : vector<1x8xf32> to vector<1x1x1x8xf32>
    %96 = vector.broadcast %95 : vector<1x1x1x8xf32> to vector<4x8x8x8xf32>
    %97 = arith.mulf %93, %96 : vector<4x8x8x8xf32>
    %98 = arith.addf %92, %97 : vector<4x8x8x8xf32>
    %99 = vector.extract_strided_slice %2 {offsets = [1, 2, 1, 0], sizes = [4, 8, 8, 8], strides = [1, 1, 1, 1]} : vector<6x10x10x8xf32> to vector<4x8x8x8xf32>
    %100 = vector.extract_strided_slice %3 {offsets = [16, 0], sizes = [1, 8], strides = [1, 1]} : vector<27x8xf32> to vector<1x8xf32>
    %101 = vector.shape_cast %100 : vector<1x8xf32> to vector<1x1x1x8xf32>
    %102 = vector.broadcast %101 : vector<1x1x1x8xf32> to vector<4x8x8x8xf32>
    %103 = arith.mulf %99, %102 : vector<4x8x8x8xf32>
    %104 = arith.addf %98, %103 : vector<4x8x8x8xf32>
    %105 = vector.extract_strided_slice %2 {offsets = [1, 2, 2, 0], sizes = [4, 8, 8, 8], strides = [1, 1, 1, 1]} : vector<6x10x10x8xf32> to vector<4x8x8x8xf32>
    %106 = vector.extract_strided_slice %3 {offsets = [17, 0], sizes = [1, 8], strides = [1, 1]} : vector<27x8xf32> to vector<1x8xf32>
    %107 = vector.shape_cast %106 : vector<1x8xf32> to vector<1x1x1x8xf32>
    %108 = vector.broadcast %107 : vector<1x1x1x8xf32> to vector<4x8x8x8xf32>
    %109 = arith.mulf %105, %108 : vector<4x8x8x8xf32>
    %110 = arith.addf %104, %109 : vector<4x8x8x8xf32>
    %111 = vector.extract_strided_slice %2 {offsets = [2, 0, 0, 0], sizes = [4, 8, 8, 8], strides = [1, 1, 1, 1]} : vector<6x10x10x8xf32> to vector<4x8x8x8xf32>
    %112 = vector.extract_strided_slice %3 {offsets = [18, 0], sizes = [1, 8], strides = [1, 1]} : vector<27x8xf32> to vector<1x8xf32>
    %113 = vector.shape_cast %112 : vector<1x8xf32> to vector<1x1x1x8xf32>
    %114 = vector.broadcast %113 : vector<1x1x1x8xf32> to vector<4x8x8x8xf32>
    %115 = arith.mulf %111, %114 : vector<4x8x8x8xf32>
    %116 = arith.addf %110, %115 : vector<4x8x8x8xf32>
    %117 = vector.extract_strided_slice %2 {offsets = [2, 0, 1, 0], sizes = [4, 8, 8, 8], strides = [1, 1, 1, 1]} : vector<6x10x10x8xf32> to vector<4x8x8x8xf32>
    %118 = vector.extract_strided_slice %3 {offsets = [19, 0], sizes = [1, 8], strides = [1, 1]} : vector<27x8xf32> to vector<1x8xf32>
    %119 = vector.shape_cast %118 : vector<1x8xf32> to vector<1x1x1x8xf32>
    %120 = vector.broadcast %119 : vector<1x1x1x8xf32> to vector<4x8x8x8xf32>
    %121 = arith.mulf %117, %120 : vector<4x8x8x8xf32>
    %122 = arith.addf %116, %121 : vector<4x8x8x8xf32>
    %123 = vector.extract_strided_slice %2 {offsets = [2, 0, 2, 0], sizes = [4, 8, 8, 8], strides = [1, 1, 1, 1]} : vector<6x10x10x8xf32> to vector<4x8x8x8xf32>
    %124 = vector.extract_strided_slice %3 {offsets = [20, 0], sizes = [1, 8], strides = [1, 1]} : vector<27x8xf32> to vector<1x8xf32>
    %125 = vector.shape_cast %124 : vector<1x8xf32> to vector<1x1x1x8xf32>
    %126 = vector.broadcast %125 : vector<1x1x1x8xf32> to vector<4x8x8x8xf32>
    %127 = arith.mulf %123, %126 : vector<4x8x8x8xf32>
    %128 = arith.addf %122, %127 : vector<4x8x8x8xf32>
    %129 = vector.extract_strided_slice %2 {offsets = [2, 1, 0, 0], sizes = [4, 8, 8, 8], strides = [1, 1, 1, 1]} : vector<6x10x10x8xf32> to vector<4x8x8x8xf32>
    %130 = vector.extract_strided_slice %3 {offsets = [21, 0], sizes = [1, 8], strides = [1, 1]} : vector<27x8xf32> to vector<1x8xf32>
    %131 = vector.shape_cast %130 : vector<1x8xf32> to vector<1x1x1x8xf32>
    %132 = vector.broadcast %131 : vector<1x1x1x8xf32> to vector<4x8x8x8xf32>
    %133 = arith.mulf %129, %132 : vector<4x8x8x8xf32>
    %134 = arith.addf %128, %133 : vector<4x8x8x8xf32>
    %135 = vector.extract_strided_slice %2 {offsets = [2, 1, 1, 0], sizes = [4, 8, 8, 8], strides = [1, 1, 1, 1]} : vector<6x10x10x8xf32> to vector<4x8x8x8xf32>
    %136 = vector.extract_strided_slice %3 {offsets = [22, 0], sizes = [1, 8], strides = [1, 1]} : vector<27x8xf32> to vector<1x8xf32>
    %137 = vector.shape_cast %136 : vector<1x8xf32> to vector<1x1x1x8xf32>
    %138 = vector.broadcast %137 : vector<1x1x1x8xf32> to vector<4x8x8x8xf32>
    %139 = arith.mulf %135, %138 : vector<4x8x8x8xf32>
    %140 = arith.addf %134, %139 : vector<4x8x8x8xf32>
    %141 = vector.extract_strided_slice %2 {offsets = [2, 1, 2, 0], sizes = [4, 8, 8, 8], strides = [1, 1, 1, 1]} : vector<6x10x10x8xf32> to vector<4x8x8x8xf32>
    %142 = vector.extract_strided_slice %3 {offsets = [23, 0], sizes = [1, 8], strides = [1, 1]} : vector<27x8xf32> to vector<1x8xf32>
    %143 = vector.shape_cast %142 : vector<1x8xf32> to vector<1x1x1x8xf32>
    %144 = vector.broadcast %143 : vector<1x1x1x8xf32> to vector<4x8x8x8xf32>
    %145 = arith.mulf %141, %144 : vector<4x8x8x8xf32>
    %146 = arith.addf %140, %145 : vector<4x8x8x8xf32>
    %147 = vector.extract_strided_slice %2 {offsets = [2, 2, 0, 0], sizes = [4, 8, 8, 8], strides = [1, 1, 1, 1]} : vector<6x10x10x8xf32> to vector<4x8x8x8xf32>
    %148 = vector.extract_strided_slice %3 {offsets = [24, 0], sizes = [1, 8], strides = [1, 1]} : vector<27x8xf32> to vector<1x8xf32>
    %149 = vector.shape_cast %148 : vector<1x8xf32> to vector<1x1x1x8xf32>
    %150 = vector.broadcast %149 : vector<1x1x1x8xf32> to vector<4x8x8x8xf32>
    %151 = arith.mulf %147, %150 : vector<4x8x8x8xf32>
    %152 = arith.addf %146, %151 : vector<4x8x8x8xf32>
    %153 = vector.extract_strided_slice %2 {offsets = [2, 2, 1, 0], sizes = [4, 8, 8, 8], strides = [1, 1, 1, 1]} : vector<6x10x10x8xf32> to vector<4x8x8x8xf32>
    %154 = vector.extract_strided_slice %3 {offsets = [25, 0], sizes = [1, 8], strides = [1, 1]} : vector<27x8xf32> to vector<1x8xf32>
    %155 = vector.shape_cast %154 : vector<1x8xf32> to vector<1x1x1x8xf32>
    %156 = vector.broadcast %155 : vector<1x1x1x8xf32> to vector<4x8x8x8xf32>
    %157 = arith.mulf %153, %156 : vector<4x8x8x8xf32>
    %158 = arith.addf %152, %157 : vector<4x8x8x8xf32>
    %159 = vector.extract_strided_slice %2 {offsets = [2, 2, 2, 0], sizes = [4, 8, 8, 8], strides = [1, 1, 1, 1]} : vector<6x10x10x8xf32> to vector<4x8x8x8xf32>
    %160 = vector.extract_strided_slice %3 {offsets = [26, 0], sizes = [1, 8], strides = [1, 1]} : vector<27x8xf32> to vector<1x8xf32>
    %161 = vector.shape_cast %160 : vector<1x8xf32> to vector<1x1x1x8xf32>
    %162 = vector.broadcast %161 : vector<1x1x1x8xf32> to vector<4x8x8x8xf32>
    %163 = arith.mulf %159, %162 : vector<4x8x8x8xf32>
    %164 = arith.addf %158, %163 : vector<4x8x8x8xf32>
    %165 = vector.shape_cast %164 : vector<4x8x8x8xf32> to vector<256x8xf32>
    %166 = arith.truncf %165 : vector<256x8xf32> to vector<256x8xbf16>
    %c0_7 = arith.constant 0 : index
    %c0_8 = arith.constant 0 : index
    %167 = vector.load %arg4[%c0_7, %c0_8] : memref<8x8xbf16, #tpu.memory_space<vmem>>, vector<8x8xbf16>
    %cst = arith.constant dense<0.000000e+00> : vector<256x8xf32>
    %168 = tpu.matmul %166, %167, %cst {dimension_numbers = #tpu.dot_dimension_numbers<[1], [0], [0], [1], [0, 0, 1, 1], [], []>} : vector<256x8xbf16>, vector<8x8xbf16>, vector<256x8xf32> -> vector<256x8xf32>
    %c0_i32 = arith.constant 0 : i32
    %169 = arith.cmpi eq, %arg1, %c0_i32 : i32
    %170 = arith.extui %169 : i1 to i32
    %c0_i32_9 = arith.constant 0 : i32
    %171 = arith.cmpi ne, %170, %c0_i32_9 : i32
    scf.if %171 {
      %cst_23 = arith.constant 0.000000e+00 : f32
      %189 = vector.broadcast %cst_23 : f32 to vector<2x8xf32>
      %c0_24 = arith.constant 0 : index
      %c0_25 = arith.constant 0 : index
      %c0_26 = arith.constant 0 : index
      %190 = vector.load %arg6[%c0_24, %c0_25, %c0_26] : memref<1x2x8xf32, #tpu.memory_space<vmem>>, vector<1x2x8xf32>
      %191 = vector.shape_cast %190 : vector<1x2x8xf32> to vector<2x8xf32>
      %192 = vector.shape_cast %189 : vector<2x8xf32> to vector<1x2x8xf32>
      tpu.vector_store %arg6[%c0_24, %c0_25, %c0_26], %192 {strides = array<i32>} : memref<1x2x8xf32, #tpu.memory_space<vmem>>, vector<1x2x8xf32>,
    } else {
    }
    %cst_10 = arith.constant dense<0.000000e+00> : vector<8xf32>
    %172 = vector.multi_reduction <add>, %168, %cst_10 [0] : vector<256x8xf32> to vector<8xf32>
    %173 = vector.shape_cast %172 : vector<8xf32> to vector<1x8xf32>
    %174 = arith.mulf %168, %168 : vector<256x8xf32>
    %cst_11 = arith.constant dense<0.000000e+00> : vector<8xf32>
    %175 = vector.multi_reduction <add>, %174, %cst_11 [0] : vector<256x8xf32> to vector<8xf32>
    %176 = vector.shape_cast %175 : vector<8xf32> to vector<1x8xf32>
    %c0_12 = arith.constant 0 : index
    %c0_13 = arith.constant 0 : index
    %c0_14 = arith.constant 0 : index
    %177 = vector.load %arg6[%c0_12, %c0_13, %c0_14] : memref<1x2x8xf32, #tpu.memory_space<vmem>>, vector<1x2x8xf32>
    %178 = vector.shape_cast %177 : vector<1x2x8xf32> to vector<2x8xf32>
    %179 = tpu.concatenate %173, %176 in 0 : vector<1x8xf32>, vector<1x8xf32> -> vector<2x8xf32>
    %180 = arith.addf %178, %179 : vector<2x8xf32>
    %c0_15 = arith.constant 0 : index
    %c0_16 = arith.constant 0 : index
    %c0_17 = arith.constant 0 : index
    %181 = vector.load %arg6[%c0_15, %c0_16, %c0_17] : memref<1x2x8xf32, #tpu.memory_space<vmem>>, vector<1x2x8xf32>
    %182 = vector.shape_cast %181 : vector<1x2x8xf32> to vector<2x8xf32>
    %183 = vector.shape_cast %180 : vector<2x8xf32> to vector<1x2x8xf32>
    tpu.vector_store %arg6[%c0_15, %c0_16, %c0_17], %183 {strides = array<i32>} : memref<1x2x8xf32, #tpu.memory_space<vmem>>, vector<1x2x8xf32>,
    %184 = vector.shape_cast %168 : vector<256x8xf32> to vector<4x8x8x8xf32>
    %185 = arith.truncf %184 : vector<4x8x8x8xf32> to vector<4x8x8x8xbf16>
    %c0_18 = arith.constant 0 : index
    %c0_19 = arith.constant 0 : index
    %c0_20 = arith.constant 0 : index
    %c0_21 = arith.constant 0 : index
    %c0_22 = arith.constant 0 : index
    %186 = vector.load %arg5[%c0_18, %c0_19, %c0_20, %c0_21, %c0_22] : memref<1x4x8x8x8xbf16, #tpu.memory_space<vmem>>, vector<1x4x8x8x8xbf16>
    %187 = vector.shape_cast %186 : vector<1x4x8x8x8xbf16> to vector<4x8x8x8xbf16>
    %188 = vector.shape_cast %185 : vector<4x8x8x8xbf16> to vector<1x4x8x8x8xbf16>
    tpu.vector_store %arg5[%c0_18, %c0_19, %c0_20, %c0_21, %c0_22], %188 {strides = array<i32>} : memref<1x4x8x8x8xbf16, #tpu.memory_space<vmem>>, vector<1x4x8x8x8xbf16>,
    return
  }
  func.func @transform_0(%arg0: i32, %arg1: i32) -> (i32, i32, i32, i32, i32, i32) {
    %c0_i32 = arith.constant 0 : i32
    %c0_i32_0 = arith.constant 0 : i32
    %c0_i32_1 = arith.constant 0 : i32
    %c0_i32_2 = arith.constant 0 : i32
    %c0_i32_3 = arith.constant 0 : i32
    return %arg0, %arg1, %c0_i32, %c0_i32_0, %c0_i32_1, %c0_i32_2 : i32, i32, i32, i32, i32, i32
  }
  func.func @transform_1(%arg0: i32, %arg1: i32) -> (i32, i32) {
    %c0_i32 = arith.constant 0 : i32
    %c0_i32_0 = arith.constant 0 : i32
    %c0_i32_1 = arith.constant 0 : i32
    return %c0_i32, %c0_i32_0 : i32, i32
  }
  func.func @transform_2(%arg0: i32, %arg1: i32) -> (i32, i32) {
    %c0_i32 = arith.constant 0 : i32
    %c0_i32_0 = arith.constant 0 : i32
    %c0_i32_1 = arith.constant 0 : i32
    return %c0_i32, %c0_i32_0 : i32, i32
  }
  func.func @transform_3(%arg0: i32, %arg1: i32) -> (i32, i32, i32, i32, i32) {
    %c0_i32 = arith.constant 0 : i32
    %c0_i32_0 = arith.constant 0 : i32
    %c0_i32_1 = arith.constant 0 : i32
    %c0_i32_2 = arith.constant 0 : i32
    return %arg0, %arg1, %c0_i32, %c0_i32_0, %c0_i32_1 : i32, i32, i32, i32, i32
  }
  func.func @transform_4(%arg0: i32, %arg1: i32) -> (i32, i32, i32) {
    %c0_i32 = arith.constant 0 : i32
    %c0_i32_0 = arith.constant 0 : i32
    %c0_i32_1 = arith.constant 0 : i32
    return %arg0, %c0_i32, %c0_i32_0 : i32, i32, i32
  }
}

</mosaic_0001>

<llo_original>
// kernel: tpu_custom_call.1
$region0: #{tpu_custom_call.1}
  #allocation0 [shape = 'u32[]', space=smem, size = 0x4, offset = 0x4, fixed_abs, tag = 'smem constant byte address 0x4 - core index']
  #allocation1 [shape = 'u32[72,128]{1,0:T(1,128)}', space=vmem, size = 0x9000, scoped, tag = 'internal scratch']
  %s0 = inlined_call_operand.vmem [shape: bf16[2,2,6,10,10,8], index: 0, kind: input, shape index: {}]
  %s1 = inlined_call_operand.vmem [shape: f32[27,8], index: 1, kind: input, shape index: {}]
  %s2 = inlined_call_operand.vmem [shape: bf16[8,8], index: 2, kind: input, shape index: {}]
  %s3 = inlined_call_operand.hbm [shape: bf16[2,8,8,8,8], index: 3, kind: output, shape index: {0}]
  %s4 = inlined_call_operand.hbm [shape: f32[2,2,8], index: 4, kind: output, shape index: {1}]
  %5 = xla_tuple %s3, %s4
  %s6 = sld [smem:[#allocation0]]
  $region57: #{tpu_custom_call.1} parent=0
    _
  %s8 = ssub.s32 1, %s6
  %s9 = scalar_select 0, %s8, %s6
  $region1: #{tpu_custom_call.1} parent=0
    #allocation2 [shape = 'u8[131072]{0}', space=vmem, size = 0x20000, scoped, tag = 'output window, operand 0']
    #allocation3 [shape = 's32[2]{0}', space=sflag, size = 0x8, scoped, tag = 'scoped memory for tpu_custom_call.1']
    #allocation4 [shape = 'u8[2048]{0}', space=vmem, size = 0x800, scoped, tag = 'output window, operand 1']
    #allocation5 [shape = 's32[2]{0}', space=sflag, size = 0x8, scoped, tag = 'scoped memory for tpu_custom_call.1']
    %10 = vsyncpa [#allocation3], 0
    %s11 = scalar_lea.sflag [#allocation3], 1
    %12 = vsyncpa %s11, 0
    %13 = vsyncpa [#allocation5], 0
    %s14 = scalar_lea.sflag [#allocation5], 1
    %15 = vsyncpa %s14, 0
    loop: start=0, step=1, limit=6
    $region2: #{tpu_custom_call.1} parent=1 // loop_pre_header
      _
    $region3: #{tpu_custom_call.1} parent=1 // loop_header
      %s17 = sphi 0, %s21
      %p18 = scmp.ge.s32.totalorder %s17, 6
      %s24 = sphi 0, %s36
      %s25 = sphi 0, %s32
      %s26 = sphi 0, %s24
      %s27 = sphi 0, %s25
      %s28 = sphi 0, %s26
      %s29 = sphi 0, %s27
      %s41 = sphi 0, %s43
      %s44 = sphi 0, %s41
      %s45 = sphi 0, %s44
      %s61 = sphi 0, %s45
      %s65 = sphi 0, %s65
      %s67 = sphi 0, %s65
      %s68 = sphi 0, %s67
      %s82 = sphi 0, %s68
      %s86 = sphi 0, %s86
      %s88 = sphi 0, %s86
      %s89 = sphi 0, %s88
      %s103 = sphi 0, %s89
      %s111 = sphi 0, %s113
      %s114 = sphi 0, %s111
      %s115 = sphi 0, %s114
      %s131 = sphi 0, %s115
      %s137 = sphi 0, %s139
      %s140 = sphi 0, %s137
      %s141 = sphi 0, %s140
      %s157 = sphi 0, %s141
    $region4: #{tpu_custom_call.1} parent=1 // loop_header_branch
      %20 = sbr.rel (%p18) target = $region8
    $region5: #{tpu_custom_call.1} parent=1 // loop_body
      %s22 = ssub.s32 %s17, 1
      %s23 = ssub.s32 %s17, 2
      %s30 = sadd.s32 1, %s25
      %p31 = scmp.ge.s32.totalorder %s30, 2
      %s32 = scalar_select %p31, 0, %s30
      %s33 = sadd.s32 1, %s24
      %s34 = scalar_select %p31, %s33, %s24
      %p35 = scmp.ge.s32.totalorder %s34, 2
      %s36 = scalar_select %p35, 0, %s34
      %s37 = ssub.s32 %s24, %s36
      %s38 = ssub.s32 %s25, %s32
      %s39 = sor.u32 %s37, %s38
      %p40 = scmp.eq.s32.totalorder %s39, 0
      %s42 = sadd.s32 %s41, 1
      %s43 = scalar_select %p40, %s41, %s42
      %p46 = pneg %p40
      %p47 = scmp.eq.s32.totalorder %s17, 3
      %p48 = por %p46, %p47
      %p49 = scmp.ne.s32.totalorder %s41, %s44
      %p50 = scmp.eq.s32.totalorder %s17, 0
      %p51 = por %p49, %p50
      %p52 = scmp.ne.s32.totalorder %s41, %s44
      %p53 = scmp.eq.s32.totalorder %s22, 3
      %p54 = por %p52, %p53
      %p55 = scmp.ne.s32.totalorder %s44, %s45
      %p56 = scmp.eq.s32.totalorder %s22, 0
      %p57 = por %p55, %p56
      %p58 = scmp.ne.s32.totalorder %s44, %s45
      %p59 = scmp.eq.s32.totalorder %s23, 3
      %p60 = por %p58, %p59
      %p62 = scmp.ne.s32.totalorder %s45, %s61
      %p63 = scmp.eq.s32.totalorder %s23, 0
      %p64 = por %p62, %p63
      %s66 = sadd.s32 %s65, 1
      %p69 = scmp.eq.s32.totalorder %s17, 3
      %p70 = scmp.ne.s32.totalorder %s65, %s67
      %p71 = scmp.eq.s32.totalorder %s17, 0
      %p72 = por %p70, %p71
      %p73 = scmp.ne.s32.totalorder %s65, %s67
      %p74 = scmp.eq.s32.totalorder %s22, 3
      %p75 = por %p73, %p74
      %p76 = scmp.ne.s32.totalorder %s67, %s68
      %p77 = scmp.eq.s32.totalorder %s22, 0
      %p78 = por %p76, %p77
      %p79 = scmp.ne.s32.totalorder %s67, %s68
      %p80 = scmp.eq.s32.totalorder %s23, 3
      %p81 = por %p79, %p80
      %p83 = scmp.ne.s32.totalorder %s68, %s82
      %p84 = scmp.eq.s32.totalorder %s23, 0
      %p85 = por %p83, %p84
      %s87 = sadd.s32 %s86, 1
      %p90 = scmp.eq.s32.totalorder %s17, 3
      %p91 = scmp.ne.s32.totalorder %s86, %s88
      %p92 = scmp.eq.s32.totalorder %s17, 0
      %p93 = por %p91, %p92
      %p94 = scmp.ne.s32.totalorder %s86, %s88
      %p95 = scmp.eq.s32.totalorder %s22, 3
      %p96 = por %p94, %p95
      %p97 = scmp.ne.s32.totalorder %s88, %s89
      %p98 = scmp.eq.s32.totalorder %s22, 0
      %p99 = por %p97, %p98
      %p100 = scmp.ne.s32.totalorder %s88, %s89
      %p101 = scmp.eq.s32.totalorder %s23, 3
      %p102 = por %p100, %p101
      %p104 = scmp.ne.s32.totalorder %s89, %s103
      %p105 = scmp.eq.s32.totalorder %s23, 0
      %p106 = por %p104, %p105
      %s107 = ssub.s32 %s24, %s36
      %s108 = ssub.s32 %s25, %s32
      %s109 = sor.u32 %s107, %s108
      %p110 = scmp.eq.s32.totalorder %s109, 0
      %s112 = sadd.s32 %s111, 1
      %s113 = scalar_select %p110, %s111, %s112
      %p116 = pneg %p110
      %p117 = scmp.eq.s32.totalorder %s17, 3
      %p118 = por %p116, %p117
      %p119 = scmp.ne.s32.totalorder %s111, %s114
      %p120 = scmp.eq.s32.totalorder %s17, 0
      %p121 = por %p119, %p120
      %p122 = scmp.ne.s32.totalorder %s111, %s114
      %p123 = scmp.eq.s32.totalorder %s22, 3
      %p124 = por %p122, %p123
      %p125 = scmp.ne.s32.totalorder %s114, %s115
      %p126 = scmp.eq.s32.totalorder %s22, 0
      %p127 = por %p125, %p126
      %p128 = scmp.ne.s32.totalorder %s114, %s115
      %p129 = scmp.eq.s32.totalorder %s23, 3
      %p130 = por %p128, %p129
      %p132 = scmp.ne.s32.totalorder %s115, %s131
      %p133 = scmp.eq.s32.totalorder %s23, 0
      %p134 = por %p132, %p133
      %s135 = ssub.s32 %s24, %s36
      %p136 = scmp.eq.s32.totalorder %s135, 0
      %s138 = sadd.s32 %s137, 1
      %s139 = scalar_select %p136, %s137, %s138
      %p142 = pneg %p136
      %p143 = scmp.eq.s32.totalorder %s17, 3
      %p144 = por %p142, %p143
      %p145 = scmp.ne.s32.totalorder %s137, %s140
      %p146 = scmp.eq.s32.totalorder %s17, 0
      %p147 = por %p145, %p146
      %p148 = scmp.ne.s32.totalorder %s137, %s140
      %p149 = scmp.eq.s32.totalorder %s22, 3
      %p150 = por %p148, %p149
      %p151 = scmp.ne.s32.totalorder %s140, %s141
      %p152 = scmp.eq.s32.totalorder %s22, 0
      %p153 = por %p151, %p152
      %p154 = scmp.ne.s32.totalorder %s140, %s141
      %p155 = scmp.eq.s32.totalorder %s23, 3
      %p156 = por %p154, %p155
      %p158 = scmp.ne.s32.totalorder %s141, %s157
      %p159 = scmp.eq.s32.totalorder %s23, 0
      %p160 = por %p158, %p159
      %p161 = scmp.le.s32.totalorder 1, %s17
      %p162 = scmp.lt.s32.totalorder %s17, 5
      %p163 = pnand %p161, %p162
      %p164 = pneg %p163
      // Predicated region
      $region9: #{tpu_custom_call.1} parent=5 // pred_check
        _
      $region10: #{tpu_custom_call.1} parent=5 // pred_check_branch
        %166 = sbr.rel (%p163) target = $region12
      $region11: #{tpu_custom_call.1} parent=5 // pred_region
        %s167 = ssub.s32 %s17, 1
        // Predicated region
        $region13: #{tpu_custom_call.1} parent=11 // pred_check
          %p168 = pneg %p78
        $region14: #{tpu_custom_call.1} parent=11 // pred_check_branch
          %170 = sbr.rel (%p168) target = $region16
        $region15: #{tpu_custom_call.1} parent=11 // pred_region
          _
        $region16: #{tpu_custom_call.1} parent=11 // pred_fallthru
          _
        // Predicated region
        $region17: #{tpu_custom_call.1} parent=11 // pred_check
          %p171 = pneg %p99
        $region18: #{tpu_custom_call.1} parent=11 // pred_check_branch
          %173 = sbr.rel (%p171) target = $region20
        $region19: #{tpu_custom_call.1} parent=11 // pred_region
          _
        $region20: #{tpu_custom_call.1} parent=11 // pred_fallthru
          _
      $region12: #{tpu_custom_call.1} parent=5 // pred_fallthru
        _
      %p174 = scmp.lt.s32.totalorder %s17, 4
      // Predicated region
      $region21: #{tpu_custom_call.1} parent=5 // pred_check
        %p175 = pneg %p174
      $region22: #{tpu_custom_call.1} parent=5 // pred_check_branch
        %177 = sbr.rel (%p175) target = $region24
      $region23: #{tpu_custom_call.1} parent=5 // pred_region
        // Predicated region
        $region25: #{tpu_custom_call.1} parent=23 // pred_check
          %p178 = pneg %p51
        $region26: #{tpu_custom_call.1} parent=23 // pred_check_branch
          %180 = sbr.rel (%p178) target = $region28
        $region27: #{tpu_custom_call.1} parent=23 // pred_region
          %p181 = scmp.lt.s32.totalorder %s24, 1
          %s182 = scalar_select %p181, %s24, 1
          %p183 = scmp.lt.s32.totalorder %s25, 1
          %s184 = scalar_select %p183, %s25, 1
          %s185 = smul.addr %s184, 120
          %s186 = smul.addr %s182, 240
          %s187 = sadd.s32 %s185, %s186
          %s188 = smul.addr %s187, 4
          %s189 = scalar_lea.vmem %s0, %s188
        $region28: #{tpu_custom_call.1} parent=23 // pred_fallthru
          _
      $region24: #{tpu_custom_call.1} parent=5 // pred_fallthru
        _
      %p190 = scmp.le.s32.totalorder 1, %s17
      %p191 = scmp.lt.s32.totalorder %s17, 5
      %p192 = pnand %p190, %p191
      %p193 = pneg %p192
      // Predicated region
      $region29: #{tpu_custom_call.1} parent=5 // pred_check
        _
      $region30: #{tpu_custom_call.1} parent=5 // pred_check_branch
        %195 = sbr.rel (%p192) target = $region32
      $region31: #{tpu_custom_call.1} parent=5 // pred_region
        %s196 = ssub.s32 %s17, 1
        %p197 = scmp.lt.s32.totalorder %s26, 1
        %s198 = scalar_select %p197, %s26, 1
        %p199 = scmp.lt.s32.totalorder %s27, 1
        %s200 = scalar_select %p199, %s27, 1
        %s201 = smul.addr %s200, 120
        %s202 = smul.addr %s198, 240
        %s203 = sadd.s32 %s201, %s202
        %s204 = smul.addr %s203, 4
        %s205 = scalar_lea.vmem %s0, %s204
        %p206 = pneg %p57
        %p207 = pneg %p54
        %p208 = pneg %p78
        %p209 = pneg %p75
        %p210 = pneg %p99
        %p211 = pneg %p96
        %p212 = pneg %p127
        %p213 = pneg %p124
        %s214 = sand.u32 %s114, 1
        %s215 = scalar_lea.sflag [#allocation3], %s214
        %s216 = sand.u32 %s114, 1
        %s217 = smul.addr %s216, 128
        %s218 = scalar_lea.vmem [#allocation2], %s217
        %p219 = pneg %p153
        %p220 = pneg %p150
        %s221 = sand.u32 %s140, 1
        %s222 = scalar_lea.sflag [#allocation5], %s221
        %s223 = sand.u32 %s140, 1
        %s224 = smul.addr %s223, 2
        %s225 = scalar_lea.vmem [#allocation4], %s224
        %p226 = scmp.lt.s32.totalorder %s26, 1
        %s227 = scalar_select %p226, %s26, 1
        %p228 = scmp.lt.s32.totalorder %s27, 1
        %s229 = scalar_select %p228, %s27, 1
        %s230 = smul.addr %s229, 120
        %s231 = smul.addr %s227, 240
        %s232 = sadd.s32 %s230, %s231
        %s233 = smul.addr %s232, 4
        %s234 = scalar_lea.vmem %s0, %s233
        %s235 = smul.u32 4, %s27
        %v237 = vld [vmem:[%s234] sm:$0xf]
        %v238 = vld [vmem:[%s234 + $0x4] sm:$0x1]
        %v239 = vld [vmem:[%s234 + $0x8] sm:$0xf]
        %v240 = vld [vmem:[%s234 + $0xc] sm:$0x1]
        %v241 = vld [vmem:[%s234 + $0x10] sm:$0xf]
        %v242 = vld [vmem:[%s234 + $0x14] sm:$0x1]
        %v243 = vld [vmem:[%s234 + $0x18] sm:$0xf]
        %v244 = vld [vmem:[%s234 + $0x1c] sm:$0x1]
        %v245 = vld [vmem:[%s234 + $0x20] sm:$0xf]
        %v246 = vld [vmem:[%s234 + $0x24] sm:$0x1]
        %v247 = vld [vmem:[%s234 + $0x28] sm:$0xf]
        %v248 = vld [vmem:[%s234 + $0x2c] sm:$0x1]
        %v249 = vld [vmem:[%s234 + $0x30] sm:$0xf]
        %v250 = vld [vmem:[%s234 + $0x34] sm:$0x1]
        %v251 = vld [vmem:[%s234 + $0x38] sm:$0xf]
        %v252 = vld [vmem:[%s234 + $0x3c] sm:$0x1]
        %v253 = vld [vmem:[%s234 + $0x40] sm:$0xf]
        %v254 = vld [vmem:[%s234 + $0x44] sm:$0x1]
        %v255 = vld [vmem:[%s234 + $0x48] sm:$0xf]
        %v256 = vld [vmem:[%s234 + $0x4c] sm:$0x1]
        %v257 = vld [vmem:[%s234 + $0x50] sm:$0xf]
        %v258 = vld [vmem:[%s234 + $0x54] sm:$0x1]
        %v259 = vld [vmem:[%s234 + $0x58] sm:$0xf]
        %v260 = vld [vmem:[%s234 + $0x5c] sm:$0x1]
        %v261 = vld [vmem:[%s234 + $0x60] sm:$0xf]
        %v262 = vld [vmem:[%s234 + $0x64] sm:$0x1]
        %v263 = vld [vmem:[%s234 + $0x68] sm:$0xf]
        %v264 = vld [vmem:[%s234 + $0x6c] sm:$0x1]
        %v265 = vld [vmem:[%s234 + $0x70] sm:$0xf]
        %v266 = vld [vmem:[%s234 + $0x74] sm:$0x1]
        %v267 = vld [vmem:[%s234 + $0x78] sm:$0xf]
        %v268 = vld [vmem:[%s234 + $0x7c] sm:$0x1]
        %v269 = vld [vmem:[%s234 + $0x80] sm:$0xf]
        %v270 = vld [vmem:[%s234 + $0x84] sm:$0x1]
        %v271 = vld [vmem:[%s234 + $0x88] sm:$0xf]
        %v272 = vld [vmem:[%s234 + $0x8c] sm:$0x1]
        %v273 = vld [vmem:[%s234 + $0x90] sm:$0xf]
        %v274 = vld [vmem:[%s234 + $0x94] sm:$0x1]
        %v275 = vld [vmem:[%s234 + $0x98] sm:$0xf]
        %v276 = vld [vmem:[%s234 + $0x9c] sm:$0x1]
        %v277 = vld [vmem:[%s234 + $0xa0] sm:$0xf]
        %v278 = vld [vmem:[%s234 + $0xa4] sm:$0x1]
        %v279 = vld [vmem:[%s234 + $0xa8] sm:$0xf]
        %v280 = vld [vmem:[%s234 + $0xac] sm:$0x1]
        %v281 = vld [vmem:[%s234 + $0xb0] sm:$0xf]
        %v282 = vld [vmem:[%s234 + $0xb4] sm:$0x1]
        %v283 = vld [vmem:[%s234 + $0xb8] sm:$0xf]
        %v284 = vld [vmem:[%s234 + $0xbc] sm:$0x1]
        %v285 = vld [vmem:[%s234 + $0xc0] sm:$0xf]
        %v286 = vld [vmem:[%s234 + $0xc4] sm:$0x1]
        %v287 = vld [vmem:[%s234 + $0xc8] sm:$0xf]
        %v288 = vld [vmem:[%s234 + $0xcc] sm:$0x1]
        %v289 = vld [vmem:[%s234 + $0xd0] sm:$0xf]
        %v290 = vld [vmem:[%s234 + $0xd4] sm:$0x1]
        %v291 = vld [vmem:[%s234 + $0xd8] sm:$0xf]
        %v292 = vld [vmem:[%s234 + $0xdc] sm:$0x1]
        %v293 = vld [vmem:[%s234 + $0xe0] sm:$0xf]
        %v294 = vld [vmem:[%s234 + $0xe4] sm:$0x1]
        %v295 = vld [vmem:[%s234 + $0xe8] sm:$0xf]
        %v296 = vld [vmem:[%s234 + $0xec] sm:$0x1]
        %v297 = vld [vmem:[%s234 + $0xf0] sm:$0xf]
        %v298 = vld [vmem:[%s234 + $0xf4] sm:$0x1]
        %v299 = vld [vmem:[%s234 + $0xf8] sm:$0xf]
        %v300 = vld [vmem:[%s234 + $0xfc] sm:$0x1]
        %v301 = vld [vmem:[%s234 + $0x100] sm:$0xf]
        %v302 = vld [vmem:[%s234 + $0x104] sm:$0x1]
        %v303 = vld [vmem:[%s234 + $0x108] sm:$0xf]
        %v304 = vld [vmem:[%s234 + $0x10c] sm:$0x1]
        %v305 = vld [vmem:[%s234 + $0x110] sm:$0xf]
        %v306 = vld [vmem:[%s234 + $0x114] sm:$0x1]
        %v307 = vld [vmem:[%s234 + $0x118] sm:$0xf]
        %v308 = vld [vmem:[%s234 + $0x11c] sm:$0x1]
        %v309 = vld [vmem:[%s234 + $0x120] sm:$0xf]
        %v310 = vld [vmem:[%s234 + $0x124] sm:$0x1]
        %v311 = vld [vmem:[%s234 + $0x128] sm:$0xf]
        %v312 = vld [vmem:[%s234 + $0x12c] sm:$0x1]
        %v313 = vld [vmem:[%s234 + $0x130] sm:$0xf]
        %v314 = vld [vmem:[%s234 + $0x134] sm:$0x1]
        %v315 = vld [vmem:[%s234 + $0x138] sm:$0xf]
        %v316 = vld [vmem:[%s234 + $0x13c] sm:$0x1]
        %v317 = vld [vmem:[%s234 + $0x140] sm:$0xf]
        %v318 = vld [vmem:[%s234 + $0x144] sm:$0x1]
        %v319 = vld [vmem:[%s234 + $0x148] sm:$0xf]
        %v320 = vld [vmem:[%s234 + $0x14c] sm:$0x1]
        %v321 = vld [vmem:[%s234 + $0x150] sm:$0xf]
        %v322 = vld [vmem:[%s234 + $0x154] sm:$0x1]
        %v323 = vld [vmem:[%s234 + $0x158] sm:$0xf]
        %v324 = vld [vmem:[%s234 + $0x15c] sm:$0x1]
        %v325 = vld [vmem:[%s234 + $0x160] sm:$0xf]
        %v326 = vld [vmem:[%s234 + $0x164] sm:$0x1]
        %v327 = vld [vmem:[%s234 + $0x168] sm:$0xf]
        %v328 = vld [vmem:[%s234 + $0x16c] sm:$0x1]
        %v329 = vld [vmem:[%s234 + $0x170] sm:$0xf]
        %v330 = vld [vmem:[%s234 + $0x174] sm:$0x1]
        %v331 = vld [vmem:[%s234 + $0x178] sm:$0xf]
        %v332 = vld [vmem:[%s234 + $0x17c] sm:$0x1]
        %v333 = vld [vmem:[%s234 + $0x180] sm:$0xf]
        %v334 = vld [vmem:[%s234 + $0x184] sm:$0x1]
        %v335 = vld [vmem:[%s234 + $0x188] sm:$0xf]
        %v336 = vld [vmem:[%s234 + $0x18c] sm:$0x1]
        %v337 = vld [vmem:[%s234 + $0x190] sm:$0xf]
        %v338 = vld [vmem:[%s234 + $0x194] sm:$0x1]
        %v339 = vld [vmem:[%s234 + $0x198] sm:$0xf]
        %v340 = vld [vmem:[%s234 + $0x19c] sm:$0x1]
        %v341 = vld [vmem:[%s234 + $0x1a0] sm:$0xf]
        %v342 = vld [vmem:[%s234 + $0x1a4] sm:$0x1]
        %v343 = vld [vmem:[%s234 + $0x1a8] sm:$0xf]
        %v344 = vld [vmem:[%s234 + $0x1ac] sm:$0x1]
        %v345 = vld [vmem:[%s234 + $0x1b0] sm:$0xf]
        %v346 = vld [vmem:[%s234 + $0x1b4] sm:$0x1]
        %v347 = vld [vmem:[%s234 + $0x1b8] sm:$0xf]
        %v348 = vld [vmem:[%s234 + $0x1bc] sm:$0x1]
        %v349 = vld [vmem:[%s234 + $0x1c0] sm:$0xf]
        %v350 = vld [vmem:[%s234 + $0x1c4] sm:$0x1]
        %v351 = vld [vmem:[%s234 + $0x1c8] sm:$0xf]
        %v352 = vld [vmem:[%s234 + $0x1cc] sm:$0x1]
        %v353 = vld [vmem:[%s234 + $0x1d0] sm:$0xf]
        %v354 = vld [vmem:[%s234 + $0x1d4] sm:$0x1]
        %v355 = vld [vmem:[%s234 + $0x1d8] sm:$0xf]
        %v356 = vld [vmem:[%s234 + $0x1dc] sm:$0x1]
        %v357 = vunpack.c.l.bf16 %v237
        %v358 = vunpack.c.l.bf16 %v238
        %v359 = vunpack.c.l.bf16 %v239
        %v360 = vunpack.c.l.bf16 %v240
        %v361 = vunpack.c.l.bf16 %v241
        %v362 = vunpack.c.l.bf16 %v242
        %v363 = vunpack.c.l.bf16 %v243
        %v364 = vunpack.c.l.bf16 %v244
        %v365 = vunpack.c.l.bf16 %v245
        %v366 = vunpack.c.l.bf16 %v246
        %v367 = vunpack.c.l.bf16 %v247
        %v368 = vunpack.c.l.bf16 %v248
        %v369 = vunpack.c.l.bf16 %v249
        %v370 = vunpack.c.l.bf16 %v250
        %v371 = vunpack.c.l.bf16 %v251
        %v372 = vunpack.c.l.bf16 %v252
        %v373 = vunpack.c.l.bf16 %v253
        %v374 = vunpack.c.l.bf16 %v254
        %v375 = vunpack.c.l.bf16 %v255
        %v376 = vunpack.c.l.bf16 %v256
        %v377 = vunpack.c.l.bf16 %v257
        %v378 = vunpack.c.l.bf16 %v258
        %v379 = vunpack.c.l.bf16 %v259
        %v380 = vunpack.c.l.bf16 %v260
        %v381 = vunpack.c.l.bf16 %v261
        %v382 = vunpack.c.l.bf16 %v262
        %v383 = vunpack.c.l.bf16 %v263
        %v384 = vunpack.c.l.bf16 %v264
        %v385 = vunpack.c.l.bf16 %v265
        %v386 = vunpack.c.l.bf16 %v266
        %v387 = vunpack.c.l.bf16 %v267
        %v388 = vunpack.c.l.bf16 %v268
        %v389 = vunpack.c.l.bf16 %v269
        %v390 = vunpack.c.l.bf16 %v270
        %v391 = vunpack.c.l.bf16 %v271
        %v392 = vunpack.c.l.bf16 %v272
        %v393 = vunpack.c.l.bf16 %v273
        %v394 = vunpack.c.l.bf16 %v274
        %v395 = vunpack.c.l.bf16 %v275
        %v396 = vunpack.c.l.bf16 %v276
        %v397 = vunpack.c.l.bf16 %v277
        %v398 = vunpack.c.l.bf16 %v278
        %v399 = vunpack.c.l.bf16 %v279
        %v400 = vunpack.c.l.bf16 %v280
        %v401 = vunpack.c.l.bf16 %v281
        %v402 = vunpack.c.l.bf16 %v282
        %v403 = vunpack.c.l.bf16 %v283
        %v404 = vunpack.c.l.bf16 %v284
        %v405 = vunpack.c.l.bf16 %v285
        %v406 = vunpack.c.l.bf16 %v286
        %v407 = vunpack.c.l.bf16 %v287
        %v408 = vunpack.c.l.bf16 %v288
        %v409 = vunpack.c.l.bf16 %v289
        %v410 = vunpack.c.l.bf16 %v290
        %v411 = vunpack.c.l.bf16 %v291
        %v412 = vunpack.c.l.bf16 %v292
        %v413 = vunpack.c.l.bf16 %v293
        %v414 = vunpack.c.l.bf16 %v294
        %v415 = vunpack.c.l.bf16 %v295
        %v416 = vunpack.c.l.bf16 %v296
        %v417 = vunpack.c.l.bf16 %v297
        %v418 = vunpack.c.l.bf16 %v298
        %v419 = vunpack.c.l.bf16 %v299
        %v420 = vunpack.c.l.bf16 %v300
        %v421 = vunpack.c.l.bf16 %v301
        %v422 = vunpack.c.l.bf16 %v302
        %v423 = vunpack.c.l.bf16 %v303
        %v424 = vunpack.c.l.bf16 %v304
        %v425 = vunpack.c.l.bf16 %v305
        %v426 = vunpack.c.l.bf16 %v306
        %v427 = vunpack.c.l.bf16 %v307
        %v428 = vunpack.c.l.bf16 %v308
        %v429 = vunpack.c.l.bf16 %v309
        %v430 = vunpack.c.l.bf16 %v310
        %v431 = vunpack.c.l.bf16 %v311
        %v432 = vunpack.c.l.bf16 %v312
        %v433 = vunpack.c.l.bf16 %v313
        %v434 = vunpack.c.l.bf16 %v314
        %v435 = vunpack.c.l.bf16 %v315
        %v436 = vunpack.c.l.bf16 %v316
        %v437 = vunpack.c.l.bf16 %v317
        %v438 = vunpack.c.l.bf16 %v318
        %v439 = vunpack.c.l.bf16 %v319
        %v440 = vunpack.c.l.bf16 %v320
        %v441 = vunpack.c.l.bf16 %v321
        %v442 = vunpack.c.l.bf16 %v322
        %v443 = vunpack.c.l.bf16 %v323
        %v444 = vunpack.c.l.bf16 %v324
        %v445 = vunpack.c.l.bf16 %v325
        %v446 = vunpack.c.l.bf16 %v326
        %v447 = vunpack.c.l.bf16 %v327
        %v448 = vunpack.c.l.bf16 %v328
        %v449 = vunpack.c.l.bf16 %v329
        %v450 = vunpack.c.l.bf16 %v330
        %v451 = vunpack.c.l.bf16 %v331
        %v452 = vunpack.c.l.bf16 %v332
        %v453 = vunpack.c.l.bf16 %v333
        %v454 = vunpack.c.l.bf16 %v334
        %v455 = vunpack.c.l.bf16 %v335
        %v456 = vunpack.c.l.bf16 %v336
        %v457 = vunpack.c.l.bf16 %v337
        %v458 = vunpack.c.l.bf16 %v338
        %v459 = vunpack.c.l.bf16 %v339
        %v460 = vunpack.c.l.bf16 %v340
        %v461 = vunpack.c.l.bf16 %v341
        %v462 = vunpack.c.l.bf16 %v342
        %v463 = vunpack.c.l.bf16 %v343
        %v464 = vunpack.c.l.bf16 %v344
        %v465 = vunpack.c.l.bf16 %v345
        %v466 = vunpack.c.l.bf16 %v346
        %v467 = vunpack.c.l.bf16 %v347
        %v468 = vunpack.c.l.bf16 %v348
        %v469 = vunpack.c.l.bf16 %v349
        %v470 = vunpack.c.l.bf16 %v350
        %v471 = vunpack.c.l.bf16 %v351
        %v472 = vunpack.c.l.bf16 %v352
        %v473 = vunpack.c.l.bf16 %v353
        %v474 = vunpack.c.l.bf16 %v354
        %v475 = vunpack.c.l.bf16 %v355
        %v476 = vunpack.c.l.bf16 %v356
        %v477 = vld [vmem:[%s1] sm:$0xff]
        %v478 = vld [vmem:[%s1 + $0x8] sm:$0xff]
        %v479 = vld [vmem:[%s1 + $0x10] sm:$0xff]
        %v480 = vld [vmem:[%s1 + $0x18] sm:$0x7]
        %v481 = vperm.slane %v477, 0
        %v482 = vmul.f32 %v357, %v481
        %v483 = vmul.f32 %v359, %v481
        %v484 = vmul.f32 %v361, %v481
        %v485 = vmul.f32 %v363, %v481
        %v486 = vmul.f32 %v365, %v481
        %v487 = vmul.f32 %v367, %v481
        %v488 = vmul.f32 %v369, %v481
        %v489 = vmul.f32 %v371, %v481
        %v490 = vmul.f32 %v377, %v481
        %v491 = vmul.f32 %v379, %v481
        %v492 = vmul.f32 %v381, %v481
        %v493 = vmul.f32 %v383, %v481
        %v494 = vmul.f32 %v385, %v481
        %v495 = vmul.f32 %v387, %v481
        %v496 = vmul.f32 %v389, %v481
        %v497 = vmul.f32 %v391, %v481
        %v498 = vmul.f32 %v397, %v481
        %v499 = vmul.f32 %v399, %v481
        %v500 = vmul.f32 %v401, %v481
        %v501 = vmul.f32 %v403, %v481
        %v502 = vmul.f32 %v405, %v481
        %v503 = vmul.f32 %v407, %v481
        %v504 = vmul.f32 %v409, %v481
        %v505 = vmul.f32 %v411, %v481
        %v506 = vmul.f32 %v417, %v481
        %v507 = vmul.f32 %v419, %v481
        %v508 = vmul.f32 %v421, %v481
        %v509 = vmul.f32 %v423, %v481
        %v510 = vmul.f32 %v425, %v481
        %v511 = vmul.f32 %v427, %v481
        %v512 = vmul.f32 %v429, %v481
        %v513 = vmul.f32 %v431, %v481
        %v514 = vperm.slane %v477, 1
        %v515 = vmul.f32 %v357, %v514
        %v516 = vmul.f32 %v358, %v514
        %v517 = vmul.f32 %v359, %v514
        %v518 = vmul.f32 %v360, %v514
        %v519 = vmul.f32 %v361, %v514
        %v520 = vmul.f32 %v362, %v514
        %v521 = vmul.f32 %v363, %v514
        %v522 = vmul.f32 %v364, %v514
        %v523 = vmul.f32 %v365, %v514
        %v524 = vmul.f32 %v366, %v514
        %v525 = vmul.f32 %v367, %v514
        %v526 = vmul.f32 %v368, %v514
        %v527 = vmul.f32 %v369, %v514
        %v528 = vmul.f32 %v370, %v514
        %v529 = vmul.f32 %v371, %v514
        %v530 = vmul.f32 %v372, %v514
        %v531 = vmul.f32 %v377, %v514
        %v532 = vmul.f32 %v378, %v514
        %v533 = vmul.f32 %v379, %v514
        %v534 = vmul.f32 %v380, %v514
        %v535 = vmul.f32 %v381, %v514
        %v536 = vmul.f32 %v382, %v514
        %v537 = vmul.f32 %v383, %v514
        %v538 = vmul.f32 %v384, %v514
        %v539 = vmul.f32 %v385, %v514
        %v540 = vmul.f32 %v386, %v514
        %v541 = vmul.f32 %v387, %v514
        %v542 = vmul.f32 %v388, %v514
        %v543 = vmul.f32 %v389, %v514
        %v544 = vmul.f32 %v390, %v514
        %v545 = vmul.f32 %v391, %v514
        %v546 = vmul.f32 %v392, %v514
        %v547 = vmul.f32 %v397, %v514
        %v548 = vmul.f32 %v398, %v514
        %v549 = vmul.f32 %v399, %v514
        %v550 = vmul.f32 %v400, %v514
        %v551 = vmul.f32 %v401, %v514
        %v552 = vmul.f32 %v402, %v514
        %v553 = vmul.f32 %v403, %v514
        %v554 = vmul.f32 %v404, %v514
        %v555 = vmul.f32 %v405, %v514
        %v556 = vmul.f32 %v406, %v514
        %v557 = vmul.f32 %v407, %v514
        %v558 = vmul.f32 %v408, %v514
        %v559 = vmul.f32 %v409, %v514
        %v560 = vmul.f32 %v410, %v514
        %v561 = vmul.f32 %v411, %v514
        %v562 = vmul.f32 %v412, %v514
        %v563 = vmul.f32 %v417, %v514
        %v564 = vmul.f32 %v418, %v514
        %v565 = vmul.f32 %v419, %v514
        %v566 = vmul.f32 %v420, %v514
        %v567 = vmul.f32 %v421, %v514
        %v568 = vmul.f32 %v422, %v514
        %v569 = vmul.f32 %v423, %v514
        %v570 = vmul.f32 %v424, %v514
        %v571 = vmul.f32 %v425, %v514
        %v572 = vmul.f32 %v426, %v514
        %v573 = vmul.f32 %v427, %v514
        %v574 = vmul.f32 %v428, %v514
        %v575 = vmul.f32 %v429, %v514
        %v576 = vmul.f32 %v430, %v514
        %v577 = vmul.f32 %v431, %v514
        %v578 = vmul.f32 %v432, %v514
        %vm643 = vcmask 1046528
        %v644 = vrot.slane %v515, 1
        %v645 = vrot.slane %v516, 1
        %v646 = vsel %vm643, %v644, %v645
        %v647 = vrot.slane %v517, 1
        %v648 = vrot.slane %v518, 1
        %v649 = vsel %vm643, %v647, %v648
        %v650 = vrot.slane %v519, 1
        %v651 = vrot.slane %v520, 1
        %v652 = vsel %vm643, %v650, %v651
        %v653 = vrot.slane %v521, 1
        %v654 = vrot.slane %v522, 1
        %v655 = vsel %vm643, %v653, %v654
        %v656 = vrot.slane %v523, 1
        %v657 = vrot.slane %v524, 1
        %v658 = vsel %vm643, %v656, %v657
        %v659 = vrot.slane %v525, 1
        %v660 = vrot.slane %v526, 1
        %v661 = vsel %vm643, %v659, %v660
        %v662 = vrot.slane %v527, 1
        %v663 = vrot.slane %v528, 1
        %v664 = vsel %vm643, %v662, %v663
        %v665 = vrot.slane %v529, 1
        %v666 = vrot.slane %v530, 1
        %v667 = vsel %vm643, %v665, %v666
        %v668 = vrot.slane %v531, 1
        %v669 = vrot.slane %v532, 1
        %v670 = vsel %vm643, %v668, %v669
        %v671 = vrot.slane %v533, 1
        %v672 = vrot.slane %v534, 1
        %v673 = vsel %vm643, %v671, %v672
        %v674 = vrot.slane %v535, 1
        %v675 = vrot.slane %v536, 1
        %v676 = vsel %vm643, %v674, %v675
        %v677 = vrot.slane %v537, 1
        %v678 = vrot.slane %v538, 1
        %v679 = vsel %vm643, %v677, %v678
        %v680 = vrot.slane %v539, 1
        %v681 = vrot.slane %v540, 1
        %v682 = vsel %vm643, %v680, %v681
        %v683 = vrot.slane %v541, 1
        %v684 = vrot.slane %v542, 1
        %v685 = vsel %vm643, %v683, %v684
        %v686 = vrot.slane %v543, 1
        %v687 = vrot.slane %v544, 1
        %v688 = vsel %vm643, %v686, %v687
        %v689 = vrot.slane %v545, 1
        %v690 = vrot.slane %v546, 1
        %v691 = vsel %vm643, %v689, %v690
        %v692 = vrot.slane %v547, 1
        %v693 = vrot.slane %v548, 1
        %v694 = vsel %vm643, %v692, %v693
        %v695 = vrot.slane %v549, 1
        %v696 = vrot.slane %v550, 1
        %v697 = vsel %vm643, %v695, %v696
        %v698 = vrot.slane %v551, 1
        %v699 = vrot.slane %v552, 1
        %v700 = vsel %vm643, %v698, %v699
        %v701 = vrot.slane %v553, 1
        %v702 = vrot.slane %v554, 1
        %v703 = vsel %vm643, %v701, %v702
        %v704 = vrot.slane %v555, 1
        %v705 = vrot.slane %v556, 1
        %v706 = vsel %vm643, %v704, %v705
        %v707 = vrot.slane %v557, 1
        %v708 = vrot.slane %v558, 1
        %v709 = vsel %vm643, %v707, %v708
        %v710 = vrot.slane %v559, 1
        %v711 = vrot.slane %v560, 1
        %v712 = vsel %vm643, %v710, %v711
        %v713 = vrot.slane %v561, 1
        %v714 = vrot.slane %v562, 1
        %v715 = vsel %vm643, %v713, %v714
        %v716 = vrot.slane %v563, 1
        %v717 = vrot.slane %v564, 1
        %v718 = vsel %vm643, %v716, %v717
        %v719 = vrot.slane %v565, 1
        %v720 = vrot.slane %v566, 1
        %v721 = vsel %vm643, %v719, %v720
        %v722 = vrot.slane %v567, 1
        %v723 = vrot.slane %v568, 1
        %v724 = vsel %vm643, %v722, %v723
        %v725 = vrot.slane %v569, 1
        %v726 = vrot.slane %v570, 1
        %v727 = vsel %vm643, %v725, %v726
        %v728 = vrot.slane %v571, 1
        %v729 = vrot.slane %v572, 1
        %v730 = vsel %vm643, %v728, %v729
        %v731 = vrot.slane %v573, 1
        %v732 = vrot.slane %v574, 1
        %v733 = vsel %vm643, %v731, %v732
        %v734 = vrot.slane %v575, 1
        %v735 = vrot.slane %v576, 1
        %v736 = vsel %vm643, %v734, %v735
        %v737 = vrot.slane %v577, 1
        %v738 = vrot.slane %v578, 1
        %v739 = vsel %vm643, %v737, %v738
        %v772 = vadd.f32 %v482, %v646
        %v773 = vadd.f32 %v483, %v649
        %v774 = vadd.f32 %v484, %v652
        %v775 = vadd.f32 %v485, %v655
        %v776 = vadd.f32 %v486, %v658
        %v777 = vadd.f32 %v487, %v661
        %v778 = vadd.f32 %v488, %v664
        %v779 = vadd.f32 %v489, %v667
        %v780 = vadd.f32 %v490, %v670
        %v781 = vadd.f32 %v491, %v673
        %v782 = vadd.f32 %v492, %v676
        %v783 = vadd.f32 %v493, %v679
        %v784 = vadd.f32 %v494, %v682
        %v785 = vadd.f32 %v495, %v685
        %v786 = vadd.f32 %v496, %v688
        %v787 = vadd.f32 %v497, %v691
        %v788 = vadd.f32 %v498, %v694
        %v789 = vadd.f32 %v499, %v697
        %v790 = vadd.f32 %v500, %v700
        %v791 = vadd.f32 %v501, %v703
        %v792 = vadd.f32 %v502, %v706
        %v793 = vadd.f32 %v503, %v709
        %v794 = vadd.f32 %v504, %v712
        %v795 = vadd.f32 %v505, %v715
        %v796 = vadd.f32 %v506, %v718
        %v797 = vadd.f32 %v507, %v721
        %v798 = vadd.f32 %v508, %v724
        %v799 = vadd.f32 %v509, %v727
        %v800 = vadd.f32 %v510, %v730
        %v801 = vadd.f32 %v511, %v733
        %v802 = vadd.f32 %v512, %v736
        %v803 = vadd.f32 %v513, %v739
        %v804 = vperm.slane %v477, 2
        %v805 = vmul.f32 %v357, %v804
        %v806 = vmul.f32 %v358, %v804
        %v807 = vmul.f32 %v359, %v804
        %v808 = vmul.f32 %v360, %v804
        %v809 = vmul.f32 %v361, %v804
        %v810 = vmul.f32 %v362, %v804
        %v811 = vmul.f32 %v363, %v804
        %v812 = vmul.f32 %v364, %v804
        %v813 = vmul.f32 %v365, %v804
        %v814 = vmul.f32 %v366, %v804
        %v815 = vmul.f32 %v367, %v804
        %v816 = vmul.f32 %v368, %v804
        %v817 = vmul.f32 %v369, %v804
        %v818 = vmul.f32 %v370, %v804
        %v819 = vmul.f32 %v371, %v804
        %v820 = vmul.f32 %v372, %v804
        %v821 = vmul.f32 %v377, %v804
        %v822 = vmul.f32 %v378, %v804
        %v823 = vmul.f32 %v379, %v804
        %v824 = vmul.f32 %v380, %v804
        %v825 = vmul.f32 %v381, %v804
        %v826 = vmul.f32 %v382, %v804
        %v827 = vmul.f32 %v383, %v804
        %v828 = vmul.f32 %v384, %v804
        %v829 = vmul.f32 %v385, %v804
        %v830 = vmul.f32 %v386, %v804
        %v831 = vmul.f32 %v387, %v804
        %v832 = vmul.f32 %v388, %v804
        %v833 = vmul.f32 %v389, %v804
        %v834 = vmul.f32 %v390, %v804
        %v835 = vmul.f32 %v391, %v804
        %v836 = vmul.f32 %v392, %v804
        %v837 = vmul.f32 %v397, %v804
        %v838 = vmul.f32 %v398, %v804
        %v839 = vmul.f32 %v399, %v804
        %v840 = vmul.f32 %v400, %v804
        %v841 = vmul.f32 %v401, %v804
        %v842 = vmul.f32 %v402, %v804
        %v843 = vmul.f32 %v403, %v804
        %v844 = vmul.f32 %v404, %v804
        %v845 = vmul.f32 %v405, %v804
        %v846 = vmul.f32 %v406, %v804
        %v847 = vmul.f32 %v407, %v804
        %v848 = vmul.f32 %v408, %v804
        %v849 = vmul.f32 %v409, %v804
        %v850 = vmul.f32 %v410, %v804
        %v851 = vmul.f32 %v411, %v804
        %v852 = vmul.f32 %v412, %v804
        %v853 = vmul.f32 %v417, %v804
        %v854 = vmul.f32 %v418, %v804
        %v855 = vmul.f32 %v419, %v804
        %v856 = vmul.f32 %v420, %v804
        %v857 = vmul.f32 %v421, %v804
        %v858 = vmul.f32 %v422, %v804
        %v859 = vmul.f32 %v423, %v804
        %v860 = vmul.f32 %v424, %v804
        %v861 = vmul.f32 %v425, %v804
        %v862 = vmul.f32 %v426, %v804
        %v863 = vmul.f32 %v427, %v804
        %v864 = vmul.f32 %v428, %v804
        %v865 = vmul.f32 %v429, %v804
        %v866 = vmul.f32 %v430, %v804
        %v867 = vmul.f32 %v431, %v804
        %v868 = vmul.f32 %v432, %v804
        %vm933 = vcmask 1045504
        %v934 = vrot.slane %v805, 2
        %v935 = vrot.slane %v806, 2
        %v936 = vsel %vm933, %v934, %v935
        %v937 = vrot.slane %v807, 2
        %v938 = vrot.slane %v808, 2
        %v939 = vsel %vm933, %v937, %v938
        %v940 = vrot.slane %v809, 2
        %v941 = vrot.slane %v810, 2
        %v942 = vsel %vm933, %v940, %v941
        %v943 = vrot.slane %v811, 2
        %v944 = vrot.slane %v812, 2
        %v945 = vsel %vm933, %v943, %v944
        %v946 = vrot.slane %v813, 2
        %v947 = vrot.slane %v814, 2
        %v948 = vsel %vm933, %v946, %v947
        %v949 = vrot.slane %v815, 2
        %v950 = vrot.slane %v816, 2
        %v951 = vsel %vm933, %v949, %v950
        %v952 = vrot.slane %v817, 2
        %v953 = vrot.slane %v818, 2
        %v954 = vsel %vm933, %v952, %v953
        %v955 = vrot.slane %v819, 2
        %v956 = vrot.slane %v820, 2
        %v957 = vsel %vm933, %v955, %v956
        %v958 = vrot.slane %v821, 2
        %v959 = vrot.slane %v822, 2
        %v960 = vsel %vm933, %v958, %v959
        %v961 = vrot.slane %v823, 2
        %v962 = vrot.slane %v824, 2
        %v963 = vsel %vm933, %v961, %v962
        %v964 = vrot.slane %v825, 2
        %v965 = vrot.slane %v826, 2
        %v966 = vsel %vm933, %v964, %v965
        %v967 = vrot.slane %v827, 2
        %v968 = vrot.slane %v828, 2
        %v969 = vsel %vm933, %v967, %v968
        %v970 = vrot.slane %v829, 2
        %v971 = vrot.slane %v830, 2
        %v972 = vsel %vm933, %v970, %v971
        %v973 = vrot.slane %v831, 2
        %v974 = vrot.slane %v832, 2
        %v975 = vsel %vm933, %v973, %v974
        %v976 = vrot.slane %v833, 2
        %v977 = vrot.slane %v834, 2
        %v978 = vsel %vm933, %v976, %v977
        %v979 = vrot.slane %v835, 2
        %v980 = vrot.slane %v836, 2
        %v981 = vsel %vm933, %v979, %v980
        %v982 = vrot.slane %v837, 2
        %v983 = vrot.slane %v838, 2
        %v984 = vsel %vm933, %v982, %v983
        %v985 = vrot.slane %v839, 2
        %v986 = vrot.slane %v840, 2
        %v987 = vsel %vm933, %v985, %v986
        %v988 = vrot.slane %v841, 2
        %v989 = vrot.slane %v842, 2
        %v990 = vsel %vm933, %v988, %v989
        %v991 = vrot.slane %v843, 2
        %v992 = vrot.slane %v844, 2
        %v993 = vsel %vm933, %v991, %v992
        %v994 = vrot.slane %v845, 2
        %v995 = vrot.slane %v846, 2
        %v996 = vsel %vm933, %v994, %v995
        %v997 = vrot.slane %v847, 2
        %v998 = vrot.slane %v848, 2
        %v999 = vsel %vm933, %v997, %v998
        %v1000 = vrot.slane %v849, 2
        %v1001 = vrot.slane %v850, 2
        %v1002 = vsel %vm933, %v1000, %v1001
        %v1003 = vrot.slane %v851, 2
        %v1004 = vrot.slane %v852, 2
        %v1005 = vsel %vm933, %v1003, %v1004
        %v1006 = vrot.slane %v853, 2
        %v1007 = vrot.slane %v854, 2
        %v1008 = vsel %vm933, %v1006, %v1007
        %v1009 = vrot.slane %v855, 2
        %v1010 = vrot.slane %v856, 2
        %v1011 = vsel %vm933, %v1009, %v1010
        %v1012 = vrot.slane %v857, 2
        %v1013 = vrot.slane %v858, 2
        %v1014 = vsel %vm933, %v1012, %v1013
        %v1015 = vrot.slane %v859, 2
        %v1016 = vrot.slane %v860, 2
        %v1017 = vsel %vm933, %v1015, %v1016
        %v1018 = vrot.slane %v861, 2
        %v1019 = vrot.slane %v862, 2
        %v1020 = vsel %vm933, %v1018, %v1019
        %v1021 = vrot.slane %v863, 2
        %v1022 = vrot.slane %v864, 2
        %v1023 = vsel %vm933, %v1021, %v1022
        %v1024 = vrot.slane %v865, 2
        %v1025 = vrot.slane %v866, 2
        %v1026 = vsel %vm933, %v1024, %v1025
        %v1027 = vrot.slane %v867, 2
        %v1028 = vrot.slane %v868, 2
        %v1029 = vsel %vm933, %v1027, %v1028
        %v1062 = vadd.f32 %v772, %v936
        %v1063 = vadd.f32 %v773, %v939
        %v1064 = vadd.f32 %v774, %v942
        %v1065 = vadd.f32 %v775, %v945
        %v1066 = vadd.f32 %v776, %v948
        %v1067 = vadd.f32 %v777, %v951
        %v1068 = vadd.f32 %v778, %v954
        %v1069 = vadd.f32 %v779, %v957
        %v1070 = vadd.f32 %v780, %v960
        %v1071 = vadd.f32 %v781, %v963
        %v1072 = vadd.f32 %v782, %v966
        %v1073 = vadd.f32 %v783, %v969
        %v1074 = vadd.f32 %v784, %v972
        %v1075 = vadd.f32 %v785, %v975
        %v1076 = vadd.f32 %v786, %v978
        %v1077 = vadd.f32 %v787, %v981
        %v1078 = vadd.f32 %v788, %v984
        %v1079 = vadd.f32 %v789, %v987
        %v1080 = vadd.f32 %v790, %v990
        %v1081 = vadd.f32 %v791, %v993
        %v1082 = vadd.f32 %v792, %v996
        %v1083 = vadd.f32 %v793, %v999
        %v1084 = vadd.f32 %v794, %v1002
        %v1085 = vadd.f32 %v795, %v1005
        %v1086 = vadd.f32 %v796, %v1008
        %v1087 = vadd.f32 %v797, %v1011
        %v1088 = vadd.f32 %v798, %v1014
        %v1089 = vadd.f32 %v799, %v1017
        %v1090 = vadd.f32 %v800, %v1020
        %v1091 = vadd.f32 %v801, %v1023
        %v1092 = vadd.f32 %v802, %v1026
        %v1093 = vadd.f32 %v803, %v1029
        %v1094 = vperm.slane %v477, 3
        %v1095 = vmul.f32 %v359, %v1094
        %v1096 = vmul.f32 %v361, %v1094
        %v1097 = vmul.f32 %v363, %v1094
        %v1098 = vmul.f32 %v365, %v1094
        %v1099 = vmul.f32 %v367, %v1094
        %v1100 = vmul.f32 %v369, %v1094
        %v1101 = vmul.f32 %v371, %v1094
        %v1102 = vmul.f32 %v373, %v1094
        %v1103 = vmul.f32 %v379, %v1094
        %v1104 = vmul.f32 %v381, %v1094
        %v1105 = vmul.f32 %v383, %v1094
        %v1106 = vmul.f32 %v385, %v1094
        %v1107 = vmul.f32 %v387, %v1094
        %v1108 = vmul.f32 %v389, %v1094
        %v1109 = vmul.f32 %v391, %v1094
        %v1110 = vmul.f32 %v393, %v1094
        %v1111 = vmul.f32 %v399, %v1094
        %v1112 = vmul.f32 %v401, %v1094
        %v1113 = vmul.f32 %v403, %v1094
        %v1114 = vmul.f32 %v405, %v1094
        %v1115 = vmul.f32 %v407, %v1094
        %v1116 = vmul.f32 %v409, %v1094
        %v1117 = vmul.f32 %v411, %v1094
        %v1118 = vmul.f32 %v413, %v1094
        %v1119 = vmul.f32 %v419, %v1094
        %v1120 = vmul.f32 %v421, %v1094
        %v1121 = vmul.f32 %v423, %v1094
        %v1122 = vmul.f32 %v425, %v1094
        %v1123 = vmul.f32 %v427, %v1094
        %v1124 = vmul.f32 %v429, %v1094
        %v1125 = vmul.f32 %v431, %v1094
        %v1126 = vmul.f32 %v433, %v1094
        %v1127 = vadd.f32 %v1062, %v1095
        %v1128 = vadd.f32 %v1063, %v1096
        %v1129 = vadd.f32 %v1064, %v1097
        %v1130 = vadd.f32 %v1065, %v1098
        %v1131 = vadd.f32 %v1066, %v1099
        %v1132 = vadd.f32 %v1067, %v1100
        %v1133 = vadd.f32 %v1068, %v1101
        %v1134 = vadd.f32 %v1069, %v1102
        %v1135 = vadd.f32 %v1070, %v1103
        %v1136 = vadd.f32 %v1071, %v1104
        %v1137 = vadd.f32 %v1072, %v1105
        %v1138 = vadd.f32 %v1073, %v1106
        %v1139 = vadd.f32 %v1074, %v1107
        %v1140 = vadd.f32 %v1075, %v1108
        %v1141 = vadd.f32 %v1076, %v1109
        %v1142 = vadd.f32 %v1077, %v1110
        %v1143 = vadd.f32 %v1078, %v1111
        %v1144 = vadd.f32 %v1079, %v1112
        %v1145 = vadd.f32 %v1080, %v1113
        %v1146 = vadd.f32 %v1081, %v1114
        %v1147 = vadd.f32 %v1082, %v1115
        %v1148 = vadd.f32 %v1083, %v1116
        %v1149 = vadd.f32 %v1084, %v1117
        %v1150 = vadd.f32 %v1085, %v1118
        %v1151 = vadd.f32 %v1086, %v1119
        %v1152 = vadd.f32 %v1087, %v1120
        %v1153 = vadd.f32 %v1088, %v1121
        %v1154 = vadd.f32 %v1089, %v1122
        %v1155 = vadd.f32 %v1090, %v1123
        %v1156 = vadd.f32 %v1091, %v1124
        %v1157 = vadd.f32 %v1092, %v1125
        %v1158 = vadd.f32 %v1093, %v1126
        %v1159 = vperm.slane %v477, 4
        %v1160 = vmul.f32 %v359, %v1159
        %v1161 = vmul.f32 %v360, %v1159
        %v1162 = vmul.f32 %v361, %v1159
        %v1163 = vmul.f32 %v362, %v1159
        %v1164 = vmul.f32 %v363, %v1159
        %v1165 = vmul.f32 %v364, %v1159
        %v1166 = vmul.f32 %v365, %v1159
        %v1167 = vmul.f32 %v366, %v1159
        %v1168 = vmul.f32 %v367, %v1159
        %v1169 = vmul.f32 %v368, %v1159
        %v1170 = vmul.f32 %v369, %v1159
        %v1171 = vmul.f32 %v370, %v1159
        %v1172 = vmul.f32 %v371, %v1159
        %v1173 = vmul.f32 %v372, %v1159
        %v1174 = vmul.f32 %v373, %v1159
        %v1175 = vmul.f32 %v374, %v1159
        %v1176 = vmul.f32 %v379, %v1159
        %v1177 = vmul.f32 %v380, %v1159
        %v1178 = vmul.f32 %v381, %v1159
        %v1179 = vmul.f32 %v382, %v1159
        %v1180 = vmul.f32 %v383, %v1159
        %v1181 = vmul.f32 %v384, %v1159
        %v1182 = vmul.f32 %v385, %v1159
        %v1183 = vmul.f32 %v386, %v1159
        %v1184 = vmul.f32 %v387, %v1159
        %v1185 = vmul.f32 %v388, %v1159
        %v1186 = vmul.f32 %v389, %v1159
        %v1187 = vmul.f32 %v390, %v1159
        %v1188 = vmul.f32 %v391, %v1159
        %v1189 = vmul.f32 %v392, %v1159
        %v1190 = vmul.f32 %v393, %v1159
        %v1191 = vmul.f32 %v394, %v1159
        %v1192 = vmul.f32 %v399, %v1159
        %v1193 = vmul.f32 %v400, %v1159
        %v1194 = vmul.f32 %v401, %v1159
        %v1195 = vmul.f32 %v402, %v1159
        %v1196 = vmul.f32 %v403, %v1159
        %v1197 = vmul.f32 %v404, %v1159
        %v1198 = vmul.f32 %v405, %v1159
        %v1199 = vmul.f32 %v406, %v1159
        %v1200 = vmul.f32 %v407, %v1159
        %v1201 = vmul.f32 %v408, %v1159
        %v1202 = vmul.f32 %v409, %v1159
        %v1203 = vmul.f32 %v410, %v1159
        %v1204 = vmul.f32 %v411, %v1159
        %v1205 = vmul.f32 %v412, %v1159
        %v1206 = vmul.f32 %v413, %v1159
        %v1207 = vmul.f32 %v414, %v1159
        %v1208 = vmul.f32 %v419, %v1159
        %v1209 = vmul.f32 %v420, %v1159
        %v1210 = vmul.f32 %v421, %v1159
        %v1211 = vmul.f32 %v422, %v1159
        %v1212 = vmul.f32 %v423, %v1159
        %v1213 = vmul.f32 %v424, %v1159
        %v1214 = vmul.f32 %v425, %v1159
        %v1215 = vmul.f32 %v426, %v1159
        %v1216 = vmul.f32 %v427, %v1159
        %v1217 = vmul.f32 %v428, %v1159
        %v1218 = vmul.f32 %v429, %v1159
        %v1219 = vmul.f32 %v430, %v1159
        %v1220 = vmul.f32 %v431, %v1159
        %v1221 = vmul.f32 %v432, %v1159
        %v1222 = vmul.f32 %v433, %v1159
        %v1223 = vmul.f32 %v434, %v1159
        %v1288 = vrot.slane %v1160, 1
        %v1289 = vrot.slane %v1161, 1
        %v1290 = vsel %vm643, %v1288, %v1289
        %v1291 = vrot.slane %v1162, 1
        %v1292 = vrot.slane %v1163, 1
        %v1293 = vsel %vm643, %v1291, %v1292
        %v1294 = vrot.slane %v1164, 1
        %v1295 = vrot.slane %v1165, 1
        %v1296 = vsel %vm643, %v1294, %v1295
        %v1297 = vrot.slane %v1166, 1
        %v1298 = vrot.slane %v1167, 1
        %v1299 = vsel %vm643, %v1297, %v1298
        %v1300 = vrot.slane %v1168, 1
        %v1301 = vrot.slane %v1169, 1
        %v1302 = vsel %vm643, %v1300, %v1301
        %v1303 = vrot.slane %v1170, 1
        %v1304 = vrot.slane %v1171, 1
        %v1305 = vsel %vm643, %v1303, %v1304
        %v1306 = vrot.slane %v1172, 1
        %v1307 = vrot.slane %v1173, 1
        %v1308 = vsel %vm643, %v1306, %v1307
        %v1309 = vrot.slane %v1174, 1
        %v1310 = vrot.slane %v1175, 1
        %v1311 = vsel %vm643, %v1309, %v1310
        %v1312 = vrot.slane %v1176, 1
        %v1313 = vrot.slane %v1177, 1
        %v1314 = vsel %vm643, %v1312, %v1313
        %v1315 = vrot.slane %v1178, 1
        %v1316 = vrot.slane %v1179, 1
        %v1317 = vsel %vm643, %v1315, %v1316
        %v1318 = vrot.slane %v1180, 1
        %v1319 = vrot.slane %v1181, 1
        %v1320 = vsel %vm643, %v1318, %v1319
        %v1321 = vrot.slane %v1182, 1
        %v1322 = vrot.slane %v1183, 1
        %v1323 = vsel %vm643, %v1321, %v1322
        %v1324 = vrot.slane %v1184, 1
        %v1325 = vrot.slane %v1185, 1
        %v1326 = vsel %vm643, %v1324, %v1325
        %v1327 = vrot.slane %v1186, 1
        %v1328 = vrot.slane %v1187, 1
        %v1329 = vsel %vm643, %v1327, %v1328
        %v1330 = vrot.slane %v1188, 1
        %v1331 = vrot.slane %v1189, 1
        %v1332 = vsel %vm643, %v1330, %v1331
        %v1333 = vrot.slane %v1190, 1
        %v1334 = vrot.slane %v1191, 1
        %v1335 = vsel %vm643, %v1333, %v1334
        %v1336 = vrot.slane %v1192, 1
        %v1337 = vrot.slane %v1193, 1
        %v1338 = vsel %vm643, %v1336, %v1337
        %v1339 = vrot.slane %v1194, 1
        %v1340 = vrot.slane %v1195, 1
        %v1341 = vsel %vm643, %v1339, %v1340
        %v1342 = vrot.slane %v1196, 1
        %v1343 = vrot.slane %v1197, 1
        %v1344 = vsel %vm643, %v1342, %v1343
        %v1345 = vrot.slane %v1198, 1
        %v1346 = vrot.slane %v1199, 1
        %v1347 = vsel %vm643, %v1345, %v1346
        %v1348 = vrot.slane %v1200, 1
        %v1349 = vrot.slane %v1201, 1
        %v1350 = vsel %vm643, %v1348, %v1349
        %v1351 = vrot.slane %v1202, 1
        %v1352 = vrot.slane %v1203, 1
        %v1353 = vsel %vm643, %v1351, %v1352
        %v1354 = vrot.slane %v1204, 1
        %v1355 = vrot.slane %v1205, 1
        %v1356 = vsel %vm643, %v1354, %v1355
        %v1357 = vrot.slane %v1206, 1
        %v1358 = vrot.slane %v1207, 1
        %v1359 = vsel %vm643, %v1357, %v1358
        %v1360 = vrot.slane %v1208, 1
        %v1361 = vrot.slane %v1209, 1
        %v1362 = vsel %vm643, %v1360, %v1361
        %v1363 = vrot.slane %v1210, 1
        %v1364 = vrot.slane %v1211, 1
        %v1365 = vsel %vm643, %v1363, %v1364
        %v1366 = vrot.slane %v1212, 1
        %v1367 = vrot.slane %v1213, 1
        %v1368 = vsel %vm643, %v1366, %v1367
        %v1369 = vrot.slane %v1214, 1
        %v1370 = vrot.slane %v1215, 1
        %v1371 = vsel %vm643, %v1369, %v1370
        %v1372 = vrot.slane %v1216, 1
        %v1373 = vrot.slane %v1217, 1
        %v1374 = vsel %vm643, %v1372, %v1373
        %v1375 = vrot.slane %v1218, 1
        %v1376 = vrot.slane %v1219, 1
        %v1377 = vsel %vm643, %v1375, %v1376
        %v1378 = vrot.slane %v1220, 1
        %v1379 = vrot.slane %v1221, 1
        %v1380 = vsel %vm643, %v1378, %v1379
        %v1381 = vrot.slane %v1222, 1
        %v1382 = vrot.slane %v1223, 1
        %v1383 = vsel %vm643, %v1381, %v1382
        %v1416 = vadd.f32 %v1127, %v1290
        %v1417 = vadd.f32 %v1128, %v1293
        %v1418 = vadd.f32 %v1129, %v1296
        %v1419 = vadd.f32 %v1130, %v1299
        %v1420 = vadd.f32 %v1131, %v1302
        %v1421 = vadd.f32 %v1132, %v1305
        %v1422 = vadd.f32 %v1133, %v1308
        %v1423 = vadd.f32 %v1134, %v1311
        %v1424 = vadd.f32 %v1135, %v1314
        %v1425 = vadd.f32 %v1136, %v1317
        %v1426 = vadd.f32 %v1137, %v1320
        %v1427 = vadd.f32 %v1138, %v1323
        %v1428 = vadd.f32 %v1139, %v1326
        %v1429 = vadd.f32 %v1140, %v1329
        %v1430 = vadd.f32 %v1141, %v1332
        %v1431 = vadd.f32 %v1142, %v1335
        %v1432 = vadd.f32 %v1143, %v1338
        %v1433 = vadd.f32 %v1144, %v1341
        %v1434 = vadd.f32 %v1145, %v1344
        %v1435 = vadd.f32 %v1146, %v1347
        %v1436 = vadd.f32 %v1147, %v1350
        %v1437 = vadd.f32 %v1148, %v1353
        %v1438 = vadd.f32 %v1149, %v1356
        %v1439 = vadd.f32 %v1150, %v1359
        %v1440 = vadd.f32 %v1151, %v1362
        %v1441 = vadd.f32 %v1152, %v1365
        %v1442 = vadd.f32 %v1153, %v1368
        %v1443 = vadd.f32 %v1154, %v1371
        %v1444 = vadd.f32 %v1155, %v1374
        %v1445 = vadd.f32 %v1156, %v1377
        %v1446 = vadd.f32 %v1157, %v1380
        %v1447 = vadd.f32 %v1158, %v1383
        %v1448 = vperm.slane %v477, 5
        %v1449 = vmul.f32 %v359, %v1448
        %v1450 = vmul.f32 %v360, %v1448
        %v1451 = vmul.f32 %v361, %v1448
        %v1452 = vmul.f32 %v362, %v1448
        %v1453 = vmul.f32 %v363, %v1448
        %v1454 = vmul.f32 %v364, %v1448
        %v1455 = vmul.f32 %v365, %v1448
        %v1456 = vmul.f32 %v366, %v1448
        %v1457 = vmul.f32 %v367, %v1448
        %v1458 = vmul.f32 %v368, %v1448
        %v1459 = vmul.f32 %v369, %v1448
        %v1460 = vmul.f32 %v370, %v1448
        %v1461 = vmul.f32 %v371, %v1448
        %v1462 = vmul.f32 %v372, %v1448
        %v1463 = vmul.f32 %v373, %v1448
        %v1464 = vmul.f32 %v374, %v1448
        %v1465 = vmul.f32 %v379, %v1448
        %v1466 = vmul.f32 %v380, %v1448
        %v1467 = vmul.f32 %v381, %v1448
        %v1468 = vmul.f32 %v382, %v1448
        %v1469 = vmul.f32 %v383, %v1448
        %v1470 = vmul.f32 %v384, %v1448
        %v1471 = vmul.f32 %v385, %v1448
        %v1472 = vmul.f32 %v386, %v1448
        %v1473 = vmul.f32 %v387, %v1448
        %v1474 = vmul.f32 %v388, %v1448
        %v1475 = vmul.f32 %v389, %v1448
        %v1476 = vmul.f32 %v390, %v1448
        %v1477 = vmul.f32 %v391, %v1448
        %v1478 = vmul.f32 %v392, %v1448
        %v1479 = vmul.f32 %v393, %v1448
        %v1480 = vmul.f32 %v394, %v1448
        %v1481 = vmul.f32 %v399, %v1448
        %v1482 = vmul.f32 %v400, %v1448
        %v1483 = vmul.f32 %v401, %v1448
        %v1484 = vmul.f32 %v402, %v1448
        %v1485 = vmul.f32 %v403, %v1448
        %v1486 = vmul.f32 %v404, %v1448
        %v1487 = vmul.f32 %v405, %v1448
        %v1488 = vmul.f32 %v406, %v1448
        %v1489 = vmul.f32 %v407, %v1448
        %v1490 = vmul.f32 %v408, %v1448
        %v1491 = vmul.f32 %v409, %v1448
        %v1492 = vmul.f32 %v410, %v1448
        %v1493 = vmul.f32 %v411, %v1448
        %v1494 = vmul.f32 %v412, %v1448
        %v1495 = vmul.f32 %v413, %v1448
        %v1496 = vmul.f32 %v414, %v1448
        %v1497 = vmul.f32 %v419, %v1448
        %v1498 = vmul.f32 %v420, %v1448
        %v1499 = vmul.f32 %v421, %v1448
        %v1500 = vmul.f32 %v422, %v1448
        %v1501 = vmul.f32 %v423, %v1448
        %v1502 = vmul.f32 %v424, %v1448
        %v1503 = vmul.f32 %v425, %v1448
        %v1504 = vmul.f32 %v426, %v1448
        %v1505 = vmul.f32 %v427, %v1448
        %v1506 = vmul.f32 %v428, %v1448
        %v1507 = vmul.f32 %v429, %v1448
        %v1508 = vmul.f32 %v430, %v1448
        %v1509 = vmul.f32 %v431, %v1448
        %v1510 = vmul.f32 %v432, %v1448
        %v1511 = vmul.f32 %v433, %v1448
        %v1512 = vmul.f32 %v434, %v1448
        %v1577 = vrot.slane %v1449, 2
        %v1578 = vrot.slane %v1450, 2
        %v1579 = vsel %vm933, %v1577, %v1578
        %v1580 = vrot.slane %v1451, 2
        %v1581 = vrot.slane %v1452, 2
        %v1582 = vsel %vm933, %v1580, %v1581
        %v1583 = vrot.slane %v1453, 2
        %v1584 = vrot.slane %v1454, 2
        %v1585 = vsel %vm933, %v1583, %v1584
        %v1586 = vrot.slane %v1455, 2
        %v1587 = vrot.slane %v1456, 2
        %v1588 = vsel %vm933, %v1586, %v1587
        %v1589 = vrot.slane %v1457, 2
        %v1590 = vrot.slane %v1458, 2
        %v1591 = vsel %vm933, %v1589, %v1590
        %v1592 = vrot.slane %v1459, 2
        %v1593 = vrot.slane %v1460, 2
        %v1594 = vsel %vm933, %v1592, %v1593
        %v1595 = vrot.slane %v1461, 2
        %v1596 = vrot.slane %v1462, 2
        %v1597 = vsel %vm933, %v1595, %v1596
        %v1598 = vrot.slane %v1463, 2
        %v1599 = vrot.slane %v1464, 2
        %v1600 = vsel %vm933, %v1598, %v1599
        %v1601 = vrot.slane %v1465, 2
        %v1602 = vrot.slane %v1466, 2
        %v1603 = vsel %vm933, %v1601, %v1602
        %v1604 = vrot.slane %v1467, 2
        %v1605 = vrot.slane %v1468, 2
        %v1606 = vsel %vm933, %v1604, %v1605
        %v1607 = vrot.slane %v1469, 2
        %v1608 = vrot.slane %v1470, 2
        %v1609 = vsel %vm933, %v1607, %v1608
        %v1610 = vrot.slane %v1471, 2
        %v1611 = vrot.slane %v1472, 2
        %v1612 = vsel %vm933, %v1610, %v1611
        %v1613 = vrot.slane %v1473, 2
        %v1614 = vrot.slane %v1474, 2
        %v1615 = vsel %vm933, %v1613, %v1614
        %v1616 = vrot.slane %v1475, 2
        %v1617 = vrot.slane %v1476, 2
        %v1618 = vsel %vm933, %v1616, %v1617
        %v1619 = vrot.slane %v1477, 2
        %v1620 = vrot.slane %v1478, 2
        %v1621 = vsel %vm933, %v1619, %v1620
        %v1622 = vrot.slane %v1479, 2
        %v1623 = vrot.slane %v1480, 2
        %v1624 = vsel %vm933, %v1622, %v1623
        %v1625 = vrot.slane %v1481, 2
        %v1626 = vrot.slane %v1482, 2
        %v1627 = vsel %vm933, %v1625, %v1626
        %v1628 = vrot.slane %v1483, 2
        %v1629 = vrot.slane %v1484, 2
        %v1630 = vsel %vm933, %v1628, %v1629
        %v1631 = vrot.slane %v1485, 2
        %v1632 = vrot.slane %v1486, 2
        %v1633 = vsel %vm933, %v1631, %v1632
        %v1634 = vrot.slane %v1487, 2
        %v1635 = vrot.slane %v1488, 2
        %v1636 = vsel %vm933, %v1634, %v1635
        %v1637 = vrot.slane %v1489, 2
        %v1638 = vrot.slane %v1490, 2
        %v1639 = vsel %vm933, %v1637, %v1638
        %v1640 = vrot.slane %v1491, 2
        %v1641 = vrot.slane %v1492, 2
        %v1642 = vsel %vm933, %v1640, %v1641
        %v1643 = vrot.slane %v1493, 2
        %v1644 = vrot.slane %v1494, 2
        %v1645 = vsel %vm933, %v1643, %v1644
        %v1646 = vrot.slane %v1495, 2
        %v1647 = vrot.slane %v1496, 2
        %v1648 = vsel %vm933, %v1646, %v1647
        %v1649 = vrot.slane %v1497, 2
        %v1650 = vrot.slane %v1498, 2
        %v1651 = vsel %vm933, %v1649, %v1650
        %v1652 = vrot.slane %v1499, 2
        %v1653 = vrot.slane %v1500, 2
        %v1654 = vsel %vm933, %v1652, %v1653
        %v1655 = vrot.slane %v1501, 2
        %v1656 = vrot.slane %v1502, 2
        %v1657 = vsel %vm933, %v1655, %v1656
        %v1658 = vrot.slane %v1503, 2
        %v1659 = vrot.slane %v1504, 2
        %v1660 = vsel %vm933, %v1658, %v1659
        %v1661 = vrot.slane %v1505, 2
        %v1662 = vrot.slane %v1506, 2
        %v1663 = vsel %vm933, %v1661, %v1662
        %v1664 = vrot.slane %v1507, 2
        %v1665 = vrot.slane %v1508, 2
        %v1666 = vsel %vm933, %v1664, %v1665
        %v1667 = vrot.slane %v1509, 2
        %v1668 = vrot.slane %v1510, 2
        %v1669 = vsel %vm933, %v1667, %v1668
        %v1670 = vrot.slane %v1511, 2
        %v1671 = vrot.slane %v1512, 2
        %v1672 = vsel %vm933, %v1670, %v1671
        %v1705 = vadd.f32 %v1416, %v1579
        %v1706 = vadd.f32 %v1417, %v1582
        %v1707 = vadd.f32 %v1418, %v1585
        %v1708 = vadd.f32 %v1419, %v1588
        %v1709 = vadd.f32 %v1420, %v1591
        %v1710 = vadd.f32 %v1421, %v1594
        %v1711 = vadd.f32 %v1422, %v1597
        %v1712 = vadd.f32 %v1423, %v1600
        %v1713 = vadd.f32 %v1424, %v1603
        %v1714 = vadd.f32 %v1425, %v1606
        %v1715 = vadd.f32 %v1426, %v1609
        %v1716 = vadd.f32 %v1427, %v1612
        %v1717 = vadd.f32 %v1428, %v1615
        %v1718 = vadd.f32 %v1429, %v1618
        %v1719 = vadd.f32 %v1430, %v1621
        %v1720 = vadd.f32 %v1431, %v1624
        %v1721 = vadd.f32 %v1432, %v1627
        %v1722 = vadd.f32 %v1433, %v1630
        %v1723 = vadd.f32 %v1434, %v1633
        %v1724 = vadd.f32 %v1435, %v1636
        %v1725 = vadd.f32 %v1436, %v1639
        %v1726 = vadd.f32 %v1437, %v1642
        %v1727 = vadd.f32 %v1438, %v1645
        %v1728 = vadd.f32 %v1439, %v1648
        %v1729 = vadd.f32 %v1440, %v1651
        %v1730 = vadd.f32 %v1441, %v1654
        %v1731 = vadd.f32 %v1442, %v1657
        %v1732 = vadd.f32 %v1443, %v1660
        %v1733 = vadd.f32 %v1444, %v1663
        %v1734 = vadd.f32 %v1445, %v1666
        %v1735 = vadd.f32 %v1446, %v1669
        %v1736 = vadd.f32 %v1447, %v1672
        %v1737 = vperm.slane %v477, 6
        %v1738 = vmul.f32 %v361, %v1737
        %v1739 = vmul.f32 %v363, %v1737
        %v1740 = vmul.f32 %v365, %v1737
        %v1741 = vmul.f32 %v367, %v1737
        %v1742 = vmul.f32 %v369, %v1737
        %v1743 = vmul.f32 %v371, %v1737
        %v1744 = vmul.f32 %v373, %v1737
        %v1745 = vmul.f32 %v375, %v1737
        %v1746 = vmul.f32 %v381, %v1737
        %v1747 = vmul.f32 %v383, %v1737
        %v1748 = vmul.f32 %v385, %v1737
        %v1749 = vmul.f32 %v387, %v1737
        %v1750 = vmul.f32 %v389, %v1737
        %v1751 = vmul.f32 %v391, %v1737
        %v1752 = vmul.f32 %v393, %v1737
        %v1753 = vmul.f32 %v395, %v1737
        %v1754 = vmul.f32 %v401, %v1737
        %v1755 = vmul.f32 %v403, %v1737
        %v1756 = vmul.f32 %v405, %v1737
        %v1757 = vmul.f32 %v407, %v1737
        %v1758 = vmul.f32 %v409, %v1737
        %v1759 = vmul.f32 %v411, %v1737
        %v1760 = vmul.f32 %v413, %v1737
        %v1761 = vmul.f32 %v415, %v1737
        %v1762 = vmul.f32 %v421, %v1737
        %v1763 = vmul.f32 %v423, %v1737
        %v1764 = vmul.f32 %v425, %v1737
        %v1765 = vmul.f32 %v427, %v1737
        %v1766 = vmul.f32 %v429, %v1737
        %v1767 = vmul.f32 %v431, %v1737
        %v1768 = vmul.f32 %v433, %v1737
        %v1769 = vmul.f32 %v435, %v1737
        %v1770 = vadd.f32 %v1705, %v1738
        %v1771 = vadd.f32 %v1706, %v1739
        %v1772 = vadd.f32 %v1707, %v1740
        %v1773 = vadd.f32 %v1708, %v1741
        %v1774 = vadd.f32 %v1709, %v1742
        %v1775 = vadd.f32 %v1710, %v1743
        %v1776 = vadd.f32 %v1711, %v1744
        %v1777 = vadd.f32 %v1712, %v1745
        %v1778 = vadd.f32 %v1713, %v1746
        %v1779 = vadd.f32 %v1714, %v1747
        %v1780 = vadd.f32 %v1715, %v1748
        %v1781 = vadd.f32 %v1716, %v1749
        %v1782 = vadd.f32 %v1717, %v1750
        %v1783 = vadd.f32 %v1718, %v1751
        %v1784 = vadd.f32 %v1719, %v1752
        %v1785 = vadd.f32 %v1720, %v1753
        %v1786 = vadd.f32 %v1721, %v1754
        %v1787 = vadd.f32 %v1722, %v1755
        %v1788 = vadd.f32 %v1723, %v1756
        %v1789 = vadd.f32 %v1724, %v1757
        %v1790 = vadd.f32 %v1725, %v1758
        %v1791 = vadd.f32 %v1726, %v1759
        %v1792 = vadd.f32 %v1727, %v1760
        %v1793 = vadd.f32 %v1728, %v1761
        %v1794 = vadd.f32 %v1729, %v1762
        %v1795 = vadd.f32 %v1730, %v1763
        %v1796 = vadd.f32 %v1731, %v1764
        %v1797 = vadd.f32 %v1732, %v1765
        %v1798 = vadd.f32 %v1733, %v1766
        %v1799 = vadd.f32 %v1734, %v1767
        %v1800 = vadd.f32 %v1735, %v1768
        %v1801 = vadd.f32 %v1736, %v1769
        %v1802 = vperm.slane %v477, 7
        %v1803 = vmul.f32 %v361, %v1802
        %v1804 = vmul.f32 %v362, %v1802
        %v1805 = vmul.f32 %v363, %v1802
        %v1806 = vmul.f32 %v364, %v1802
        %v1807 = vmul.f32 %v365, %v1802
        %v1808 = vmul.f32 %v366, %v1802
        %v1809 = vmul.f32 %v367, %v1802
        %v1810 = vmul.f32 %v368, %v1802
        %v1811 = vmul.f32 %v369, %v1802
        %v1812 = vmul.f32 %v370, %v1802
        %v1813 = vmul.f32 %v371, %v1802
        %v1814 = vmul.f32 %v372, %v1802
        %v1815 = vmul.f32 %v373, %v1802
        %v1816 = vmul.f32 %v374, %v1802
        %v1817 = vmul.f32 %v375, %v1802
        %v1818 = vmul.f32 %v376, %v1802
        %v1819 = vmul.f32 %v381, %v1802
        %v1820 = vmul.f32 %v382, %v1802
        %v1821 = vmul.f32 %v383, %v1802
        %v1822 = vmul.f32 %v384, %v1802
        %v1823 = vmul.f32 %v385, %v1802
        %v1824 = vmul.f32 %v386, %v1802
        %v1825 = vmul.f32 %v387, %v1802
        %v1826 = vmul.f32 %v388, %v1802
        %v1827 = vmul.f32 %v389, %v1802
        %v1828 = vmul.f32 %v390, %v1802
        %v1829 = vmul.f32 %v391, %v1802
        %v1830 = vmul.f32 %v392, %v1802
        %v1831 = vmul.f32 %v393, %v1802
        %v1832 = vmul.f32 %v394, %v1802
        %v1833 = vmul.f32 %v395, %v1802
        %v1834 = vmul.f32 %v396, %v1802
        %v1835 = vmul.f32 %v401, %v1802
        %v1836 = vmul.f32 %v402, %v1802
        %v1837 = vmul.f32 %v403, %v1802
        %v1838 = vmul.f32 %v404, %v1802
        %v1839 = vmul.f32 %v405, %v1802
        %v1840 = vmul.f32 %v406, %v1802
        %v1841 = vmul.f32 %v407, %v1802
        %v1842 = vmul.f32 %v408, %v1802
        %v1843 = vmul.f32 %v409, %v1802
        %v1844 = vmul.f32 %v410, %v1802
        %v1845 = vmul.f32 %v411, %v1802
        %v1846 = vmul.f32 %v412, %v1802
        %v1847 = vmul.f32 %v413, %v1802
        %v1848 = vmul.f32 %v414, %v1802
        %v1849 = vmul.f32 %v415, %v1802
        %v1850 = vmul.f32 %v416, %v1802
        %v1851 = vmul.f32 %v421, %v1802
        %v1852 = vmul.f32 %v422, %v1802
        %v1853 = vmul.f32 %v423, %v1802
        %v1854 = vmul.f32 %v424, %v1802
        %v1855 = vmul.f32 %v425, %v1802
        %v1856 = vmul.f32 %v426, %v1802
        %v1857 = vmul.f32 %v427, %v1802
        %v1858 = vmul.f32 %v428, %v1802
        %v1859 = vmul.f32 %v429, %v1802
        %v1860 = vmul.f32 %v430, %v1802
        %v1861 = vmul.f32 %v431, %v1802
        %v1862 = vmul.f32 %v432, %v1802
        %v1863 = vmul.f32 %v433, %v1802
        %v1864 = vmul.f32 %v434, %v1802
        %v1865 = vmul.f32 %v435, %v1802
        %v1866 = vmul.f32 %v436, %v1802
        %v1931 = vrot.slane %v1803, 1
        %v1932 = vrot.slane %v1804, 1
        %v1933 = vsel %vm643, %v1931, %v1932
        %v1934 = vrot.slane %v1805, 1
        %v1935 = vrot.slane %v1806, 1
        %v1936 = vsel %vm643, %v1934, %v1935
        %v1937 = vrot.slane %v1807, 1
        %v1938 = vrot.slane %v1808, 1
        %v1939 = vsel %vm643, %v1937, %v1938
        %v1940 = vrot.slane %v1809, 1
        %v1941 = vrot.slane %v1810, 1
        %v1942 = vsel %vm643, %v1940, %v1941
        %v1943 = vrot.slane %v1811, 1
        %v1944 = vrot.slane %v1812, 1
        %v1945 = vsel %vm643, %v1943, %v1944
        %v1946 = vrot.slane %v1813, 1
        %v1947 = vrot.slane %v1814, 1
        %v1948 = vsel %vm643, %v1946, %v1947
        %v1949 = vrot.slane %v1815, 1
        %v1950 = vrot.slane %v1816, 1
        %v1951 = vsel %vm643, %v1949, %v1950
        %v1952 = vrot.slane %v1817, 1
        %v1953 = vrot.slane %v1818, 1
        %v1954 = vsel %vm643, %v1952, %v1953
        %v1955 = vrot.slane %v1819, 1
        %v1956 = vrot.slane %v1820, 1
        %v1957 = vsel %vm643, %v1955, %v1956
        %v1958 = vrot.slane %v1821, 1
        %v1959 = vrot.slane %v1822, 1
        %v1960 = vsel %vm643, %v1958, %v1959
        %v1961 = vrot.slane %v1823, 1
        %v1962 = vrot.slane %v1824, 1
        %v1963 = vsel %vm643, %v1961, %v1962
        %v1964 = vrot.slane %v1825, 1
        %v1965 = vrot.slane %v1826, 1
        %v1966 = vsel %vm643, %v1964, %v1965
        %v1967 = vrot.slane %v1827, 1
        %v1968 = vrot.slane %v1828, 1
        %v1969 = vsel %vm643, %v1967, %v1968
        %v1970 = vrot.slane %v1829, 1
        %v1971 = vrot.slane %v1830, 1
        %v1972 = vsel %vm643, %v1970, %v1971
        %v1973 = vrot.slane %v1831, 1
        %v1974 = vrot.slane %v1832, 1
        %v1975 = vsel %vm643, %v1973, %v1974
        %v1976 = vrot.slane %v1833, 1
        %v1977 = vrot.slane %v1834, 1
        %v1978 = vsel %vm643, %v1976, %v1977
        %v1979 = vrot.slane %v1835, 1
        %v1980 = vrot.slane %v1836, 1
        %v1981 = vsel %vm643, %v1979, %v1980
        %v1982 = vrot.slane %v1837, 1
        %v1983 = vrot.slane %v1838, 1
        %v1984 = vsel %vm643, %v1982, %v1983
        %v1985 = vrot.slane %v1839, 1
        %v1986 = vrot.slane %v1840, 1
        %v1987 = vsel %vm643, %v1985, %v1986
        %v1988 = vrot.slane %v1841, 1
        %v1989 = vrot.slane %v1842, 1
        %v1990 = vsel %vm643, %v1988, %v1989
        %v1991 = vrot.slane %v1843, 1
        %v1992 = vrot.slane %v1844, 1
        %v1993 = vsel %vm643, %v1991, %v1992
        %v1994 = vrot.slane %v1845, 1
        %v1995 = vrot.slane %v1846, 1
        %v1996 = vsel %vm643, %v1994, %v1995
        %v1997 = vrot.slane %v1847, 1
        %v1998 = vrot.slane %v1848, 1
        %v1999 = vsel %vm643, %v1997, %v1998
        %v2000 = vrot.slane %v1849, 1
        %v2001 = vrot.slane %v1850, 1
        %v2002 = vsel %vm643, %v2000, %v2001
        %v2003 = vrot.slane %v1851, 1
        %v2004 = vrot.slane %v1852, 1
        %v2005 = vsel %vm643, %v2003, %v2004
        %v2006 = vrot.slane %v1853, 1
        %v2007 = vrot.slane %v1854, 1
        %v2008 = vsel %vm643, %v2006, %v2007
        %v2009 = vrot.slane %v1855, 1
        %v2010 = vrot.slane %v1856, 1
        %v2011 = vsel %vm643, %v2009, %v2010
        %v2012 = vrot.slane %v1857, 1
        %v2013 = vrot.slane %v1858, 1
        %v2014 = vsel %vm643, %v2012, %v2013
        %v2015 = vrot.slane %v1859, 1
        %v2016 = vrot.slane %v1860, 1
        %v2017 = vsel %vm643, %v2015, %v2016
        %v2018 = vrot.slane %v1861, 1
        %v2019 = vrot.slane %v1862, 1
        %v2020 = vsel %vm643, %v2018, %v2019
        %v2021 = vrot.slane %v1863, 1
        %v2022 = vrot.slane %v1864, 1
        %v2023 = vsel %vm643, %v2021, %v2022
        %v2024 = vrot.slane %v1865, 1
        %v2025 = vrot.slane %v1866, 1
        %v2026 = vsel %vm643, %v2024, %v2025
        %v2059 = vadd.f32 %v1770, %v1933
        %v2060 = vadd.f32 %v1771, %v1936
        %v2061 = vadd.f32 %v1772, %v1939
        %v2062 = vadd.f32 %v1773, %v1942
        %v2063 = vadd.f32 %v1774, %v1945
        %v2064 = vadd.f32 %v1775, %v1948
        %v2065 = vadd.f32 %v1776, %v1951
        %v2066 = vadd.f32 %v1777, %v1954
        %v2067 = vadd.f32 %v1778, %v1957
        %v2068 = vadd.f32 %v1779, %v1960
        %v2069 = vadd.f32 %v1780, %v1963
        %v2070 = vadd.f32 %v1781, %v1966
        %v2071 = vadd.f32 %v1782, %v1969
        %v2072 = vadd.f32 %v1783, %v1972
        %v2073 = vadd.f32 %v1784, %v1975
        %v2074 = vadd.f32 %v1785, %v1978
        %v2075 = vadd.f32 %v1786, %v1981
        %v2076 = vadd.f32 %v1787, %v1984
        %v2077 = vadd.f32 %v1788, %v1987
        %v2078 = vadd.f32 %v1789, %v1990
        %v2079 = vadd.f32 %v1790, %v1993
        %v2080 = vadd.f32 %v1791, %v1996
        %v2081 = vadd.f32 %v1792, %v1999
        %v2082 = vadd.f32 %v1793, %v2002
        %v2083 = vadd.f32 %v1794, %v2005
        %v2084 = vadd.f32 %v1795, %v2008
        %v2085 = vadd.f32 %v1796, %v2011
        %v2086 = vadd.f32 %v1797, %v2014
        %v2087 = vadd.f32 %v1798, %v2017
        %v2088 = vadd.f32 %v1799, %v2020
        %v2089 = vadd.f32 %v1800, %v2023
        %v2090 = vadd.f32 %v1801, %v2026
        %v2091 = vperm.slane %v478, 0
        %v2092 = vmul.f32 %v361, %v2091
        %v2093 = vmul.f32 %v362, %v2091
        %v2094 = vmul.f32 %v363, %v2091
        %v2095 = vmul.f32 %v364, %v2091
        %v2096 = vmul.f32 %v365, %v2091
        %v2097 = vmul.f32 %v366, %v2091
        %v2098 = vmul.f32 %v367, %v2091
        %v2099 = vmul.f32 %v368, %v2091
        %v2100 = vmul.f32 %v369, %v2091
        %v2101 = vmul.f32 %v370, %v2091
        %v2102 = vmul.f32 %v371, %v2091
        %v2103 = vmul.f32 %v372, %v2091
        %v2104 = vmul.f32 %v373, %v2091
        %v2105 = vmul.f32 %v374, %v2091
        %v2106 = vmul.f32 %v375, %v2091
        %v2107 = vmul.f32 %v376, %v2091
        %v2108 = vmul.f32 %v381, %v2091
        %v2109 = vmul.f32 %v382, %v2091
        %v2110 = vmul.f32 %v383, %v2091
        %v2111 = vmul.f32 %v384, %v2091
        %v2112 = vmul.f32 %v385, %v2091
        %v2113 = vmul.f32 %v386, %v2091
        %v2114 = vmul.f32 %v387, %v2091
        %v2115 = vmul.f32 %v388, %v2091
        %v2116 = vmul.f32 %v389, %v2091
        %v2117 = vmul.f32 %v390, %v2091
        %v2118 = vmul.f32 %v391, %v2091
        %v2119 = vmul.f32 %v392, %v2091
        %v2120 = vmul.f32 %v393, %v2091
        %v2121 = vmul.f32 %v394, %v2091
        %v2122 = vmul.f32 %v395, %v2091
        %v2123 = vmul.f32 %v396, %v2091
        %v2124 = vmul.f32 %v401, %v2091
        %v2125 = vmul.f32 %v402, %v2091
        %v2126 = vmul.f32 %v403, %v2091
        %v2127 = vmul.f32 %v404, %v2091
        %v2128 = vmul.f32 %v405, %v2091
        %v2129 = vmul.f32 %v406, %v2091
        %v2130 = vmul.f32 %v407, %v2091
        %v2131 = vmul.f32 %v408, %v2091
        %v2132 = vmul.f32 %v409, %v2091
        %v2133 = vmul.f32 %v410, %v2091
        %v2134 = vmul.f32 %v411, %v2091
        %v2135 = vmul.f32 %v412, %v2091
        %v2136 = vmul.f32 %v413, %v2091
        %v2137 = vmul.f32 %v414, %v2091
        %v2138 = vmul.f32 %v415, %v2091
        %v2139 = vmul.f32 %v416, %v2091
        %v2140 = vmul.f32 %v421, %v2091
        %v2141 = vmul.f32 %v422, %v2091
        %v2142 = vmul.f32 %v423, %v2091
        %v2143 = vmul.f32 %v424, %v2091
        %v2144 = vmul.f32 %v425, %v2091
        %v2145 = vmul.f32 %v426, %v2091
        %v2146 = vmul.f32 %v427, %v2091
        %v2147 = vmul.f32 %v428, %v2091
        %v2148 = vmul.f32 %v429, %v2091
        %v2149 = vmul.f32 %v430, %v2091
        %v2150 = vmul.f32 %v431, %v2091
        %v2151 = vmul.f32 %v432, %v2091
        %v2152 = vmul.f32 %v433, %v2091
        %v2153 = vmul.f32 %v434, %v2091
        %v2154 = vmul.f32 %v435, %v2091
        %v2155 = vmul.f32 %v436, %v2091
        %v2220 = vrot.slane %v2092, 2
        %v2221 = vrot.slane %v2093, 2
        %v2222 = vsel %vm933, %v2220, %v2221
        %v2223 = vrot.slane %v2094, 2
        %v2224 = vrot.slane %v2095, 2
        %v2225 = vsel %vm933, %v2223, %v2224
        %v2226 = vrot.slane %v2096, 2
        %v2227 = vrot.slane %v2097, 2
        %v2228 = vsel %vm933, %v2226, %v2227
        %v2229 = vrot.slane %v2098, 2
        %v2230 = vrot.slane %v2099, 2
        %v2231 = vsel %vm933, %v2229, %v2230
        %v2232 = vrot.slane %v2100, 2
        %v2233 = vrot.slane %v2101, 2
        %v2234 = vsel %vm933, %v2232, %v2233
        %v2235 = vrot.slane %v2102, 2
        %v2236 = vrot.slane %v2103, 2
        %v2237 = vsel %vm933, %v2235, %v2236
        %v2238 = vrot.slane %v2104, 2
        %v2239 = vrot.slane %v2105, 2
        %v2240 = vsel %vm933, %v2238, %v2239
        %v2241 = vrot.slane %v2106, 2
        %v2242 = vrot.slane %v2107, 2
        %v2243 = vsel %vm933, %v2241, %v2242
        %v2244 = vrot.slane %v2108, 2
        %v2245 = vrot.slane %v2109, 2
        %v2246 = vsel %vm933, %v2244, %v2245
        %v2247 = vrot.slane %v2110, 2
        %v2248 = vrot.slane %v2111, 2
        %v2249 = vsel %vm933, %v2247, %v2248
        %v2250 = vrot.slane %v2112, 2
        %v2251 = vrot.slane %v2113, 2
        %v2252 = vsel %vm933, %v2250, %v2251
        %v2253 = vrot.slane %v2114, 2
        %v2254 = vrot.slane %v2115, 2
        %v2255 = vsel %vm933, %v2253, %v2254
        %v2256 = vrot.slane %v2116, 2
        %v2257 = vrot.slane %v2117, 2
        %v2258 = vsel %vm933, %v2256, %v2257
        %v2259 = vrot.slane %v2118, 2
        %v2260 = vrot.slane %v2119, 2
        %v2261 = vsel %vm933, %v2259, %v2260
        %v2262 = vrot.slane %v2120, 2
        %v2263 = vrot.slane %v2121, 2
        %v2264 = vsel %vm933, %v2262, %v2263
        %v2265 = vrot.slane %v2122, 2
        %v2266 = vrot.slane %v2123, 2
        %v2267 = vsel %vm933, %v2265, %v2266
        %v2268 = vrot.slane %v2124, 2
        %v2269 = vrot.slane %v2125, 2
        %v2270 = vsel %vm933, %v2268, %v2269
        %v2271 = vrot.slane %v2126, 2
        %v2272 = vrot.slane %v2127, 2
        %v2273 = vsel %vm933, %v2271, %v2272
        %v2274 = vrot.slane %v2128, 2
        %v2275 = vrot.slane %v2129, 2
        %v2276 = vsel %vm933, %v2274, %v2275
        %v2277 = vrot.slane %v2130, 2
        %v2278 = vrot.slane %v2131, 2
        %v2279 = vsel %vm933, %v2277, %v2278
        %v2280 = vrot.slane %v2132, 2
        %v2281 = vrot.slane %v2133, 2
        %v2282 = vsel %vm933, %v2280, %v2281
        %v2283 = vrot.slane %v2134, 2
        %v2284 = vrot.slane %v2135, 2
        %v2285 = vsel %vm933, %v2283, %v2284
        %v2286 = vrot.slane %v2136, 2
        %v2287 = vrot.slane %v2137, 2
        %v2288 = vsel %vm933, %v2286, %v2287
        %v2289 = vrot.slane %v2138, 2
        %v2290 = vrot.slane %v2139, 2
        %v2291 = vsel %vm933, %v2289, %v2290
        %v2292 = vrot.slane %v2140, 2
        %v2293 = vrot.slane %v2141, 2
        %v2294 = vsel %vm933, %v2292, %v2293
        %v2295 = vrot.slane %v2142, 2
        %v2296 = vrot.slane %v2143, 2
        %v2297 = vsel %vm933, %v2295, %v2296
        %v2298 = vrot.slane %v2144, 2
        %v2299 = vrot.slane %v2145, 2
        %v2300 = vsel %vm933, %v2298, %v2299
        %v2301 = vrot.slane %v2146, 2
        %v2302 = vrot.slane %v2147, 2
        %v2303 = vsel %vm933, %v2301, %v2302
        %v2304 = vrot.slane %v2148, 2
        %v2305 = vrot.slane %v2149, 2
        %v2306 = vsel %vm933, %v2304, %v2305
        %v2307 = vrot.slane %v2150, 2
        %v2308 = vrot.slane %v2151, 2
        %v2309 = vsel %vm933, %v2307, %v2308
        %v2310 = vrot.slane %v2152, 2
        %v2311 = vrot.slane %v2153, 2
        %v2312 = vsel %vm933, %v2310, %v2311
        %v2313 = vrot.slane %v2154, 2
        %v2314 = vrot.slane %v2155, 2
        %v2315 = vsel %vm933, %v2313, %v2314
        %v2348 = vadd.f32 %v2059, %v2222
        %v2349 = vadd.f32 %v2060, %v2225
        %v2350 = vadd.f32 %v2061, %v2228
        %v2351 = vadd.f32 %v2062, %v2231
        %v2352 = vadd.f32 %v2063, %v2234
        %v2353 = vadd.f32 %v2064, %v2237
        %v2354 = vadd.f32 %v2065, %v2240
        %v2355 = vadd.f32 %v2066, %v2243
        %v2356 = vadd.f32 %v2067, %v2246
        %v2357 = vadd.f32 %v2068, %v2249
        %v2358 = vadd.f32 %v2069, %v2252
        %v2359 = vadd.f32 %v2070, %v2255
        %v2360 = vadd.f32 %v2071, %v2258
        %v2361 = vadd.f32 %v2072, %v2261
        %v2362 = vadd.f32 %v2073, %v2264
        %v2363 = vadd.f32 %v2074, %v2267
        %v2364 = vadd.f32 %v2075, %v2270
        %v2365 = vadd.f32 %v2076, %v2273
        %v2366 = vadd.f32 %v2077, %v2276
        %v2367 = vadd.f32 %v2078, %v2279
        %v2368 = vadd.f32 %v2079, %v2282
        %v2369 = vadd.f32 %v2080, %v2285
        %v2370 = vadd.f32 %v2081, %v2288
        %v2371 = vadd.f32 %v2082, %v2291
        %v2372 = vadd.f32 %v2083, %v2294
        %v2373 = vadd.f32 %v2084, %v2297
        %v2374 = vadd.f32 %v2085, %v2300
        %v2375 = vadd.f32 %v2086, %v2303
        %v2376 = vadd.f32 %v2087, %v2306
        %v2377 = vadd.f32 %v2088, %v2309
        %v2378 = vadd.f32 %v2089, %v2312
        %v2379 = vadd.f32 %v2090, %v2315
        %v2380 = vperm.slane %v478, 1
        %v2381 = vmul.f32 %v377, %v2380
        %v2382 = vmul.f32 %v379, %v2380
        %v2383 = vmul.f32 %v381, %v2380
        %v2384 = vmul.f32 %v383, %v2380
        %v2385 = vmul.f32 %v385, %v2380
        %v2386 = vmul.f32 %v387, %v2380
        %v2387 = vmul.f32 %v389, %v2380
        %v2388 = vmul.f32 %v391, %v2380
        %v2389 = vmul.f32 %v397, %v2380
        %v2390 = vmul.f32 %v399, %v2380
        %v2391 = vmul.f32 %v401, %v2380
        %v2392 = vmul.f32 %v403, %v2380
        %v2393 = vmul.f32 %v405, %v2380
        %v2394 = vmul.f32 %v407, %v2380
        %v2395 = vmul.f32 %v409, %v2380
        %v2396 = vmul.f32 %v411, %v2380
        %v2397 = vmul.f32 %v417, %v2380
        %v2398 = vmul.f32 %v419, %v2380
        %v2399 = vmul.f32 %v421, %v2380
        %v2400 = vmul.f32 %v423, %v2380
        %v2401 = vmul.f32 %v425, %v2380
        %v2402 = vmul.f32 %v427, %v2380
        %v2403 = vmul.f32 %v429, %v2380
        %v2404 = vmul.f32 %v431, %v2380
        %v2405 = vmul.f32 %v437, %v2380
        %v2406 = vmul.f32 %v439, %v2380
        %v2407 = vmul.f32 %v441, %v2380
        %v2408 = vmul.f32 %v443, %v2380
        %v2409 = vmul.f32 %v445, %v2380
        %v2410 = vmul.f32 %v447, %v2380
        %v2411 = vmul.f32 %v449, %v2380
        %v2412 = vmul.f32 %v451, %v2380
        %v2413 = vadd.f32 %v2348, %v2381
        %v2414 = vadd.f32 %v2349, %v2382
        %v2415 = vadd.f32 %v2350, %v2383
        %v2416 = vadd.f32 %v2351, %v2384
        %v2417 = vadd.f32 %v2352, %v2385
        %v2418 = vadd.f32 %v2353, %v2386
        %v2419 = vadd.f32 %v2354, %v2387
        %v2420 = vadd.f32 %v2355, %v2388
        %v2421 = vadd.f32 %v2356, %v2389
        %v2422 = vadd.f32 %v2357, %v2390
        %v2423 = vadd.f32 %v2358, %v2391
        %v2424 = vadd.f32 %v2359, %v2392
        %v2425 = vadd.f32 %v2360, %v2393
        %v2426 = vadd.f32 %v2361, %v2394
        %v2427 = vadd.f32 %v2362, %v2395
        %v2428 = vadd.f32 %v2363, %v2396
        %v2429 = vadd.f32 %v2364, %v2397
        %v2430 = vadd.f32 %v2365, %v2398
        %v2431 = vadd.f32 %v2366, %v2399
        %v2432 = vadd.f32 %v2367, %v2400
        %v2433 = vadd.f32 %v2368, %v2401
        %v2434 = vadd.f32 %v2369, %v2402
        %v2435 = vadd.f32 %v2370, %v2403
        %v2436 = vadd.f32 %v2371, %v2404
        %v2437 = vadd.f32 %v2372, %v2405
        %v2438 = vadd.f32 %v2373, %v2406
        %v2439 = vadd.f32 %v2374, %v2407
        %v2440 = vadd.f32 %v2375, %v2408
        %v2441 = vadd.f32 %v2376, %v2409
        %v2442 = vadd.f32 %v2377, %v2410
        %v2443 = vadd.f32 %v2378, %v2411
        %v2444 = vadd.f32 %v2379, %v2412
        %v2445 = vperm.slane %v478, 2
        %v2446 = vmul.f32 %v377, %v2445
        %v2447 = vmul.f32 %v378, %v2445
        %v2448 = vmul.f32 %v379, %v2445
        %v2449 = vmul.f32 %v380, %v2445
        %v2450 = vmul.f32 %v381, %v2445
        %v2451 = vmul.f32 %v382, %v2445
        %v2452 = vmul.f32 %v383, %v2445
        %v2453 = vmul.f32 %v384, %v2445
        %v2454 = vmul.f32 %v385, %v2445
        %v2455 = vmul.f32 %v386, %v2445
        %v2456 = vmul.f32 %v387, %v2445
        %v2457 = vmul.f32 %v388, %v2445
        %v2458 = vmul.f32 %v389, %v2445
        %v2459 = vmul.f32 %v390, %v2445
        %v2460 = vmul.f32 %v391, %v2445
        %v2461 = vmul.f32 %v392, %v2445
        %v2462 = vmul.f32 %v397, %v2445
        %v2463 = vmul.f32 %v398, %v2445
        %v2464 = vmul.f32 %v399, %v2445
        %v2465 = vmul.f32 %v400, %v2445
        %v2466 = vmul.f32 %v401, %v2445
        %v2467 = vmul.f32 %v402, %v2445
        %v2468 = vmul.f32 %v403, %v2445
        %v2469 = vmul.f32 %v404, %v2445
        %v2470 = vmul.f32 %v405, %v2445
        %v2471 = vmul.f32 %v406, %v2445
        %v2472 = vmul.f32 %v407, %v2445
        %v2473 = vmul.f32 %v408, %v2445
        %v2474 = vmul.f32 %v409, %v2445
        %v2475 = vmul.f32 %v410, %v2445
        %v2476 = vmul.f32 %v411, %v2445
        %v2477 = vmul.f32 %v412, %v2445
        %v2478 = vmul.f32 %v417, %v2445
        %v2479 = vmul.f32 %v418, %v2445
        %v2480 = vmul.f32 %v419, %v2445
        %v2481 = vmul.f32 %v420, %v2445
        %v2482 = vmul.f32 %v421, %v2445
        %v2483 = vmul.f32 %v422, %v2445
        %v2484 = vmul.f32 %v423, %v2445
        %v2485 = vmul.f32 %v424, %v2445
        %v2486 = vmul.f32 %v425, %v2445
        %v2487 = vmul.f32 %v426, %v2445
        %v2488 = vmul.f32 %v427, %v2445
        %v2489 = vmul.f32 %v428, %v2445
        %v2490 = vmul.f32 %v429, %v2445
        %v2491 = vmul.f32 %v430, %v2445
        %v2492 = vmul.f32 %v431, %v2445
        %v2493 = vmul.f32 %v432, %v2445
        %v2494 = vmul.f32 %v437, %v2445
        %v2495 = vmul.f32 %v438, %v2445
        %v2496 = vmul.f32 %v439, %v2445
        %v2497 = vmul.f32 %v440, %v2445
        %v2498 = vmul.f32 %v441, %v2445
        %v2499 = vmul.f32 %v442, %v2445
        %v2500 = vmul.f32 %v443, %v2445
        %v2501 = vmul.f32 %v444, %v2445
        %v2502 = vmul.f32 %v445, %v2445
        %v2503 = vmul.f32 %v446, %v2445
        %v2504 = vmul.f32 %v447, %v2445
        %v2505 = vmul.f32 %v448, %v2445
        %v2506 = vmul.f32 %v449, %v2445
        %v2507 = vmul.f32 %v450, %v2445
        %v2508 = vmul.f32 %v451, %v2445
        %v2509 = vmul.f32 %v452, %v2445
        %v2574 = vrot.slane %v2446, 1
        %v2575 = vrot.slane %v2447, 1
        %v2576 = vsel %vm643, %v2574, %v2575
        %v2577 = vrot.slane %v2448, 1
        %v2578 = vrot.slane %v2449, 1
        %v2579 = vsel %vm643, %v2577, %v2578
        %v2580 = vrot.slane %v2450, 1
        %v2581 = vrot.slane %v2451, 1
        %v2582 = vsel %vm643, %v2580, %v2581
        %v2583 = vrot.slane %v2452, 1
        %v2584 = vrot.slane %v2453, 1
        %v2585 = vsel %vm643, %v2583, %v2584
        %v2586 = vrot.slane %v2454, 1
        %v2587 = vrot.slane %v2455, 1
        %v2588 = vsel %vm643, %v2586, %v2587
        %v2589 = vrot.slane %v2456, 1
        %v2590 = vrot.slane %v2457, 1
        %v2591 = vsel %vm643, %v2589, %v2590
        %v2592 = vrot.slane %v2458, 1
        %v2593 = vrot.slane %v2459, 1
        %v2594 = vsel %vm643, %v2592, %v2593
        %v2595 = vrot.slane %v2460, 1
        %v2596 = vrot.slane %v2461, 1
        %v2597 = vsel %vm643, %v2595, %v2596
        %v2598 = vrot.slane %v2462, 1
        %v2599 = vrot.slane %v2463, 1
        %v2600 = vsel %vm643, %v2598, %v2599
        %v2601 = vrot.slane %v2464, 1
        %v2602 = vrot.slane %v2465, 1
        %v2603 = vsel %vm643, %v2601, %v2602
        %v2604 = vrot.slane %v2466, 1
        %v2605 = vrot.slane %v2467, 1
        %v2606 = vsel %vm643, %v2604, %v2605
        %v2607 = vrot.slane %v2468, 1
        %v2608 = vrot.slane %v2469, 1
        %v2609 = vsel %vm643, %v2607, %v2608
        %v2610 = vrot.slane %v2470, 1
        %v2611 = vrot.slane %v2471, 1
        %v2612 = vsel %vm643, %v2610, %v2611
        %v2613 = vrot.slane %v2472, 1
        %v2614 = vrot.slane %v2473, 1
        %v2615 = vsel %vm643, %v2613, %v2614
        %v2616 = vrot.slane %v2474, 1
        %v2617 = vrot.slane %v2475, 1
        %v2618 = vsel %vm643, %v2616, %v2617
        %v2619 = vrot.slane %v2476, 1
        %v2620 = vrot.slane %v2477, 1
        %v2621 = vsel %vm643, %v2619, %v2620
        %v2622 = vrot.slane %v2478, 1
        %v2623 = vrot.slane %v2479, 1
        %v2624 = vsel %vm643, %v2622, %v2623
        %v2625 = vrot.slane %v2480, 1
        %v2626 = vrot.slane %v2481, 1
        %v2627 = vsel %vm643, %v2625, %v2626
        %v2628 = vrot.slane %v2482, 1
        %v2629 = vrot.slane %v2483, 1
        %v2630 = vsel %vm643, %v2628, %v2629
        %v2631 = vrot.slane %v2484, 1
        %v2632 = vrot.slane %v2485, 1
        %v2633 = vsel %vm643, %v2631, %v2632
        %v2634 = vrot.slane %v2486, 1
        %v2635 = vrot.slane %v2487, 1
        %v2636 = vsel %vm643, %v2634, %v2635
        %v2637 = vrot.slane %v2488, 1
        %v2638 = vrot.slane %v2489, 1
        %v2639 = vsel %vm643, %v2637, %v2638
        %v2640 = vrot.slane %v2490, 1
        %v2641 = vrot.slane %v2491, 1
        %v2642 = vsel %vm643, %v2640, %v2641
        %v2643 = vrot.slane %v2492, 1
        %v2644 = vrot.slane %v2493, 1
        %v2645 = vsel %vm643, %v2643, %v2644
        %v2646 = vrot.slane %v2494, 1
        %v2647 = vrot.slane %v2495, 1
        %v2648 = vsel %vm643, %v2646, %v2647
        %v2649 = vrot.slane %v2496, 1
        %v2650 = vrot.slane %v2497, 1
        %v2651 = vsel %vm643, %v2649, %v2650
        %v2652 = vrot.slane %v2498, 1
        %v2653 = vrot.slane %v2499, 1
        %v2654 = vsel %vm643, %v2652, %v2653
        %v2655 = vrot.slane %v2500, 1
        %v2656 = vrot.slane %v2501, 1
        %v2657 = vsel %vm643, %v2655, %v2656
        %v2658 = vrot.slane %v2502, 1
        %v2659 = vrot.slane %v2503, 1
        %v2660 = vsel %vm643, %v2658, %v2659
        %v2661 = vrot.slane %v2504, 1
        %v2662 = vrot.slane %v2505, 1
        %v2663 = vsel %vm643, %v2661, %v2662
        %v2664 = vrot.slane %v2506, 1
        %v2665 = vrot.slane %v2507, 1
        %v2666 = vsel %vm643, %v2664, %v2665
        %v2667 = vrot.slane %v2508, 1
        %v2668 = vrot.slane %v2509, 1
        %v2669 = vsel %vm643, %v2667, %v2668
        %v2702 = vadd.f32 %v2413, %v2576
        %v2703 = vadd.f32 %v2414, %v2579
        %v2704 = vadd.f32 %v2415, %v2582
        %v2705 = vadd.f32 %v2416, %v2585
        %v2706 = vadd.f32 %v2417, %v2588
        %v2707 = vadd.f32 %v2418, %v2591
        %v2708 = vadd.f32 %v2419, %v2594
        %v2709 = vadd.f32 %v2420, %v2597
        %v2710 = vadd.f32 %v2421, %v2600
        %v2711 = vadd.f32 %v2422, %v2603
        %v2712 = vadd.f32 %v2423, %v2606
        %v2713 = vadd.f32 %v2424, %v2609
        %v2714 = vadd.f32 %v2425, %v2612
        %v2715 = vadd.f32 %v2426, %v2615
        %v2716 = vadd.f32 %v2427, %v2618
        %v2717 = vadd.f32 %v2428, %v2621
        %v2718 = vadd.f32 %v2429, %v2624
        %v2719 = vadd.f32 %v2430, %v2627
        %v2720 = vadd.f32 %v2431, %v2630
        %v2721 = vadd.f32 %v2432, %v2633
        %v2722 = vadd.f32 %v2433, %v2636
        %v2723 = vadd.f32 %v2434, %v2639
        %v2724 = vadd.f32 %v2435, %v2642
        %v2725 = vadd.f32 %v2436, %v2645
        %v2726 = vadd.f32 %v2437, %v2648
        %v2727 = vadd.f32 %v2438, %v2651
        %v2728 = vadd.f32 %v2439, %v2654
        %v2729 = vadd.f32 %v2440, %v2657
        %v2730 = vadd.f32 %v2441, %v2660
        %v2731 = vadd.f32 %v2442, %v2663
        %v2732 = vadd.f32 %v2443, %v2666
        %v2733 = vadd.f32 %v2444, %v2669
        %v2734 = vperm.slane %v478, 3
        %v2735 = vmul.f32 %v377, %v2734
        %v2736 = vmul.f32 %v378, %v2734
        %v2737 = vmul.f32 %v379, %v2734
        %v2738 = vmul.f32 %v380, %v2734
        %v2739 = vmul.f32 %v381, %v2734
        %v2740 = vmul.f32 %v382, %v2734
        %v2741 = vmul.f32 %v383, %v2734
        %v2742 = vmul.f32 %v384, %v2734
        %v2743 = vmul.f32 %v385, %v2734
        %v2744 = vmul.f32 %v386, %v2734
        %v2745 = vmul.f32 %v387, %v2734
        %v2746 = vmul.f32 %v388, %v2734
        %v2747 = vmul.f32 %v389, %v2734
        %v2748 = vmul.f32 %v390, %v2734
        %v2749 = vmul.f32 %v391, %v2734
        %v2750 = vmul.f32 %v392, %v2734
        %v2751 = vmul.f32 %v397, %v2734
        %v2752 = vmul.f32 %v398, %v2734
        %v2753 = vmul.f32 %v399, %v2734
        %v2754 = vmul.f32 %v400, %v2734
        %v2755 = vmul.f32 %v401, %v2734
        %v2756 = vmul.f32 %v402, %v2734
        %v2757 = vmul.f32 %v403, %v2734
        %v2758 = vmul.f32 %v404, %v2734
        %v2759 = vmul.f32 %v405, %v2734
        %v2760 = vmul.f32 %v406, %v2734
        %v2761 = vmul.f32 %v407, %v2734
        %v2762 = vmul.f32 %v408, %v2734
        %v2763 = vmul.f32 %v409, %v2734
        %v2764 = vmul.f32 %v410, %v2734
        %v2765 = vmul.f32 %v411, %v2734
        %v2766 = vmul.f32 %v412, %v2734
        %v2767 = vmul.f32 %v417, %v2734
        %v2768 = vmul.f32 %v418, %v2734
        %v2769 = vmul.f32 %v419, %v2734
        %v2770 = vmul.f32 %v420, %v2734
        %v2771 = vmul.f32 %v421, %v2734
        %v2772 = vmul.f32 %v422, %v2734
        %v2773 = vmul.f32 %v423, %v2734
        %v2774 = vmul.f32 %v424, %v2734
        %v2775 = vmul.f32 %v425, %v2734
        %v2776 = vmul.f32 %v426, %v2734
        %v2777 = vmul.f32 %v427, %v2734
        %v2778 = vmul.f32 %v428, %v2734
        %v2779 = vmul.f32 %v429, %v2734
        %v2780 = vmul.f32 %v430, %v2734
        %v2781 = vmul.f32 %v431, %v2734
        %v2782 = vmul.f32 %v432, %v2734
        %v2783 = vmul.f32 %v437, %v2734
        %v2784 = vmul.f32 %v438, %v2734
        %v2785 = vmul.f32 %v439, %v2734
        %v2786 = vmul.f32 %v440, %v2734
        %v2787 = vmul.f32 %v441, %v2734
        %v2788 = vmul.f32 %v442, %v2734
        %v2789 = vmul.f32 %v443, %v2734
        %v2790 = vmul.f32 %v444, %v2734
        %v2791 = vmul.f32 %v445, %v2734
        %v2792 = vmul.f32 %v446, %v2734
        %v2793 = vmul.f32 %v447, %v2734
        %v2794 = vmul.f32 %v448, %v2734
        %v2795 = vmul.f32 %v449, %v2734
        %v2796 = vmul.f32 %v450, %v2734
        %v2797 = vmul.f32 %v451, %v2734
        %v2798 = vmul.f32 %v452, %v2734
        %v2863 = vrot.slane %v2735, 2
        %v2864 = vrot.slane %v2736, 2
        %v2865 = vsel %vm933, %v2863, %v2864
        %v2866 = vrot.slane %v2737, 2
        %v2867 = vrot.slane %v2738, 2
        %v2868 = vsel %vm933, %v2866, %v2867
        %v2869 = vrot.slane %v2739, 2
        %v2870 = vrot.slane %v2740, 2
        %v2871 = vsel %vm933, %v2869, %v2870
        %v2872 = vrot.slane %v2741, 2
        %v2873 = vrot.slane %v2742, 2
        %v2874 = vsel %vm933, %v2872, %v2873
        %v2875 = vrot.slane %v2743, 2
        %v2876 = vrot.slane %v2744, 2
        %v2877 = vsel %vm933, %v2875, %v2876
        %v2878 = vrot.slane %v2745, 2
        %v2879 = vrot.slane %v2746, 2
        %v2880 = vsel %vm933, %v2878, %v2879
        %v2881 = vrot.slane %v2747, 2
        %v2882 = vrot.slane %v2748, 2
        %v2883 = vsel %vm933, %v2881, %v2882
        %v2884 = vrot.slane %v2749, 2
        %v2885 = vrot.slane %v2750, 2
        %v2886 = vsel %vm933, %v2884, %v2885
        %v2887 = vrot.slane %v2751, 2
        %v2888 = vrot.slane %v2752, 2
        %v2889 = vsel %vm933, %v2887, %v2888
        %v2890 = vrot.slane %v2753, 2
        %v2891 = vrot.slane %v2754, 2
        %v2892 = vsel %vm933, %v2890, %v2891
        %v2893 = vrot.slane %v2755, 2
        %v2894 = vrot.slane %v2756, 2
        %v2895 = vsel %vm933, %v2893, %v2894
        %v2896 = vrot.slane %v2757, 2
        %v2897 = vrot.slane %v2758, 2
        %v2898 = vsel %vm933, %v2896, %v2897
        %v2899 = vrot.slane %v2759, 2
        %v2900 = vrot.slane %v2760, 2
        %v2901 = vsel %vm933, %v2899, %v2900
        %v2902 = vrot.slane %v2761, 2
        %v2903 = vrot.slane %v2762, 2
        %v2904 = vsel %vm933, %v2902, %v2903
        %v2905 = vrot.slane %v2763, 2
        %v2906 = vrot.slane %v2764, 2
        %v2907 = vsel %vm933, %v2905, %v2906
        %v2908 = vrot.slane %v2765, 2
        %v2909 = vrot.slane %v2766, 2
        %v2910 = vsel %vm933, %v2908, %v2909
        %v2911 = vrot.slane %v2767, 2
        %v2912 = vrot.slane %v2768, 2
        %v2913 = vsel %vm933, %v2911, %v2912
        %v2914 = vrot.slane %v2769, 2
        %v2915 = vrot.slane %v2770, 2
        %v2916 = vsel %vm933, %v2914, %v2915
        %v2917 = vrot.slane %v2771, 2
        %v2918 = vrot.slane %v2772, 2
        %v2919 = vsel %vm933, %v2917, %v2918
        %v2920 = vrot.slane %v2773, 2
        %v2921 = vrot.slane %v2774, 2
        %v2922 = vsel %vm933, %v2920, %v2921
        %v2923 = vrot.slane %v2775, 2
        %v2924 = vrot.slane %v2776, 2
        %v2925 = vsel %vm933, %v2923, %v2924
        %v2926 = vrot.slane %v2777, 2
        %v2927 = vrot.slane %v2778, 2
        %v2928 = vsel %vm933, %v2926, %v2927
        %v2929 = vrot.slane %v2779, 2
        %v2930 = vrot.slane %v2780, 2
        %v2931 = vsel %vm933, %v2929, %v2930
        %v2932 = vrot.slane %v2781, 2
        %v2933 = vrot.slane %v2782, 2
        %v2934 = vsel %vm933, %v2932, %v2933
        %v2935 = vrot.slane %v2783, 2
        %v2936 = vrot.slane %v2784, 2
        %v2937 = vsel %vm933, %v2935, %v2936
        %v2938 = vrot.slane %v2785, 2
        %v2939 = vrot.slane %v2786, 2
        %v2940 = vsel %vm933, %v2938, %v2939
        %v2941 = vrot.slane %v2787, 2
        %v2942 = vrot.slane %v2788, 2
        %v2943 = vsel %vm933, %v2941, %v2942
        %v2944 = vrot.slane %v2789, 2
        %v2945 = vrot.slane %v2790, 2
        %v2946 = vsel %vm933, %v2944, %v2945
        %v2947 = vrot.slane %v2791, 2
        %v2948 = vrot.slane %v2792, 2
        %v2949 = vsel %vm933, %v2947, %v2948
        %v2950 = vrot.slane %v2793, 2
        %v2951 = vrot.slane %v2794, 2
        %v2952 = vsel %vm933, %v2950, %v2951
        %v2953 = vrot.slane %v2795, 2
        %v2954 = vrot.slane %v2796, 2
        %v2955 = vsel %vm933, %v2953, %v2954
        %v2956 = vrot.slane %v2797, 2
        %v2957 = vrot.slane %v2798, 2
        %v2958 = vsel %vm933, %v2956, %v2957
        %v2991 = vadd.f32 %v2702, %v2865
        %v2992 = vadd.f32 %v2703, %v2868
        %v2993 = vadd.f32 %v2704, %v2871
        %v2994 = vadd.f32 %v2705, %v2874
        %v2995 = vadd.f32 %v2706, %v2877
        %v2996 = vadd.f32 %v2707, %v2880
        %v2997 = vadd.f32 %v2708, %v2883
        %v2998 = vadd.f32 %v2709, %v2886
        %v2999 = vadd.f32 %v2710, %v2889
        %v3000 = vadd.f32 %v2711, %v2892
        %v3001 = vadd.f32 %v2712, %v2895
        %v3002 = vadd.f32 %v2713, %v2898
        %v3003 = vadd.f32 %v2714, %v2901
        %v3004 = vadd.f32 %v2715, %v2904
        %v3005 = vadd.f32 %v2716, %v2907
        %v3006 = vadd.f32 %v2717, %v2910
        %v3007 = vadd.f32 %v2718, %v2913
        %v3008 = vadd.f32 %v2719, %v2916
        %v3009 = vadd.f32 %v2720, %v2919
        %v3010 = vadd.f32 %v2721, %v2922
        %v3011 = vadd.f32 %v2722, %v2925
        %v3012 = vadd.f32 %v2723, %v2928
        %v3013 = vadd.f32 %v2724, %v2931
        %v3014 = vadd.f32 %v2725, %v2934
        %v3015 = vadd.f32 %v2726, %v2937
        %v3016 = vadd.f32 %v2727, %v2940
        %v3017 = vadd.f32 %v2728, %v2943
        %v3018 = vadd.f32 %v2729, %v2946
        %v3019 = vadd.f32 %v2730, %v2949
        %v3020 = vadd.f32 %v2731, %v2952
        %v3021 = vadd.f32 %v2732, %v2955
        %v3022 = vadd.f32 %v2733, %v2958
        %v3023 = vperm.slane %v478, 4
        %v3024 = vmul.f32 %v379, %v3023
        %v3025 = vmul.f32 %v381, %v3023
        %v3026 = vmul.f32 %v383, %v3023
        %v3027 = vmul.f32 %v385, %v3023
        %v3028 = vmul.f32 %v387, %v3023
        %v3029 = vmul.f32 %v389, %v3023
        %v3030 = vmul.f32 %v391, %v3023
        %v3031 = vmul.f32 %v393, %v3023
        %v3032 = vmul.f32 %v399, %v3023
        %v3033 = vmul.f32 %v401, %v3023
        %v3034 = vmul.f32 %v403, %v3023
        %v3035 = vmul.f32 %v405, %v3023
        %v3036 = vmul.f32 %v407, %v3023
        %v3037 = vmul.f32 %v409, %v3023
        %v3038 = vmul.f32 %v411, %v3023
        %v3039 = vmul.f32 %v413, %v3023
        %v3040 = vmul.f32 %v419, %v3023
        %v3041 = vmul.f32 %v421, %v3023
        %v3042 = vmul.f32 %v423, %v3023
        %v3043 = vmul.f32 %v425, %v3023
        %v3044 = vmul.f32 %v427, %v3023
        %v3045 = vmul.f32 %v429, %v3023
        %v3046 = vmul.f32 %v431, %v3023
        %v3047 = vmul.f32 %v433, %v3023
        %v3048 = vmul.f32 %v439, %v3023
        %v3049 = vmul.f32 %v441, %v3023
        %v3050 = vmul.f32 %v443, %v3023
        %v3051 = vmul.f32 %v445, %v3023
        %v3052 = vmul.f32 %v447, %v3023
        %v3053 = vmul.f32 %v449, %v3023
        %v3054 = vmul.f32 %v451, %v3023
        %v3055 = vmul.f32 %v453, %v3023
        %v3056 = vadd.f32 %v2991, %v3024
        %v3057 = vadd.f32 %v2992, %v3025
        %v3058 = vadd.f32 %v2993, %v3026
        %v3059 = vadd.f32 %v2994, %v3027
        %v3060 = vadd.f32 %v2995, %v3028
        %v3061 = vadd.f32 %v2996, %v3029
        %v3062 = vadd.f32 %v2997, %v3030
        %v3063 = vadd.f32 %v2998, %v3031
        %v3064 = vadd.f32 %v2999, %v3032
        %v3065 = vadd.f32 %v3000, %v3033
        %v3066 = vadd.f32 %v3001, %v3034
        %v3067 = vadd.f32 %v3002, %v3035
        %v3068 = vadd.f32 %v3003, %v3036
        %v3069 = vadd.f32 %v3004, %v3037
        %v3070 = vadd.f32 %v3005, %v3038
        %v3071 = vadd.f32 %v3006, %v3039
        %v3072 = vadd.f32 %v3007, %v3040
        %v3073 = vadd.f32 %v3008, %v3041
        %v3074 = vadd.f32 %v3009, %v3042
        %v3075 = vadd.f32 %v3010, %v3043
        %v3076 = vadd.f32 %v3011, %v3044
        %v3077 = vadd.f32 %v3012, %v3045
        %v3078 = vadd.f32 %v3013, %v3046
        %v3079 = vadd.f32 %v3014, %v3047
        %v3080 = vadd.f32 %v3015, %v3048
        %v3081 = vadd.f32 %v3016, %v3049
        %v3082 = vadd.f32 %v3017, %v3050
        %v3083 = vadd.f32 %v3018, %v3051
        %v3084 = vadd.f32 %v3019, %v3052
        %v3085 = vadd.f32 %v3020, %v3053
        %v3086 = vadd.f32 %v3021, %v3054
        %v3087 = vadd.f32 %v3022, %v3055
        %v3088 = vperm.slane %v478, 5
        %v3089 = vmul.f32 %v379, %v3088
        %v3090 = vmul.f32 %v380, %v3088
        %v3091 = vmul.f32 %v381, %v3088
        %v3092 = vmul.f32 %v382, %v3088
        %v3093 = vmul.f32 %v383, %v3088
        %v3094 = vmul.f32 %v384, %v3088
        %v3095 = vmul.f32 %v385, %v3088
        %v3096 = vmul.f32 %v386, %v3088
        %v3097 = vmul.f32 %v387, %v3088
        %v3098 = vmul.f32 %v388, %v3088
        %v3099 = vmul.f32 %v389, %v3088
        %v3100 = vmul.f32 %v390, %v3088
        %v3101 = vmul.f32 %v391, %v3088
        %v3102 = vmul.f32 %v392, %v3088
        %v3103 = vmul.f32 %v393, %v3088
        %v3104 = vmul.f32 %v394, %v3088
        %v3105 = vmul.f32 %v399, %v3088
        %v3106 = vmul.f32 %v400, %v3088
        %v3107 = vmul.f32 %v401, %v3088
        %v3108 = vmul.f32 %v402, %v3088
        %v3109 = vmul.f32 %v403, %v3088
        %v3110 = vmul.f32 %v404, %v3088
        %v3111 = vmul.f32 %v405, %v3088
        %v3112 = vmul.f32 %v406, %v3088
        %v3113 = vmul.f32 %v407, %v3088
        %v3114 = vmul.f32 %v408, %v3088
        %v3115 = vmul.f32 %v409, %v3088
        %v3116 = vmul.f32 %v410, %v3088
        %v3117 = vmul.f32 %v411, %v3088
        %v3118 = vmul.f32 %v412, %v3088
        %v3119 = vmul.f32 %v413, %v3088
        %v3120 = vmul.f32 %v414, %v3088
        %v3121 = vmul.f32 %v419, %v3088
        %v3122 = vmul.f32 %v420, %v3088
        %v3123 = vmul.f32 %v421, %v3088
        %v3124 = vmul.f32 %v422, %v3088
        %v3125 = vmul.f32 %v423, %v3088
        %v3126 = vmul.f32 %v424, %v3088
        %v3127 = vmul.f32 %v425, %v3088
        %v3128 = vmul.f32 %v426, %v3088
        %v3129 = vmul.f32 %v427, %v3088
        %v3130 = vmul.f32 %v428, %v3088
        %v3131 = vmul.f32 %v429, %v3088
        %v3132 = vmul.f32 %v430, %v3088
        %v3133 = vmul.f32 %v431, %v3088
        %v3134 = vmul.f32 %v432, %v3088
        %v3135 = vmul.f32 %v433, %v3088
        %v3136 = vmul.f32 %v434, %v3088
        %v3137 = vmul.f32 %v439, %v3088
        %v3138 = vmul.f32 %v440, %v3088
        %v3139 = vmul.f32 %v441, %v3088
        %v3140 = vmul.f32 %v442, %v3088
        %v3141 = vmul.f32 %v443, %v3088
        %v3142 = vmul.f32 %v444, %v3088
        %v3143 = vmul.f32 %v445, %v3088
        %v3144 = vmul.f32 %v446, %v3088
        %v3145 = vmul.f32 %v447, %v3088
        %v3146 = vmul.f32 %v448, %v3088
        %v3147 = vmul.f32 %v449, %v3088
        %v3148 = vmul.f32 %v450, %v3088
        %v3149 = vmul.f32 %v451, %v3088
        %v3150 = vmul.f32 %v452, %v3088
        %v3151 = vmul.f32 %v453, %v3088
        %v3152 = vmul.f32 %v454, %v3088
        %v3217 = vrot.slane %v3089, 1
        %v3218 = vrot.slane %v3090, 1
        %v3219 = vsel %vm643, %v3217, %v3218
        %v3220 = vrot.slane %v3091, 1
        %v3221 = vrot.slane %v3092, 1
        %v3222 = vsel %vm643, %v3220, %v3221
        %v3223 = vrot.slane %v3093, 1
        %v3224 = vrot.slane %v3094, 1
        %v3225 = vsel %vm643, %v3223, %v3224
        %v3226 = vrot.slane %v3095, 1
        %v3227 = vrot.slane %v3096, 1
        %v3228 = vsel %vm643, %v3226, %v3227
        %v3229 = vrot.slane %v3097, 1
        %v3230 = vrot.slane %v3098, 1
        %v3231 = vsel %vm643, %v3229, %v3230
        %v3232 = vrot.slane %v3099, 1
        %v3233 = vrot.slane %v3100, 1
        %v3234 = vsel %vm643, %v3232, %v3233
        %v3235 = vrot.slane %v3101, 1
        %v3236 = vrot.slane %v3102, 1
        %v3237 = vsel %vm643, %v3235, %v3236
        %v3238 = vrot.slane %v3103, 1
        %v3239 = vrot.slane %v3104, 1
        %v3240 = vsel %vm643, %v3238, %v3239
        %v3241 = vrot.slane %v3105, 1
        %v3242 = vrot.slane %v3106, 1
        %v3243 = vsel %vm643, %v3241, %v3242
        %v3244 = vrot.slane %v3107, 1
        %v3245 = vrot.slane %v3108, 1
        %v3246 = vsel %vm643, %v3244, %v3245
        %v3247 = vrot.slane %v3109, 1
        %v3248 = vrot.slane %v3110, 1
        %v3249 = vsel %vm643, %v3247, %v3248
        %v3250 = vrot.slane %v3111, 1
        %v3251 = vrot.slane %v3112, 1
        %v3252 = vsel %vm643, %v3250, %v3251
        %v3253 = vrot.slane %v3113, 1
        %v3254 = vrot.slane %v3114, 1
        %v3255 = vsel %vm643, %v3253, %v3254
        %v3256 = vrot.slane %v3115, 1
        %v3257 = vrot.slane %v3116, 1
        %v3258 = vsel %vm643, %v3256, %v3257
        %v3259 = vrot.slane %v3117, 1
        %v3260 = vrot.slane %v3118, 1
        %v3261 = vsel %vm643, %v3259, %v3260
        %v3262 = vrot.slane %v3119, 1
        %v3263 = vrot.slane %v3120, 1
        %v3264 = vsel %vm643, %v3262, %v3263
        %v3265 = vrot.slane %v3121, 1
        %v3266 = vrot.slane %v3122, 1
        %v3267 = vsel %vm643, %v3265, %v3266
        %v3268 = vrot.slane %v3123, 1
        %v3269 = vrot.slane %v3124, 1
        %v3270 = vsel %vm643, %v3268, %v3269
        %v3271 = vrot.slane %v3125, 1
        %v3272 = vrot.slane %v3126, 1
        %v3273 = vsel %vm643, %v3271, %v3272
        %v3274 = vrot.slane %v3127, 1
        %v3275 = vrot.slane %v3128, 1
        %v3276 = vsel %vm643, %v3274, %v3275
        %v3277 = vrot.slane %v3129, 1
        %v3278 = vrot.slane %v3130, 1
        %v3279 = vsel %vm643, %v3277, %v3278
        %v3280 = vrot.slane %v3131, 1
        %v3281 = vrot.slane %v3132, 1
        %v3282 = vsel %vm643, %v3280, %v3281
        %v3283 = vrot.slane %v3133, 1
        %v3284 = vrot.slane %v3134, 1
        %v3285 = vsel %vm643, %v3283, %v3284
        %v3286 = vrot.slane %v3135, 1
        %v3287 = vrot.slane %v3136, 1
        %v3288 = vsel %vm643, %v3286, %v3287
        %v3289 = vrot.slane %v3137, 1
        %v3290 = vrot.slane %v3138, 1
        %v3291 = vsel %vm643, %v3289, %v3290
        %v3292 = vrot.slane %v3139, 1
        %v3293 = vrot.slane %v3140, 1
        %v3294 = vsel %vm643, %v3292, %v3293
        %v3295 = vrot.slane %v3141, 1
        %v3296 = vrot.slane %v3142, 1
        %v3297 = vsel %vm643, %v3295, %v3296
        %v3298 = vrot.slane %v3143, 1
        %v3299 = vrot.slane %v3144, 1
        %v3300 = vsel %vm643, %v3298, %v3299
        %v3301 = vrot.slane %v3145, 1
        %v3302 = vrot.slane %v3146, 1
        %v3303 = vsel %vm643, %v3301, %v3302
        %v3304 = vrot.slane %v3147, 1
        %v3305 = vrot.slane %v3148, 1
        %v3306 = vsel %vm643, %v3304, %v3305
        %v3307 = vrot.slane %v3149, 1
        %v3308 = vrot.slane %v3150, 1
        %v3309 = vsel %vm643, %v3307, %v3308
        %v3310 = vrot.slane %v3151, 1
        %v3311 = vrot.slane %v3152, 1
        %v3312 = vsel %vm643, %v3310, %v3311
        %v3345 = vadd.f32 %v3056, %v3219
        %v3346 = vadd.f32 %v3057, %v3222
        %v3347 = vadd.f32 %v3058, %v3225
        %v3348 = vadd.f32 %v3059, %v3228
        %v3349 = vadd.f32 %v3060, %v3231
        %v3350 = vadd.f32 %v3061, %v3234
        %v3351 = vadd.f32 %v3062, %v3237
        %v3352 = vadd.f32 %v3063, %v3240
        %v3353 = vadd.f32 %v3064, %v3243
        %v3354 = vadd.f32 %v3065, %v3246
        %v3355 = vadd.f32 %v3066, %v3249
        %v3356 = vadd.f32 %v3067, %v3252
        %v3357 = vadd.f32 %v3068, %v3255
        %v3358 = vadd.f32 %v3069, %v3258
        %v3359 = vadd.f32 %v3070, %v3261
        %v3360 = vadd.f32 %v3071, %v3264
        %v3361 = vadd.f32 %v3072, %v3267
        %v3362 = vadd.f32 %v3073, %v3270
        %v3363 = vadd.f32 %v3074, %v3273
        %v3364 = vadd.f32 %v3075, %v3276
        %v3365 = vadd.f32 %v3076, %v3279
        %v3366 = vadd.f32 %v3077, %v3282
        %v3367 = vadd.f32 %v3078, %v3285
        %v3368 = vadd.f32 %v3079, %v3288
        %v3369 = vadd.f32 %v3080, %v3291
        %v3370 = vadd.f32 %v3081, %v3294
        %v3371 = vadd.f32 %v3082, %v3297
        %v3372 = vadd.f32 %v3083, %v3300
        %v3373 = vadd.f32 %v3084, %v3303
        %v3374 = vadd.f32 %v3085, %v3306
        %v3375 = vadd.f32 %v3086, %v3309
        %v3376 = vadd.f32 %v3087, %v3312
        %v3377 = vperm.slane %v478, 6
        %v3378 = vmul.f32 %v379, %v3377
        %v3379 = vmul.f32 %v380, %v3377
        %v3380 = vmul.f32 %v381, %v3377
        %v3381 = vmul.f32 %v382, %v3377
        %v3382 = vmul.f32 %v383, %v3377
        %v3383 = vmul.f32 %v384, %v3377
        %v3384 = vmul.f32 %v385, %v3377
        %v3385 = vmul.f32 %v386, %v3377
        %v3386 = vmul.f32 %v387, %v3377
        %v3387 = vmul.f32 %v388, %v3377
        %v3388 = vmul.f32 %v389, %v3377
        %v3389 = vmul.f32 %v390, %v3377
        %v3390 = vmul.f32 %v391, %v3377
        %v3391 = vmul.f32 %v392, %v3377
        %v3392 = vmul.f32 %v393, %v3377
        %v3393 = vmul.f32 %v394, %v3377
        %v3394 = vmul.f32 %v399, %v3377
        %v3395 = vmul.f32 %v400, %v3377
        %v3396 = vmul.f32 %v401, %v3377
        %v3397 = vmul.f32 %v402, %v3377
        %v3398 = vmul.f32 %v403, %v3377
        %v3399 = vmul.f32 %v404, %v3377
        %v3400 = vmul.f32 %v405, %v3377
        %v3401 = vmul.f32 %v406, %v3377
        %v3402 = vmul.f32 %v407, %v3377
        %v3403 = vmul.f32 %v408, %v3377
        %v3404 = vmul.f32 %v409, %v3377
        %v3405 = vmul.f32 %v410, %v3377
        %v3406 = vmul.f32 %v411, %v3377
        %v3407 = vmul.f32 %v412, %v3377
        %v3408 = vmul.f32 %v413, %v3377
        %v3409 = vmul.f32 %v414, %v3377
        %v3410 = vmul.f32 %v419, %v3377
        %v3411 = vmul.f32 %v420, %v3377
        %v3412 = vmul.f32 %v421, %v3377
        %v3413 = vmul.f32 %v422, %v3377
        %v3414 = vmul.f32 %v423, %v3377
        %v3415 = vmul.f32 %v424, %v3377
        %v3416 = vmul.f32 %v425, %v3377
        %v3417 = vmul.f32 %v426, %v3377
        %v3418 = vmul.f32 %v427, %v3377
        %v3419 = vmul.f32 %v428, %v3377
        %v3420 = vmul.f32 %v429, %v3377
        %v3421 = vmul.f32 %v430, %v3377
        %v3422 = vmul.f32 %v431, %v3377
        %v3423 = vmul.f32 %v432, %v3377
        %v3424 = vmul.f32 %v433, %v3377
        %v3425 = vmul.f32 %v434, %v3377
        %v3426 = vmul.f32 %v439, %v3377
        %v3427 = vmul.f32 %v440, %v3377
        %v3428 = vmul.f32 %v441, %v3377
        %v3429 = vmul.f32 %v442, %v3377
        %v3430 = vmul.f32 %v443, %v3377
        %v3431 = vmul.f32 %v444, %v3377
        %v3432 = vmul.f32 %v445, %v3377
        %v3433 = vmul.f32 %v446, %v3377
        %v3434 = vmul.f32 %v447, %v3377
        %v3435 = vmul.f32 %v448, %v3377
        %v3436 = vmul.f32 %v449, %v3377
        %v3437 = vmul.f32 %v450, %v3377
        %v3438 = vmul.f32 %v451, %v3377
        %v3439 = vmul.f32 %v452, %v3377
        %v3440 = vmul.f32 %v453, %v3377
        %v3441 = vmul.f32 %v454, %v3377
        %v3506 = vrot.slane %v3378, 2
        %v3507 = vrot.slane %v3379, 2
        %v3508 = vsel %vm933, %v3506, %v3507
        %v3509 = vrot.slane %v3380, 2
        %v3510 = vrot.slane %v3381, 2
        %v3511 = vsel %vm933, %v3509, %v3510
        %v3512 = vrot.slane %v3382, 2
        %v3513 = vrot.slane %v3383, 2
        %v3514 = vsel %vm933, %v3512, %v3513
        %v3515 = vrot.slane %v3384, 2
        %v3516 = vrot.slane %v3385, 2
        %v3517 = vsel %vm933, %v3515, %v3516
        %v3518 = vrot.slane %v3386, 2
        %v3519 = vrot.slane %v3387, 2
        %v3520 = vsel %vm933, %v3518, %v3519
        %v3521 = vrot.slane %v3388, 2
        %v3522 = vrot.slane %v3389, 2
        %v3523 = vsel %vm933, %v3521, %v3522
        %v3524 = vrot.slane %v3390, 2
        %v3525 = vrot.slane %v3391, 2
        %v3526 = vsel %vm933, %v3524, %v3525
        %v3527 = vrot.slane %v3392, 2
        %v3528 = vrot.slane %v3393, 2
        %v3529 = vsel %vm933, %v3527, %v3528
        %v3530 = vrot.slane %v3394, 2
        %v3531 = vrot.slane %v3395, 2
        %v3532 = vsel %vm933, %v3530, %v3531
        %v3533 = vrot.slane %v3396, 2
        %v3534 = vrot.slane %v3397, 2
        %v3535 = vsel %vm933, %v3533, %v3534
        %v3536 = vrot.slane %v3398, 2
        %v3537 = vrot.slane %v3399, 2
        %v3538 = vsel %vm933, %v3536, %v3537
        %v3539 = vrot.slane %v3400, 2
        %v3540 = vrot.slane %v3401, 2
        %v3541 = vsel %vm933, %v3539, %v3540
        %v3542 = vrot.slane %v3402, 2
        %v3543 = vrot.slane %v3403, 2
        %v3544 = vsel %vm933, %v3542, %v3543
        %v3545 = vrot.slane %v3404, 2
        %v3546 = vrot.slane %v3405, 2
        %v3547 = vsel %vm933, %v3545, %v3546
        %v3548 = vrot.slane %v3406, 2
        %v3549 = vrot.slane %v3407, 2
        %v3550 = vsel %vm933, %v3548, %v3549
        %v3551 = vrot.slane %v3408, 2
        %v3552 = vrot.slane %v3409, 2
        %v3553 = vsel %vm933, %v3551, %v3552
        %v3554 = vrot.slane %v3410, 2
        %v3555 = vrot.slane %v3411, 2
        %v3556 = vsel %vm933, %v3554, %v3555
        %v3557 = vrot.slane %v3412, 2
        %v3558 = vrot.slane %v3413, 2
        %v3559 = vsel %vm933, %v3557, %v3558
        %v3560 = vrot.slane %v3414, 2
        %v3561 = vrot.slane %v3415, 2
        %v3562 = vsel %vm933, %v3560, %v3561
        %v3563 = vrot.slane %v3416, 2
        %v3564 = vrot.slane %v3417, 2
        %v3565 = vsel %vm933, %v3563, %v3564
        %v3566 = vrot.slane %v3418, 2
        %v3567 = vrot.slane %v3419, 2
        %v3568 = vsel %vm933, %v3566, %v3567
        %v3569 = vrot.slane %v3420, 2
        %v3570 = vrot.slane %v3421, 2
        %v3571 = vsel %vm933, %v3569, %v3570
        %v3572 = vrot.slane %v3422, 2
        %v3573 = vrot.slane %v3423, 2
        %v3574 = vsel %vm933, %v3572, %v3573
        %v3575 = vrot.slane %v3424, 2
        %v3576 = vrot.slane %v3425, 2
        %v3577 = vsel %vm933, %v3575, %v3576
        %v3578 = vrot.slane %v3426, 2
        %v3579 = vrot.slane %v3427, 2
        %v3580 = vsel %vm933, %v3578, %v3579
        %v3581 = vrot.slane %v3428, 2
        %v3582 = vrot.slane %v3429, 2
        %v3583 = vsel %vm933, %v3581, %v3582
        %v3584 = vrot.slane %v3430, 2
        %v3585 = vrot.slane %v3431, 2
        %v3586 = vsel %vm933, %v3584, %v3585
        %v3587 = vrot.slane %v3432, 2
        %v3588 = vrot.slane %v3433, 2
        %v3589 = vsel %vm933, %v3587, %v3588
        %v3590 = vrot.slane %v3434, 2
        %v3591 = vrot.slane %v3435, 2
        %v3592 = vsel %vm933, %v3590, %v3591
        %v3593 = vrot.slane %v3436, 2
        %v3594 = vrot.slane %v3437, 2
        %v3595 = vsel %vm933, %v3593, %v3594
        %v3596 = vrot.slane %v3438, 2
        %v3597 = vrot.slane %v3439, 2
        %v3598 = vsel %vm933, %v3596, %v3597
        %v3599 = vrot.slane %v3440, 2
        %v3600 = vrot.slane %v3441, 2
        %v3601 = vsel %vm933, %v3599, %v3600
        %v3634 = vadd.f32 %v3345, %v3508
        %v3635 = vadd.f32 %v3346, %v3511
        %v3636 = vadd.f32 %v3347, %v3514
        %v3637 = vadd.f32 %v3348, %v3517
        %v3638 = vadd.f32 %v3349, %v3520
        %v3639 = vadd.f32 %v3350, %v3523
        %v3640 = vadd.f32 %v3351, %v3526
        %v3641 = vadd.f32 %v3352, %v3529
        %v3642 = vadd.f32 %v3353, %v3532
        %v3643 = vadd.f32 %v3354, %v3535
        %v3644 = vadd.f32 %v3355, %v3538
        %v3645 = vadd.f32 %v3356, %v3541
        %v3646 = vadd.f32 %v3357, %v3544
        %v3647 = vadd.f32 %v3358, %v3547
        %v3648 = vadd.f32 %v3359, %v3550
        %v3649 = vadd.f32 %v3360, %v3553
        %v3650 = vadd.f32 %v3361, %v3556
        %v3651 = vadd.f32 %v3362, %v3559
        %v3652 = vadd.f32 %v3363, %v3562
        %v3653 = vadd.f32 %v3364, %v3565
        %v3654 = vadd.f32 %v3365, %v3568
        %v3655 = vadd.f32 %v3366, %v3571
        %v3656 = vadd.f32 %v3367, %v3574
        %v3657 = vadd.f32 %v3368, %v3577
        %v3658 = vadd.f32 %v3369, %v3580
        %v3659 = vadd.f32 %v3370, %v3583
        %v3660 = vadd.f32 %v3371, %v3586
        %v3661 = vadd.f32 %v3372, %v3589
        %v3662 = vadd.f32 %v3373, %v3592
        %v3663 = vadd.f32 %v3374, %v3595
        %v3664 = vadd.f32 %v3375, %v3598
        %v3665 = vadd.f32 %v3376, %v3601
        %v3666 = vperm.slane %v478, 7
        %v3667 = vmul.f32 %v381, %v3666
        %v3668 = vmul.f32 %v383, %v3666
        %v3669 = vmul.f32 %v385, %v3666
        %v3670 = vmul.f32 %v387, %v3666
        %v3671 = vmul.f32 %v389, %v3666
        %v3672 = vmul.f32 %v391, %v3666
        %v3673 = vmul.f32 %v393, %v3666
        %v3674 = vmul.f32 %v395, %v3666
        %v3675 = vmul.f32 %v401, %v3666
        %v3676 = vmul.f32 %v403, %v3666
        %v3677 = vmul.f32 %v405, %v3666
        %v3678 = vmul.f32 %v407, %v3666
        %v3679 = vmul.f32 %v409, %v3666
        %v3680 = vmul.f32 %v411, %v3666
        %v3681 = vmul.f32 %v413, %v3666
        %v3682 = vmul.f32 %v415, %v3666
        %v3683 = vmul.f32 %v421, %v3666
        %v3684 = vmul.f32 %v423, %v3666
        %v3685 = vmul.f32 %v425, %v3666
        %v3686 = vmul.f32 %v427, %v3666
        %v3687 = vmul.f32 %v429, %v3666
        %v3688 = vmul.f32 %v431, %v3666
        %v3689 = vmul.f32 %v433, %v3666
        %v3690 = vmul.f32 %v435, %v3666
        %v3691 = vmul.f32 %v441, %v3666
        %v3692 = vmul.f32 %v443, %v3666
        %v3693 = vmul.f32 %v445, %v3666
        %v3694 = vmul.f32 %v447, %v3666
        %v3695 = vmul.f32 %v449, %v3666
        %v3696 = vmul.f32 %v451, %v3666
        %v3697 = vmul.f32 %v453, %v3666
        %v3698 = vmul.f32 %v455, %v3666
        %v3699 = vadd.f32 %v3634, %v3667
        %v3700 = vadd.f32 %v3635, %v3668
        %v3701 = vadd.f32 %v3636, %v3669
        %v3702 = vadd.f32 %v3637, %v3670
        %v3703 = vadd.f32 %v3638, %v3671
        %v3704 = vadd.f32 %v3639, %v3672
        %v3705 = vadd.f32 %v3640, %v3673
        %v3706 = vadd.f32 %v3641, %v3674
        %v3707 = vadd.f32 %v3642, %v3675
        %v3708 = vadd.f32 %v3643, %v3676
        %v3709 = vadd.f32 %v3644, %v3677
        %v3710 = vadd.f32 %v3645, %v3678
        %v3711 = vadd.f32 %v3646, %v3679
        %v3712 = vadd.f32 %v3647, %v3680
        %v3713 = vadd.f32 %v3648, %v3681
        %v3714 = vadd.f32 %v3649, %v3682
        %v3715 = vadd.f32 %v3650, %v3683
        %v3716 = vadd.f32 %v3651, %v3684
        %v3717 = vadd.f32 %v3652, %v3685
        %v3718 = vadd.f32 %v3653, %v3686
        %v3719 = vadd.f32 %v3654, %v3687
        %v3720 = vadd.f32 %v3655, %v3688
        %v3721 = vadd.f32 %v3656, %v3689
        %v3722 = vadd.f32 %v3657, %v3690
        %v3723 = vadd.f32 %v3658, %v3691
        %v3724 = vadd.f32 %v3659, %v3692
        %v3725 = vadd.f32 %v3660, %v3693
        %v3726 = vadd.f32 %v3661, %v3694
        %v3727 = vadd.f32 %v3662, %v3695
        %v3728 = vadd.f32 %v3663, %v3696
        %v3729 = vadd.f32 %v3664, %v3697
        %v3730 = vadd.f32 %v3665, %v3698
        %v3731 = vperm.slane %v479, 0
        %v3732 = vmul.f32 %v381, %v3731
        %v3733 = vmul.f32 %v382, %v3731
        %v3734 = vmul.f32 %v383, %v3731
        %v3735 = vmul.f32 %v384, %v3731
        %v3736 = vmul.f32 %v385, %v3731
        %v3737 = vmul.f32 %v386, %v3731
        %v3738 = vmul.f32 %v387, %v3731
        %v3739 = vmul.f32 %v388, %v3731
        %v3740 = vmul.f32 %v389, %v3731
        %v3741 = vmul.f32 %v390, %v3731
        %v3742 = vmul.f32 %v391, %v3731
        %v3743 = vmul.f32 %v392, %v3731
        %v3744 = vmul.f32 %v393, %v3731
        %v3745 = vmul.f32 %v394, %v3731
        %v3746 = vmul.f32 %v395, %v3731
        %v3747 = vmul.f32 %v396, %v3731
        %v3748 = vmul.f32 %v401, %v3731
        %v3749 = vmul.f32 %v402, %v3731
        %v3750 = vmul.f32 %v403, %v3731
        %v3751 = vmul.f32 %v404, %v3731
        %v3752 = vmul.f32 %v405, %v3731
        %v3753 = vmul.f32 %v406, %v3731
        %v3754 = vmul.f32 %v407, %v3731
        %v3755 = vmul.f32 %v408, %v3731
        %v3756 = vmul.f32 %v409, %v3731
        %v3757 = vmul.f32 %v410, %v3731
        %v3758 = vmul.f32 %v411, %v3731
        %v3759 = vmul.f32 %v412, %v3731
        %v3760 = vmul.f32 %v413, %v3731
        %v3761 = vmul.f32 %v414, %v3731
        %v3762 = vmul.f32 %v415, %v3731
        %v3763 = vmul.f32 %v416, %v3731
        %v3764 = vmul.f32 %v421, %v3731
        %v3765 = vmul.f32 %v422, %v3731
        %v3766 = vmul.f32 %v423, %v3731
        %v3767 = vmul.f32 %v424, %v3731
        %v3768 = vmul.f32 %v425, %v3731
        %v3769 = vmul.f32 %v426, %v3731
        %v3770 = vmul.f32 %v427, %v3731
        %v3771 = vmul.f32 %v428, %v3731
        %v3772 = vmul.f32 %v429, %v3731
        %v3773 = vmul.f32 %v430, %v3731
        %v3774 = vmul.f32 %v431, %v3731
        %v3775 = vmul.f32 %v432, %v3731
        %v3776 = vmul.f32 %v433, %v3731
        %v3777 = vmul.f32 %v434, %v3731
        %v3778 = vmul.f32 %v435, %v3731
        %v3779 = vmul.f32 %v436, %v3731
        %v3780 = vmul.f32 %v441, %v3731
        %v3781 = vmul.f32 %v442, %v3731
        %v3782 = vmul.f32 %v443, %v3731
        %v3783 = vmul.f32 %v444, %v3731
        %v3784 = vmul.f32 %v445, %v3731
        %v3785 = vmul.f32 %v446, %v3731
        %v3786 = vmul.f32 %v447, %v3731
        %v3787 = vmul.f32 %v448, %v3731
        %v3788 = vmul.f32 %v449, %v3731
        %v3789 = vmul.f32 %v450, %v3731
        %v3790 = vmul.f32 %v451, %v3731
        %v3791 = vmul.f32 %v452, %v3731
        %v3792 = vmul.f32 %v453, %v3731
        %v3793 = vmul.f32 %v454, %v3731
        %v3794 = vmul.f32 %v455, %v3731
        %v3795 = vmul.f32 %v456, %v3731
        %v3860 = vrot.slane %v3732, 1
        %v3861 = vrot.slane %v3733, 1
        %v3862 = vsel %vm643, %v3860, %v3861
        %v3863 = vrot.slane %v3734, 1
        %v3864 = vrot.slane %v3735, 1
        %v3865 = vsel %vm643, %v3863, %v3864
        %v3866 = vrot.slane %v3736, 1
        %v3867 = vrot.slane %v3737, 1
        %v3868 = vsel %vm643, %v3866, %v3867
        %v3869 = vrot.slane %v3738, 1
        %v3870 = vrot.slane %v3739, 1
        %v3871 = vsel %vm643, %v3869, %v3870
        %v3872 = vrot.slane %v3740, 1
        %v3873 = vrot.slane %v3741, 1
        %v3874 = vsel %vm643, %v3872, %v3873
        %v3875 = vrot.slane %v3742, 1
        %v3876 = vrot.slane %v3743, 1
        %v3877 = vsel %vm643, %v3875, %v3876
        %v3878 = vrot.slane %v3744, 1
        %v3879 = vrot.slane %v3745, 1
        %v3880 = vsel %vm643, %v3878, %v3879
        %v3881 = vrot.slane %v3746, 1
        %v3882 = vrot.slane %v3747, 1
        %v3883 = vsel %vm643, %v3881, %v3882
        %v3884 = vrot.slane %v3748, 1
        %v3885 = vrot.slane %v3749, 1
        %v3886 = vsel %vm643, %v3884, %v3885
        %v3887 = vrot.slane %v3750, 1
        %v3888 = vrot.slane %v3751, 1
        %v3889 = vsel %vm643, %v3887, %v3888
        %v3890 = vrot.slane %v3752, 1
        %v3891 = vrot.slane %v3753, 1
        %v3892 = vsel %vm643, %v3890, %v3891
        %v3893 = vrot.slane %v3754, 1
        %v3894 = vrot.slane %v3755, 1
        %v3895 = vsel %vm643, %v3893, %v3894
        %v3896 = vrot.slane %v3756, 1
        %v3897 = vrot.slane %v3757, 1
        %v3898 = vsel %vm643, %v3896, %v3897
        %v3899 = vrot.slane %v3758, 1
        %v3900 = vrot.slane %v3759, 1
        %v3901 = vsel %vm643, %v3899, %v3900
        %v3902 = vrot.slane %v3760, 1
        %v3903 = vrot.slane %v3761, 1
        %v3904 = vsel %vm643, %v3902, %v3903
        %v3905 = vrot.slane %v3762, 1
        %v3906 = vrot.slane %v3763, 1
        %v3907 = vsel %vm643, %v3905, %v3906
        %v3908 = vrot.slane %v3764, 1
        %v3909 = vrot.slane %v3765, 1
        %v3910 = vsel %vm643, %v3908, %v3909
        %v3911 = vrot.slane %v3766, 1
        %v3912 = vrot.slane %v3767, 1
        %v3913 = vsel %vm643, %v3911, %v3912
        %v3914 = vrot.slane %v3768, 1
        %v3915 = vrot.slane %v3769, 1
        %v3916 = vsel %vm643, %v3914, %v3915
        %v3917 = vrot.slane %v3770, 1
        %v3918 = vrot.slane %v3771, 1
        %v3919 = vsel %vm643, %v3917, %v3918
        %v3920 = vrot.slane %v3772, 1
        %v3921 = vrot.slane %v3773, 1
        %v3922 = vsel %vm643, %v3920, %v3921
        %v3923 = vrot.slane %v3774, 1
        %v3924 = vrot.slane %v3775, 1
        %v3925 = vsel %vm643, %v3923, %v3924
        %v3926 = vrot.slane %v3776, 1
        %v3927 = vrot.slane %v3777, 1
        %v3928 = vsel %vm643, %v3926, %v3927
        %v3929 = vrot.slane %v3778, 1
        %v3930 = vrot.slane %v3779, 1
        %v3931 = vsel %vm643, %v3929, %v3930
        %v3932 = vrot.slane %v3780, 1
        %v3933 = vrot.slane %v3781, 1
        %v3934 = vsel %vm643, %v3932, %v3933
        %v3935 = vrot.slane %v3782, 1
        %v3936 = vrot.slane %v3783, 1
        %v3937 = vsel %vm643, %v3935, %v3936
        %v3938 = vrot.slane %v3784, 1
        %v3939 = vrot.slane %v3785, 1
        %v3940 = vsel %vm643, %v3938, %v3939
        %v3941 = vrot.slane %v3786, 1
        %v3942 = vrot.slane %v3787, 1
        %v3943 = vsel %vm643, %v3941, %v3942
        %v3944 = vrot.slane %v3788, 1
        %v3945 = vrot.slane %v3789, 1
        %v3946 = vsel %vm643, %v3944, %v3945
        %v3947 = vrot.slane %v3790, 1
        %v3948 = vrot.slane %v3791, 1
        %v3949 = vsel %vm643, %v3947, %v3948
        %v3950 = vrot.slane %v3792, 1
        %v3951 = vrot.slane %v3793, 1
        %v3952 = vsel %vm643, %v3950, %v3951
        %v3953 = vrot.slane %v3794, 1
        %v3954 = vrot.slane %v3795, 1
        %v3955 = vsel %vm643, %v3953, %v3954
        %v3988 = vadd.f32 %v3699, %v3862
        %v3989 = vadd.f32 %v3700, %v3865
        %v3990 = vadd.f32 %v3701, %v3868
        %v3991 = vadd.f32 %v3702, %v3871
        %v3992 = vadd.f32 %v3703, %v3874
        %v3993 = vadd.f32 %v3704, %v3877
        %v3994 = vadd.f32 %v3705, %v3880
        %v3995 = vadd.f32 %v3706, %v3883
        %v3996 = vadd.f32 %v3707, %v3886
        %v3997 = vadd.f32 %v3708, %v3889
        %v3998 = vadd.f32 %v3709, %v3892
        %v3999 = vadd.f32 %v3710, %v3895
        %v4000 = vadd.f32 %v3711, %v3898
        %v4001 = vadd.f32 %v3712, %v3901
        %v4002 = vadd.f32 %v3713, %v3904
        %v4003 = vadd.f32 %v3714, %v3907
        %v4004 = vadd.f32 %v3715, %v3910
        %v4005 = vadd.f32 %v3716, %v3913
        %v4006 = vadd.f32 %v3717, %v3916
        %v4007 = vadd.f32 %v3718, %v3919
        %v4008 = vadd.f32 %v3719, %v3922
        %v4009 = vadd.f32 %v3720, %v3925
        %v4010 = vadd.f32 %v3721, %v3928
        %v4011 = vadd.f32 %v3722, %v3931
        %v4012 = vadd.f32 %v3723, %v3934
        %v4013 = vadd.f32 %v3724, %v3937
        %v4014 = vadd.f32 %v3725, %v3940
        %v4015 = vadd.f32 %v3726, %v3943
        %v4016 = vadd.f32 %v3727, %v3946
        %v4017 = vadd.f32 %v3728, %v3949
        %v4018 = vadd.f32 %v3729, %v3952
        %v4019 = vadd.f32 %v3730, %v3955
        %v4020 = vperm.slane %v479, 1
        %v4021 = vmul.f32 %v381, %v4020
        %v4022 = vmul.f32 %v382, %v4020
        %v4023 = vmul.f32 %v383, %v4020
        %v4024 = vmul.f32 %v384, %v4020
        %v4025 = vmul.f32 %v385, %v4020
        %v4026 = vmul.f32 %v386, %v4020
        %v4027 = vmul.f32 %v387, %v4020
        %v4028 = vmul.f32 %v388, %v4020
        %v4029 = vmul.f32 %v389, %v4020
        %v4030 = vmul.f32 %v390, %v4020
        %v4031 = vmul.f32 %v391, %v4020
        %v4032 = vmul.f32 %v392, %v4020
        %v4033 = vmul.f32 %v393, %v4020
        %v4034 = vmul.f32 %v394, %v4020
        %v4035 = vmul.f32 %v395, %v4020
        %v4036 = vmul.f32 %v396, %v4020
        %v4037 = vmul.f32 %v401, %v4020
        %v4038 = vmul.f32 %v402, %v4020
        %v4039 = vmul.f32 %v403, %v4020
        %v4040 = vmul.f32 %v404, %v4020
        %v4041 = vmul.f32 %v405, %v4020
        %v4042 = vmul.f32 %v406, %v4020
        %v4043 = vmul.f32 %v407, %v4020
        %v4044 = vmul.f32 %v408, %v4020
        %v4045 = vmul.f32 %v409, %v4020
        %v4046 = vmul.f32 %v410, %v4020
        %v4047 = vmul.f32 %v411, %v4020
        %v4048 = vmul.f32 %v412, %v4020
        %v4049 = vmul.f32 %v413, %v4020
        %v4050 = vmul.f32 %v414, %v4020
        %v4051 = vmul.f32 %v415, %v4020
        %v4052 = vmul.f32 %v416, %v4020
        %v4053 = vmul.f32 %v421, %v4020
        %v4054 = vmul.f32 %v422, %v4020
        %v4055 = vmul.f32 %v423, %v4020
        %v4056 = vmul.f32 %v424, %v4020
        %v4057 = vmul.f32 %v425, %v4020
        %v4058 = vmul.f32 %v426, %v4020
        %v4059 = vmul.f32 %v427, %v4020
        %v4060 = vmul.f32 %v428, %v4020
        %v4061 = vmul.f32 %v429, %v4020
        %v4062 = vmul.f32 %v430, %v4020
        %v4063 = vmul.f32 %v431, %v4020
        %v4064 = vmul.f32 %v432, %v4020
        %v4065 = vmul.f32 %v433, %v4020
        %v4066 = vmul.f32 %v434, %v4020
        %v4067 = vmul.f32 %v435, %v4020
        %v4068 = vmul.f32 %v436, %v4020
        %v4069 = vmul.f32 %v441, %v4020
        %v4070 = vmul.f32 %v442, %v4020
        %v4071 = vmul.f32 %v443, %v4020
        %v4072 = vmul.f32 %v444, %v4020
        %v4073 = vmul.f32 %v445, %v4020
        %v4074 = vmul.f32 %v446, %v4020
        %v4075 = vmul.f32 %v447, %v4020
        %v4076 = vmul.f32 %v448, %v4020
        %v4077 = vmul.f32 %v449, %v4020
        %v4078 = vmul.f32 %v450, %v4020
        %v4079 = vmul.f32 %v451, %v4020
        %v4080 = vmul.f32 %v452, %v4020
        %v4081 = vmul.f32 %v453, %v4020
        %v4082 = vmul.f32 %v454, %v4020
        %v4083 = vmul.f32 %v455, %v4020
        %v4084 = vmul.f32 %v456, %v4020
        %v4149 = vrot.slane %v4021, 2
        %v4150 = vrot.slane %v4022, 2
        %v4151 = vsel %vm933, %v4149, %v4150
        %v4152 = vrot.slane %v4023, 2
        %v4153 = vrot.slane %v4024, 2
        %v4154 = vsel %vm933, %v4152, %v4153
        %v4155 = vrot.slane %v4025, 2
        %v4156 = vrot.slane %v4026, 2
        %v4157 = vsel %vm933, %v4155, %v4156
        %v4158 = vrot.slane %v4027, 2
        %v4159 = vrot.slane %v4028, 2
        %v4160 = vsel %vm933, %v4158, %v4159
        %v4161 = vrot.slane %v4029, 2
        %v4162 = vrot.slane %v4030, 2
        %v4163 = vsel %vm933, %v4161, %v4162
        %v4164 = vrot.slane %v4031, 2
        %v4165 = vrot.slane %v4032, 2
        %v4166 = vsel %vm933, %v4164, %v4165
        %v4167 = vrot.slane %v4033, 2
        %v4168 = vrot.slane %v4034, 2
        %v4169 = vsel %vm933, %v4167, %v4168
        %v4170 = vrot.slane %v4035, 2
        %v4171 = vrot.slane %v4036, 2
        %v4172 = vsel %vm933, %v4170, %v4171
        %v4173 = vrot.slane %v4037, 2
        %v4174 = vrot.slane %v4038, 2
        %v4175 = vsel %vm933, %v4173, %v4174
        %v4176 = vrot.slane %v4039, 2
        %v4177 = vrot.slane %v4040, 2
        %v4178 = vsel %vm933, %v4176, %v4177
        %v4179 = vrot.slane %v4041, 2
        %v4180 = vrot.slane %v4042, 2
        %v4181 = vsel %vm933, %v4179, %v4180
        %v4182 = vrot.slane %v4043, 2
        %v4183 = vrot.slane %v4044, 2
        %v4184 = vsel %vm933, %v4182, %v4183
        %v4185 = vrot.slane %v4045, 2
        %v4186 = vrot.slane %v4046, 2
        %v4187 = vsel %vm933, %v4185, %v4186
        %v4188 = vrot.slane %v4047, 2
        %v4189 = vrot.slane %v4048, 2
        %v4190 = vsel %vm933, %v4188, %v4189
        %v4191 = vrot.slane %v4049, 2
        %v4192 = vrot.slane %v4050, 2
        %v4193 = vsel %vm933, %v4191, %v4192
        %v4194 = vrot.slane %v4051, 2
        %v4195 = vrot.slane %v4052, 2
        %v4196 = vsel %vm933, %v4194, %v4195
        %v4197 = vrot.slane %v4053, 2
        %v4198 = vrot.slane %v4054, 2
        %v4199 = vsel %vm933, %v4197, %v4198
        %v4200 = vrot.slane %v4055, 2
        %v4201 = vrot.slane %v4056, 2
        %v4202 = vsel %vm933, %v4200, %v4201
        %v4203 = vrot.slane %v4057, 2
        %v4204 = vrot.slane %v4058, 2
        %v4205 = vsel %vm933, %v4203, %v4204
        %v4206 = vrot.slane %v4059, 2
        %v4207 = vrot.slane %v4060, 2
        %v4208 = vsel %vm933, %v4206, %v4207
        %v4209 = vrot.slane %v4061, 2
        %v4210 = vrot.slane %v4062, 2
        %v4211 = vsel %vm933, %v4209, %v4210
        %v4212 = vrot.slane %v4063, 2
        %v4213 = vrot.slane %v4064, 2
        %v4214 = vsel %vm933, %v4212, %v4213
        %v4215 = vrot.slane %v4065, 2
        %v4216 = vrot.slane %v4066, 2
        %v4217 = vsel %vm933, %v4215, %v4216
        %v4218 = vrot.slane %v4067, 2
        %v4219 = vrot.slane %v4068, 2
        %v4220 = vsel %vm933, %v4218, %v4219
        %v4221 = vrot.slane %v4069, 2
        %v4222 = vrot.slane %v4070, 2
        %v4223 = vsel %vm933, %v4221, %v4222
        %v4224 = vrot.slane %v4071, 2
        %v4225 = vrot.slane %v4072, 2
        %v4226 = vsel %vm933, %v4224, %v4225
        %v4227 = vrot.slane %v4073, 2
        %v4228 = vrot.slane %v4074, 2
        %v4229 = vsel %vm933, %v4227, %v4228
        %v4230 = vrot.slane %v4075, 2
        %v4231 = vrot.slane %v4076, 2
        %v4232 = vsel %vm933, %v4230, %v4231
        %v4233 = vrot.slane %v4077, 2
        %v4234 = vrot.slane %v4078, 2
        %v4235 = vsel %vm933, %v4233, %v4234
        %v4236 = vrot.slane %v4079, 2
        %v4237 = vrot.slane %v4080, 2
        %v4238 = vsel %vm933, %v4236, %v4237
        %v4239 = vrot.slane %v4081, 2
        %v4240 = vrot.slane %v4082, 2
        %v4241 = vsel %vm933, %v4239, %v4240
        %v4242 = vrot.slane %v4083, 2
        %v4243 = vrot.slane %v4084, 2
        %v4244 = vsel %vm933, %v4242, %v4243
        %v4277 = vadd.f32 %v3988, %v4151
        %v4278 = vadd.f32 %v3989, %v4154
        %v4279 = vadd.f32 %v3990, %v4157
        %v4280 = vadd.f32 %v3991, %v4160
        %v4281 = vadd.f32 %v3992, %v4163
        %v4282 = vadd.f32 %v3993, %v4166
        %v4283 = vadd.f32 %v3994, %v4169
        %v4284 = vadd.f32 %v3995, %v4172
        %v4285 = vadd.f32 %v3996, %v4175
        %v4286 = vadd.f32 %v3997, %v4178
        %v4287 = vadd.f32 %v3998, %v4181
        %v4288 = vadd.f32 %v3999, %v4184
        %v4289 = vadd.f32 %v4000, %v4187
        %v4290 = vadd.f32 %v4001, %v4190
        %v4291 = vadd.f32 %v4002, %v4193
        %v4292 = vadd.f32 %v4003, %v4196
        %v4293 = vadd.f32 %v4004, %v4199
        %v4294 = vadd.f32 %v4005, %v4202
        %v4295 = vadd.f32 %v4006, %v4205
        %v4296 = vadd.f32 %v4007, %v4208
        %v4297 = vadd.f32 %v4008, %v4211
        %v4298 = vadd.f32 %v4009, %v4214
        %v4299 = vadd.f32 %v4010, %v4217
        %v4300 = vadd.f32 %v4011, %v4220
        %v4301 = vadd.f32 %v4012, %v4223
        %v4302 = vadd.f32 %v4013, %v4226
        %v4303 = vadd.f32 %v4014, %v4229
        %v4304 = vadd.f32 %v4015, %v4232
        %v4305 = vadd.f32 %v4016, %v4235
        %v4306 = vadd.f32 %v4017, %v4238
        %v4307 = vadd.f32 %v4018, %v4241
        %v4308 = vadd.f32 %v4019, %v4244
        %v4309 = vperm.slane %v479, 2
        %v4310 = vmul.f32 %v397, %v4309
        %v4311 = vmul.f32 %v399, %v4309
        %v4312 = vmul.f32 %v401, %v4309
        %v4313 = vmul.f32 %v403, %v4309
        %v4314 = vmul.f32 %v405, %v4309
        %v4315 = vmul.f32 %v407, %v4309
        %v4316 = vmul.f32 %v409, %v4309
        %v4317 = vmul.f32 %v411, %v4309
        %v4318 = vmul.f32 %v417, %v4309
        %v4319 = vmul.f32 %v419, %v4309
        %v4320 = vmul.f32 %v421, %v4309
        %v4321 = vmul.f32 %v423, %v4309
        %v4322 = vmul.f32 %v425, %v4309
        %v4323 = vmul.f32 %v427, %v4309
        %v4324 = vmul.f32 %v429, %v4309
        %v4325 = vmul.f32 %v431, %v4309
        %v4326 = vmul.f32 %v437, %v4309
        %v4327 = vmul.f32 %v439, %v4309
        %v4328 = vmul.f32 %v441, %v4309
        %v4329 = vmul.f32 %v443, %v4309
        %v4330 = vmul.f32 %v445, %v4309
        %v4331 = vmul.f32 %v447, %v4309
        %v4332 = vmul.f32 %v449, %v4309
        %v4333 = vmul.f32 %v451, %v4309
        %v4334 = vmul.f32 %v457, %v4309
        %v4335 = vmul.f32 %v459, %v4309
        %v4336 = vmul.f32 %v461, %v4309
        %v4337 = vmul.f32 %v463, %v4309
        %v4338 = vmul.f32 %v465, %v4309
        %v4339 = vmul.f32 %v467, %v4309
        %v4340 = vmul.f32 %v469, %v4309
        %v4341 = vmul.f32 %v471, %v4309
        %v4342 = vadd.f32 %v4277, %v4310
        %v4343 = vadd.f32 %v4278, %v4311
        %v4344 = vadd.f32 %v4279, %v4312
        %v4345 = vadd.f32 %v4280, %v4313
        %v4346 = vadd.f32 %v4281, %v4314
        %v4347 = vadd.f32 %v4282, %v4315
        %v4348 = vadd.f32 %v4283, %v4316
        %v4349 = vadd.f32 %v4284, %v4317
        %v4350 = vadd.f32 %v4285, %v4318
        %v4351 = vadd.f32 %v4286, %v4319
        %v4352 = vadd.f32 %v4287, %v4320
        %v4353 = vadd.f32 %v4288, %v4321
        %v4354 = vadd.f32 %v4289, %v4322
        %v4355 = vadd.f32 %v4290, %v4323
        %v4356 = vadd.f32 %v4291, %v4324
        %v4357 = vadd.f32 %v4292, %v4325
        %v4358 = vadd.f32 %v4293, %v4326
        %v4359 = vadd.f32 %v4294, %v4327
        %v4360 = vadd.f32 %v4295, %v4328
        %v4361 = vadd.f32 %v4296, %v4329
        %v4362 = vadd.f32 %v4297, %v4330
        %v4363 = vadd.f32 %v4298, %v4331
        %v4364 = vadd.f32 %v4299, %v4332
        %v4365 = vadd.f32 %v4300, %v4333
        %v4366 = vadd.f32 %v4301, %v4334
        %v4367 = vadd.f32 %v4302, %v4335
        %v4368 = vadd.f32 %v4303, %v4336
        %v4369 = vadd.f32 %v4304, %v4337
        %v4370 = vadd.f32 %v4305, %v4338
        %v4371 = vadd.f32 %v4306, %v4339
        %v4372 = vadd.f32 %v4307, %v4340
        %v4373 = vadd.f32 %v4308, %v4341
        %v4374 = vperm.slane %v479, 3
        %v4375 = vmul.f32 %v397, %v4374
        %v4376 = vmul.f32 %v398, %v4374
        %v4377 = vmul.f32 %v399, %v4374
        %v4378 = vmul.f32 %v400, %v4374
        %v4379 = vmul.f32 %v401, %v4374
        %v4380 = vmul.f32 %v402, %v4374
        %v4381 = vmul.f32 %v403, %v4374
        %v4382 = vmul.f32 %v404, %v4374
        %v4383 = vmul.f32 %v405, %v4374
        %v4384 = vmul.f32 %v406, %v4374
        %v4385 = vmul.f32 %v407, %v4374
        %v4386 = vmul.f32 %v408, %v4374
        %v4387 = vmul.f32 %v409, %v4374
        %v4388 = vmul.f32 %v410, %v4374
        %v4389 = vmul.f32 %v411, %v4374
        %v4390 = vmul.f32 %v412, %v4374
        %v4391 = vmul.f32 %v417, %v4374
        %v4392 = vmul.f32 %v418, %v4374
        %v4393 = vmul.f32 %v419, %v4374
        %v4394 = vmul.f32 %v420, %v4374
        %v4395 = vmul.f32 %v421, %v4374
        %v4396 = vmul.f32 %v422, %v4374
        %v4397 = vmul.f32 %v423, %v4374
        %v4398 = vmul.f32 %v424, %v4374
        %v4399 = vmul.f32 %v425, %v4374
        %v4400 = vmul.f32 %v426, %v4374
        %v4401 = vmul.f32 %v427, %v4374
        %v4402 = vmul.f32 %v428, %v4374
        %v4403 = vmul.f32 %v429, %v4374
        %v4404 = vmul.f32 %v430, %v4374
        %v4405 = vmul.f32 %v431, %v4374
        %v4406 = vmul.f32 %v432, %v4374
        %v4407 = vmul.f32 %v437, %v4374
        %v4408 = vmul.f32 %v438, %v4374
        %v4409 = vmul.f32 %v439, %v4374
        %v4410 = vmul.f32 %v440, %v4374
        %v4411 = vmul.f32 %v441, %v4374
        %v4412 = vmul.f32 %v442, %v4374
        %v4413 = vmul.f32 %v443, %v4374
        %v4414 = vmul.f32 %v444, %v4374
        %v4415 = vmul.f32 %v445, %v4374
        %v4416 = vmul.f32 %v446, %v4374
        %v4417 = vmul.f32 %v447, %v4374
        %v4418 = vmul.f32 %v448, %v4374
        %v4419 = vmul.f32 %v449, %v4374
        %v4420 = vmul.f32 %v450, %v4374
        %v4421 = vmul.f32 %v451, %v4374
        %v4422 = vmul.f32 %v452, %v4374
        %v4423 = vmul.f32 %v457, %v4374
        %v4424 = vmul.f32 %v458, %v4374
        %v4425 = vmul.f32 %v459, %v4374
        %v4426 = vmul.f32 %v460, %v4374
        %v4427 = vmul.f32 %v461, %v4374
        %v4428 = vmul.f32 %v462, %v4374
        %v4429 = vmul.f32 %v463, %v4374
        %v4430 = vmul.f32 %v464, %v4374
        %v4431 = vmul.f32 %v465, %v4374
        %v4432 = vmul.f32 %v466, %v4374
        %v4433 = vmul.f32 %v467, %v4374
        %v4434 = vmul.f32 %v468, %v4374
        %v4435 = vmul.f32 %v469, %v4374
        %v4436 = vmul.f32 %v470, %v4374
        %v4437 = vmul.f32 %v471, %v4374
        %v4438 = vmul.f32 %v472, %v4374
        %v4503 = vrot.slane %v4375, 1
        %v4504 = vrot.slane %v4376, 1
        %v4505 = vsel %vm643, %v4503, %v4504
        %v4506 = vrot.slane %v4377, 1
        %v4507 = vrot.slane %v4378, 1
        %v4508 = vsel %vm643, %v4506, %v4507
        %v4509 = vrot.slane %v4379, 1
        %v4510 = vrot.slane %v4380, 1
        %v4511 = vsel %vm643, %v4509, %v4510
        %v4512 = vrot.slane %v4381, 1
        %v4513 = vrot.slane %v4382, 1
        %v4514 = vsel %vm643, %v4512, %v4513
        %v4515 = vrot.slane %v4383, 1
        %v4516 = vrot.slane %v4384, 1
        %v4517 = vsel %vm643, %v4515, %v4516
        %v4518 = vrot.slane %v4385, 1
        %v4519 = vrot.slane %v4386, 1
        %v4520 = vsel %vm643, %v4518, %v4519
        %v4521 = vrot.slane %v4387, 1
        %v4522 = vrot.slane %v4388, 1
        %v4523 = vsel %vm643, %v4521, %v4522
        %v4524 = vrot.slane %v4389, 1
        %v4525 = vrot.slane %v4390, 1
        %v4526 = vsel %vm643, %v4524, %v4525
        %v4527 = vrot.slane %v4391, 1
        %v4528 = vrot.slane %v4392, 1
        %v4529 = vsel %vm643, %v4527, %v4528
        %v4530 = vrot.slane %v4393, 1
        %v4531 = vrot.slane %v4394, 1
        %v4532 = vsel %vm643, %v4530, %v4531
        %v4533 = vrot.slane %v4395, 1
        %v4534 = vrot.slane %v4396, 1
        %v4535 = vsel %vm643, %v4533, %v4534
        %v4536 = vrot.slane %v4397, 1
        %v4537 = vrot.slane %v4398, 1
        %v4538 = vsel %vm643, %v4536, %v4537
        %v4539 = vrot.slane %v4399, 1
        %v4540 = vrot.slane %v4400, 1
        %v4541 = vsel %vm643, %v4539, %v4540
        %v4542 = vrot.slane %v4401, 1
        %v4543 = vrot.slane %v4402, 1
        %v4544 = vsel %vm643, %v4542, %v4543
        %v4545 = vrot.slane %v4403, 1
        %v4546 = vrot.slane %v4404, 1
        %v4547 = vsel %vm643, %v4545, %v4546
        %v4548 = vrot.slane %v4405, 1
        %v4549 = vrot.slane %v4406, 1
        %v4550 = vsel %vm643, %v4548, %v4549
        %v4551 = vrot.slane %v4407, 1
        %v4552 = vrot.slane %v4408, 1
        %v4553 = vsel %vm643, %v4551, %v4552
        %v4554 = vrot.slane %v4409, 1
        %v4555 = vrot.slane %v4410, 1
        %v4556 = vsel %vm643, %v4554, %v4555
        %v4557 = vrot.slane %v4411, 1
        %v4558 = vrot.slane %v4412, 1
        %v4559 = vsel %vm643, %v4557, %v4558
        %v4560 = vrot.slane %v4413, 1
        %v4561 = vrot.slane %v4414, 1
        %v4562 = vsel %vm643, %v4560, %v4561
        %v4563 = vrot.slane %v4415, 1
        %v4564 = vrot.slane %v4416, 1
        %v4565 = vsel %vm643, %v4563, %v4564
        %v4566 = vrot.slane %v4417, 1
        %v4567 = vrot.slane %v4418, 1
        %v4568 = vsel %vm643, %v4566, %v4567
        %v4569 = vrot.slane %v4419, 1
        %v4570 = vrot.slane %v4420, 1
        %v4571 = vsel %vm643, %v4569, %v4570
        %v4572 = vrot.slane %v4421, 1
        %v4573 = vrot.slane %v4422, 1
        %v4574 = vsel %vm643, %v4572, %v4573
        %v4575 = vrot.slane %v4423, 1
        %v4576 = vrot.slane %v4424, 1
        %v4577 = vsel %vm643, %v4575, %v4576
        %v4578 = vrot.slane %v4425, 1
        %v4579 = vrot.slane %v4426, 1
        %v4580 = vsel %vm643, %v4578, %v4579
        %v4581 = vrot.slane %v4427, 1
        %v4582 = vrot.slane %v4428, 1
        %v4583 = vsel %vm643, %v4581, %v4582
        %v4584 = vrot.slane %v4429, 1
        %v4585 = vrot.slane %v4430, 1
        %v4586 = vsel %vm643, %v4584, %v4585
        %v4587 = vrot.slane %v4431, 1
        %v4588 = vrot.slane %v4432, 1
        %v4589 = vsel %vm643, %v4587, %v4588
        %v4590 = vrot.slane %v4433, 1
        %v4591 = vrot.slane %v4434, 1
        %v4592 = vsel %vm643, %v4590, %v4591
        %v4593 = vrot.slane %v4435, 1
        %v4594 = vrot.slane %v4436, 1
        %v4595 = vsel %vm643, %v4593, %v4594
        %v4596 = vrot.slane %v4437, 1
        %v4597 = vrot.slane %v4438, 1
        %v4598 = vsel %vm643, %v4596, %v4597
        %v4631 = vadd.f32 %v4342, %v4505
        %v4632 = vadd.f32 %v4343, %v4508
        %v4633 = vadd.f32 %v4344, %v4511
        %v4634 = vadd.f32 %v4345, %v4514
        %v4635 = vadd.f32 %v4346, %v4517
        %v4636 = vadd.f32 %v4347, %v4520
        %v4637 = vadd.f32 %v4348, %v4523
        %v4638 = vadd.f32 %v4349, %v4526
        %v4639 = vadd.f32 %v4350, %v4529
        %v4640 = vadd.f32 %v4351, %v4532
        %v4641 = vadd.f32 %v4352, %v4535
        %v4642 = vadd.f32 %v4353, %v4538
        %v4643 = vadd.f32 %v4354, %v4541
        %v4644 = vadd.f32 %v4355, %v4544
        %v4645 = vadd.f32 %v4356, %v4547
        %v4646 = vadd.f32 %v4357, %v4550
        %v4647 = vadd.f32 %v4358, %v4553
        %v4648 = vadd.f32 %v4359, %v4556
        %v4649 = vadd.f32 %v4360, %v4559
        %v4650 = vadd.f32 %v4361, %v4562
        %v4651 = vadd.f32 %v4362, %v4565
        %v4652 = vadd.f32 %v4363, %v4568
        %v4653 = vadd.f32 %v4364, %v4571
        %v4654 = vadd.f32 %v4365, %v4574
        %v4655 = vadd.f32 %v4366, %v4577
        %v4656 = vadd.f32 %v4367, %v4580
        %v4657 = vadd.f32 %v4368, %v4583
        %v4658 = vadd.f32 %v4369, %v4586
        %v4659 = vadd.f32 %v4370, %v4589
        %v4660 = vadd.f32 %v4371, %v4592
        %v4661 = vadd.f32 %v4372, %v4595
        %v4662 = vadd.f32 %v4373, %v4598
        %v4663 = vperm.slane %v479, 4
        %v4664 = vmul.f32 %v397, %v4663
        %v4665 = vmul.f32 %v398, %v4663
        %v4666 = vmul.f32 %v399, %v4663
        %v4667 = vmul.f32 %v400, %v4663
        %v4668 = vmul.f32 %v401, %v4663
        %v4669 = vmul.f32 %v402, %v4663
        %v4670 = vmul.f32 %v403, %v4663
        %v4671 = vmul.f32 %v404, %v4663
        %v4672 = vmul.f32 %v405, %v4663
        %v4673 = vmul.f32 %v406, %v4663
        %v4674 = vmul.f32 %v407, %v4663
        %v4675 = vmul.f32 %v408, %v4663
        %v4676 = vmul.f32 %v409, %v4663
        %v4677 = vmul.f32 %v410, %v4663
        %v4678 = vmul.f32 %v411, %v4663
        %v4679 = vmul.f32 %v412, %v4663
        %v4680 = vmul.f32 %v417, %v4663
        %v4681 = vmul.f32 %v418, %v4663
        %v4682 = vmul.f32 %v419, %v4663
        %v4683 = vmul.f32 %v420, %v4663
        %v4684 = vmul.f32 %v421, %v4663
        %v4685 = vmul.f32 %v422, %v4663
        %v4686 = vmul.f32 %v423, %v4663
        %v4687 = vmul.f32 %v424, %v4663
        %v4688 = vmul.f32 %v425, %v4663
        %v4689 = vmul.f32 %v426, %v4663
        %v4690 = vmul.f32 %v427, %v4663
        %v4691 = vmul.f32 %v428, %v4663
        %v4692 = vmul.f32 %v429, %v4663
        %v4693 = vmul.f32 %v430, %v4663
        %v4694 = vmul.f32 %v431, %v4663
        %v4695 = vmul.f32 %v432, %v4663
        %v4696 = vmul.f32 %v437, %v4663
        %v4697 = vmul.f32 %v438, %v4663
        %v4698 = vmul.f32 %v439, %v4663
        %v4699 = vmul.f32 %v440, %v4663
        %v4700 = vmul.f32 %v441, %v4663
        %v4701 = vmul.f32 %v442, %v4663
        %v4702 = vmul.f32 %v443, %v4663
        %v4703 = vmul.f32 %v444, %v4663
        %v4704 = vmul.f32 %v445, %v4663
        %v4705 = vmul.f32 %v446, %v4663
        %v4706 = vmul.f32 %v447, %v4663
        %v4707 = vmul.f32 %v448, %v4663
        %v4708 = vmul.f32 %v449, %v4663
        %v4709 = vmul.f32 %v450, %v4663
        %v4710 = vmul.f32 %v451, %v4663
        %v4711 = vmul.f32 %v452, %v4663
        %v4712 = vmul.f32 %v457, %v4663
        %v4713 = vmul.f32 %v458, %v4663
        %v4714 = vmul.f32 %v459, %v4663
        %v4715 = vmul.f32 %v460, %v4663
        %v4716 = vmul.f32 %v461, %v4663
        %v4717 = vmul.f32 %v462, %v4663
        %v4718 = vmul.f32 %v463, %v4663
        %v4719 = vmul.f32 %v464, %v4663
        %v4720 = vmul.f32 %v465, %v4663
        %v4721 = vmul.f32 %v466, %v4663
        %v4722 = vmul.f32 %v467, %v4663
        %v4723 = vmul.f32 %v468, %v4663
        %v4724 = vmul.f32 %v469, %v4663
        %v4725 = vmul.f32 %v470, %v4663
        %v4726 = vmul.f32 %v471, %v4663
        %v4727 = vmul.f32 %v472, %v4663
        %v4792 = vrot.slane %v4664, 2
        %v4793 = vrot.slane %v4665, 2
        %v4794 = vsel %vm933, %v4792, %v4793
        %v4795 = vrot.slane %v4666, 2
        %v4796 = vrot.slane %v4667, 2
        %v4797 = vsel %vm933, %v4795, %v4796
        %v4798 = vrot.slane %v4668, 2
        %v4799 = vrot.slane %v4669, 2
        %v4800 = vsel %vm933, %v4798, %v4799
        %v4801 = vrot.slane %v4670, 2
        %v4802 = vrot.slane %v4671, 2
        %v4803 = vsel %vm933, %v4801, %v4802
        %v4804 = vrot.slane %v4672, 2
        %v4805 = vrot.slane %v4673, 2
        %v4806 = vsel %vm933, %v4804, %v4805
        %v4807 = vrot.slane %v4674, 2
        %v4808 = vrot.slane %v4675, 2
        %v4809 = vsel %vm933, %v4807, %v4808
        %v4810 = vrot.slane %v4676, 2
        %v4811 = vrot.slane %v4677, 2
        %v4812 = vsel %vm933, %v4810, %v4811
        %v4813 = vrot.slane %v4678, 2
        %v4814 = vrot.slane %v4679, 2
        %v4815 = vsel %vm933, %v4813, %v4814
        %v4816 = vrot.slane %v4680, 2
        %v4817 = vrot.slane %v4681, 2
        %v4818 = vsel %vm933, %v4816, %v4817
        %v4819 = vrot.slane %v4682, 2
        %v4820 = vrot.slane %v4683, 2
        %v4821 = vsel %vm933, %v4819, %v4820
        %v4822 = vrot.slane %v4684, 2
        %v4823 = vrot.slane %v4685, 2
        %v4824 = vsel %vm933, %v4822, %v4823
        %v4825 = vrot.slane %v4686, 2
        %v4826 = vrot.slane %v4687, 2
        %v4827 = vsel %vm933, %v4825, %v4826
        %v4828 = vrot.slane %v4688, 2
        %v4829 = vrot.slane %v4689, 2
        %v4830 = vsel %vm933, %v4828, %v4829
        %v4831 = vrot.slane %v4690, 2
        %v4832 = vrot.slane %v4691, 2
        %v4833 = vsel %vm933, %v4831, %v4832
        %v4834 = vrot.slane %v4692, 2
        %v4835 = vrot.slane %v4693, 2
        %v4836 = vsel %vm933, %v4834, %v4835
        %v4837 = vrot.slane %v4694, 2
        %v4838 = vrot.slane %v4695, 2
        %v4839 = vsel %vm933, %v4837, %v4838
        %v4840 = vrot.slane %v4696, 2
        %v4841 = vrot.slane %v4697, 2
        %v4842 = vsel %vm933, %v4840, %v4841
        %v4843 = vrot.slane %v4698, 2
        %v4844 = vrot.slane %v4699, 2
        %v4845 = vsel %vm933, %v4843, %v4844
        %v4846 = vrot.slane %v4700, 2
        %v4847 = vrot.slane %v4701, 2
        %v4848 = vsel %vm933, %v4846, %v4847
        %v4849 = vrot.slane %v4702, 2
        %v4850 = vrot.slane %v4703, 2
        %v4851 = vsel %vm933, %v4849, %v4850
        %v4852 = vrot.slane %v4704, 2
        %v4853 = vrot.slane %v4705, 2
        %v4854 = vsel %vm933, %v4852, %v4853
        %v4855 = vrot.slane %v4706, 2
        %v4856 = vrot.slane %v4707, 2
        %v4857 = vsel %vm933, %v4855, %v4856
        %v4858 = vrot.slane %v4708, 2
        %v4859 = vrot.slane %v4709, 2
        %v4860 = vsel %vm933, %v4858, %v4859
        %v4861 = vrot.slane %v4710, 2
        %v4862 = vrot.slane %v4711, 2
        %v4863 = vsel %vm933, %v4861, %v4862
        %v4864 = vrot.slane %v4712, 2
        %v4865 = vrot.slane %v4713, 2
        %v4866 = vsel %vm933, %v4864, %v4865
        %v4867 = vrot.slane %v4714, 2
        %v4868 = vrot.slane %v4715, 2
        %v4869 = vsel %vm933, %v4867, %v4868
        %v4870 = vrot.slane %v4716, 2
        %v4871 = vrot.slane %v4717, 2
        %v4872 = vsel %vm933, %v4870, %v4871
        %v4873 = vrot.slane %v4718, 2
        %v4874 = vrot.slane %v4719, 2
        %v4875 = vsel %vm933, %v4873, %v4874
        %v4876 = vrot.slane %v4720, 2
        %v4877 = vrot.slane %v4721, 2
        %v4878 = vsel %vm933, %v4876, %v4877
        %v4879 = vrot.slane %v4722, 2
        %v4880 = vrot.slane %v4723, 2
        %v4881 = vsel %vm933, %v4879, %v4880
        %v4882 = vrot.slane %v4724, 2
        %v4883 = vrot.slane %v4725, 2
        %v4884 = vsel %vm933, %v4882, %v4883
        %v4885 = vrot.slane %v4726, 2
        %v4886 = vrot.slane %v4727, 2
        %v4887 = vsel %vm933, %v4885, %v4886
        %v4920 = vadd.f32 %v4631, %v4794
        %v4921 = vadd.f32 %v4632, %v4797
        %v4922 = vadd.f32 %v4633, %v4800
        %v4923 = vadd.f32 %v4634, %v4803
        %v4924 = vadd.f32 %v4635, %v4806
        %v4925 = vadd.f32 %v4636, %v4809
        %v4926 = vadd.f32 %v4637, %v4812
        %v4927 = vadd.f32 %v4638, %v4815
        %v4928 = vadd.f32 %v4639, %v4818
        %v4929 = vadd.f32 %v4640, %v4821
        %v4930 = vadd.f32 %v4641, %v4824
        %v4931 = vadd.f32 %v4642, %v4827
        %v4932 = vadd.f32 %v4643, %v4830
        %v4933 = vadd.f32 %v4644, %v4833
        %v4934 = vadd.f32 %v4645, %v4836
        %v4935 = vadd.f32 %v4646, %v4839
        %v4936 = vadd.f32 %v4647, %v4842
        %v4937 = vadd.f32 %v4648, %v4845
        %v4938 = vadd.f32 %v4649, %v4848
        %v4939 = vadd.f32 %v4650, %v4851
        %v4940 = vadd.f32 %v4651, %v4854
        %v4941 = vadd.f32 %v4652, %v4857
        %v4942 = vadd.f32 %v4653, %v4860
        %v4943 = vadd.f32 %v4654, %v4863
        %v4944 = vadd.f32 %v4655, %v4866
        %v4945 = vadd.f32 %v4656, %v4869
        %v4946 = vadd.f32 %v4657, %v4872
        %v4947 = vadd.f32 %v4658, %v4875
        %v4948 = vadd.f32 %v4659, %v4878
        %v4949 = vadd.f32 %v4660, %v4881
        %v4950 = vadd.f32 %v4661, %v4884
        %v4951 = vadd.f32 %v4662, %v4887
        %v4952 = vperm.slane %v479, 5
        %v4953 = vmul.f32 %v399, %v4952
        %v4954 = vmul.f32 %v401, %v4952
        %v4955 = vmul.f32 %v403, %v4952
        %v4956 = vmul.f32 %v405, %v4952
        %v4957 = vmul.f32 %v407, %v4952
        %v4958 = vmul.f32 %v409, %v4952
        %v4959 = vmul.f32 %v411, %v4952
        %v4960 = vmul.f32 %v413, %v4952
        %v4961 = vmul.f32 %v419, %v4952
        %v4962 = vmul.f32 %v421, %v4952
        %v4963 = vmul.f32 %v423, %v4952
        %v4964 = vmul.f32 %v425, %v4952
        %v4965 = vmul.f32 %v427, %v4952
        %v4966 = vmul.f32 %v429, %v4952
        %v4967 = vmul.f32 %v431, %v4952
        %v4968 = vmul.f32 %v433, %v4952
        %v4969 = vmul.f32 %v439, %v4952
        %v4970 = vmul.f32 %v441, %v4952
        %v4971 = vmul.f32 %v443, %v4952
        %v4972 = vmul.f32 %v445, %v4952
        %v4973 = vmul.f32 %v447, %v4952
        %v4974 = vmul.f32 %v449, %v4952
        %v4975 = vmul.f32 %v451, %v4952
        %v4976 = vmul.f32 %v453, %v4952
        %v4977 = vmul.f32 %v459, %v4952
        %v4978 = vmul.f32 %v461, %v4952
        %v4979 = vmul.f32 %v463, %v4952
        %v4980 = vmul.f32 %v465, %v4952
        %v4981 = vmul.f32 %v467, %v4952
        %v4982 = vmul.f32 %v469, %v4952
        %v4983 = vmul.f32 %v471, %v4952
        %v4984 = vmul.f32 %v473, %v4952
        %v4985 = vadd.f32 %v4920, %v4953
        %v4986 = vadd.f32 %v4921, %v4954
        %v4987 = vadd.f32 %v4922, %v4955
        %v4988 = vadd.f32 %v4923, %v4956
        %v4989 = vadd.f32 %v4924, %v4957
        %v4990 = vadd.f32 %v4925, %v4958
        %v4991 = vadd.f32 %v4926, %v4959
        %v4992 = vadd.f32 %v4927, %v4960
        %v4993 = vadd.f32 %v4928, %v4961
        %v4994 = vadd.f32 %v4929, %v4962
        %v4995 = vadd.f32 %v4930, %v4963
        %v4996 = vadd.f32 %v4931, %v4964
        %v4997 = vadd.f32 %v4932, %v4965
        %v4998 = vadd.f32 %v4933, %v4966
        %v4999 = vadd.f32 %v4934, %v4967
        %v5000 = vadd.f32 %v4935, %v4968
        %v5001 = vadd.f32 %v4936, %v4969
        %v5002 = vadd.f32 %v4937, %v4970
        %v5003 = vadd.f32 %v4938, %v4971
        %v5004 = vadd.f32 %v4939, %v4972
        %v5005 = vadd.f32 %v4940, %v4973
        %v5006 = vadd.f32 %v4941, %v4974
        %v5007 = vadd.f32 %v4942, %v4975
        %v5008 = vadd.f32 %v4943, %v4976
        %v5009 = vadd.f32 %v4944, %v4977
        %v5010 = vadd.f32 %v4945, %v4978
        %v5011 = vadd.f32 %v4946, %v4979
        %v5012 = vadd.f32 %v4947, %v4980
        %v5013 = vadd.f32 %v4948, %v4981
        %v5014 = vadd.f32 %v4949, %v4982
        %v5015 = vadd.f32 %v4950, %v4983
        %v5016 = vadd.f32 %v4951, %v4984
        %v5017 = vperm.slane %v479, 6
        %v5018 = vmul.f32 %v399, %v5017
        %v5019 = vmul.f32 %v400, %v5017
        %v5020 = vmul.f32 %v401, %v5017
        %v5021 = vmul.f32 %v402, %v5017
        %v5022 = vmul.f32 %v403, %v5017
        %v5023 = vmul.f32 %v404, %v5017
        %v5024 = vmul.f32 %v405, %v5017
        %v5025 = vmul.f32 %v406, %v5017
        %v5026 = vmul.f32 %v407, %v5017
        %v5027 = vmul.f32 %v408, %v5017
        %v5028 = vmul.f32 %v409, %v5017
        %v5029 = vmul.f32 %v410, %v5017
        %v5030 = vmul.f32 %v411, %v5017
        %v5031 = vmul.f32 %v412, %v5017
        %v5032 = vmul.f32 %v413, %v5017
        %v5033 = vmul.f32 %v414, %v5017
        %v5034 = vmul.f32 %v419, %v5017
        %v5035 = vmul.f32 %v420, %v5017
        %v5036 = vmul.f32 %v421, %v5017
        %v5037 = vmul.f32 %v422, %v5017
        %v5038 = vmul.f32 %v423, %v5017
        %v5039 = vmul.f32 %v424, %v5017
        %v5040 = vmul.f32 %v425, %v5017
        %v5041 = vmul.f32 %v426, %v5017
        %v5042 = vmul.f32 %v427, %v5017
        %v5043 = vmul.f32 %v428, %v5017
        %v5044 = vmul.f32 %v429, %v5017
        %v5045 = vmul.f32 %v430, %v5017
        %v5046 = vmul.f32 %v431, %v5017
        %v5047 = vmul.f32 %v432, %v5017
        %v5048 = vmul.f32 %v433, %v5017
        %v5049 = vmul.f32 %v434, %v5017
        %v5050 = vmul.f32 %v439, %v5017
        %v5051 = vmul.f32 %v440, %v5017
        %v5052 = vmul.f32 %v441, %v5017
        %v5053 = vmul.f32 %v442, %v5017
        %v5054 = vmul.f32 %v443, %v5017
        %v5055 = vmul.f32 %v444, %v5017
        %v5056 = vmul.f32 %v445, %v5017
        %v5057 = vmul.f32 %v446, %v5017
        %v5058 = vmul.f32 %v447, %v5017
        %v5059 = vmul.f32 %v448, %v5017
        %v5060 = vmul.f32 %v449, %v5017
        %v5061 = vmul.f32 %v450, %v5017
        %v5062 = vmul.f32 %v451, %v5017
        %v5063 = vmul.f32 %v452, %v5017
        %v5064 = vmul.f32 %v453, %v5017
        %v5065 = vmul.f32 %v454, %v5017
        %v5066 = vmul.f32 %v459, %v5017
        %v5067 = vmul.f32 %v460, %v5017
        %v5068 = vmul.f32 %v461, %v5017
        %v5069 = vmul.f32 %v462, %v5017
        %v5070 = vmul.f32 %v463, %v5017
        %v5071 = vmul.f32 %v464, %v5017
        %v5072 = vmul.f32 %v465, %v5017
        %v5073 = vmul.f32 %v466, %v5017
        %v5074 = vmul.f32 %v467, %v5017
        %v5075 = vmul.f32 %v468, %v5017
        %v5076 = vmul.f32 %v469, %v5017
        %v5077 = vmul.f32 %v470, %v5017
        %v5078 = vmul.f32 %v471, %v5017
        %v5079 = vmul.f32 %v472, %v5017
        %v5080 = vmul.f32 %v473, %v5017
        %v5081 = vmul.f32 %v474, %v5017
        %v5146 = vrot.slane %v5018, 1
        %v5147 = vrot.slane %v5019, 1
        %v5148 = vsel %vm643, %v5146, %v5147
        %v5149 = vrot.slane %v5020, 1
        %v5150 = vrot.slane %v5021, 1
        %v5151 = vsel %vm643, %v5149, %v5150
        %v5152 = vrot.slane %v5022, 1
        %v5153 = vrot.slane %v5023, 1
        %v5154 = vsel %vm643, %v5152, %v5153
        %v5155 = vrot.slane %v5024, 1
        %v5156 = vrot.slane %v5025, 1
        %v5157 = vsel %vm643, %v5155, %v5156
        %v5158 = vrot.slane %v5026, 1
        %v5159 = vrot.slane %v5027, 1
        %v5160 = vsel %vm643, %v5158, %v5159
        %v5161 = vrot.slane %v5028, 1
        %v5162 = vrot.slane %v5029, 1
        %v5163 = vsel %vm643, %v5161, %v5162
        %v5164 = vrot.slane %v5030, 1
        %v5165 = vrot.slane %v5031, 1
        %v5166 = vsel %vm643, %v5164, %v5165
        %v5167 = vrot.slane %v5032, 1
        %v5168 = vrot.slane %v5033, 1
        %v5169 = vsel %vm643, %v5167, %v5168
        %v5170 = vrot.slane %v5034, 1
        %v5171 = vrot.slane %v5035, 1
        %v5172 = vsel %vm643, %v5170, %v5171
        %v5173 = vrot.slane %v5036, 1
        %v5174 = vrot.slane %v5037, 1
        %v5175 = vsel %vm643, %v5173, %v5174
        %v5176 = vrot.slane %v5038, 1
        %v5177 = vrot.slane %v5039, 1
        %v5178 = vsel %vm643, %v5176, %v5177
        %v5179 = vrot.slane %v5040, 1
        %v5180 = vrot.slane %v5041, 1
        %v5181 = vsel %vm643, %v5179, %v5180
        %v5182 = vrot.slane %v5042, 1
        %v5183 = vrot.slane %v5043, 1
        %v5184 = vsel %vm643, %v5182, %v5183
        %v5185 = vrot.slane %v5044, 1
        %v5186 = vrot.slane %v5045, 1
        %v5187 = vsel %vm643, %v5185, %v5186
        %v5188 = vrot.slane %v5046, 1
        %v5189 = vrot.slane %v5047, 1
        %v5190 = vsel %vm643, %v5188, %v5189
        %v5191 = vrot.slane %v5048, 1
        %v5192 = vrot.slane %v5049, 1
        %v5193 = vsel %vm643, %v5191, %v5192
        %v5194 = vrot.slane %v5050, 1
        %v5195 = vrot.slane %v5051, 1
        %v5196 = vsel %vm643, %v5194, %v5195
        %v5197 = vrot.slane %v5052, 1
        %v5198 = vrot.slane %v5053, 1
        %v5199 = vsel %vm643, %v5197, %v5198
        %v5200 = vrot.slane %v5054, 1
        %v5201 = vrot.slane %v5055, 1
        %v5202 = vsel %vm643, %v5200, %v5201
        %v5203 = vrot.slane %v5056, 1
        %v5204 = vrot.slane %v5057, 1
        %v5205 = vsel %vm643, %v5203, %v5204
        %v5206 = vrot.slane %v5058, 1
        %v5207 = vrot.slane %v5059, 1
        %v5208 = vsel %vm643, %v5206, %v5207
        %v5209 = vrot.slane %v5060, 1
        %v5210 = vrot.slane %v5061, 1
        %v5211 = vsel %vm643, %v5209, %v5210
        %v5212 = vrot.slane %v5062, 1
        %v5213 = vrot.slane %v5063, 1
        %v5214 = vsel %vm643, %v5212, %v5213
        %v5215 = vrot.slane %v5064, 1
        %v5216 = vrot.slane %v5065, 1
        %v5217 = vsel %vm643, %v5215, %v5216
        %v5218 = vrot.slane %v5066, 1
        %v5219 = vrot.slane %v5067, 1
        %v5220 = vsel %vm643, %v5218, %v5219
        %v5221 = vrot.slane %v5068, 1
        %v5222 = vrot.slane %v5069, 1
        %v5223 = vsel %vm643, %v5221, %v5222
        %v5224 = vrot.slane %v5070, 1
        %v5225 = vrot.slane %v5071, 1
        %v5226 = vsel %vm643, %v5224, %v5225
        %v5227 = vrot.slane %v5072, 1
        %v5228 = vrot.slane %v5073, 1
        %v5229 = vsel %vm643, %v5227, %v5228
        %v5230 = vrot.slane %v5074, 1
        %v5231 = vrot.slane %v5075, 1
        %v5232 = vsel %vm643, %v5230, %v5231
        %v5233 = vrot.slane %v5076, 1
        %v5234 = vrot.slane %v5077, 1
        %v5235 = vsel %vm643, %v5233, %v5234
        %v5236 = vrot.slane %v5078, 1
        %v5237 = vrot.slane %v5079, 1
        %v5238 = vsel %vm643, %v5236, %v5237
        %v5239 = vrot.slane %v5080, 1
        %v5240 = vrot.slane %v5081, 1
        %v5241 = vsel %vm643, %v5239, %v5240
        %v5274 = vadd.f32 %v4985, %v5148
        %v5275 = vadd.f32 %v4986, %v5151
        %v5276 = vadd.f32 %v4987, %v5154
        %v5277 = vadd.f32 %v4988, %v5157
        %v5278 = vadd.f32 %v4989, %v5160
        %v5279 = vadd.f32 %v4990, %v5163
        %v5280 = vadd.f32 %v4991, %v5166
        %v5281 = vadd.f32 %v4992, %v5169
        %v5282 = vadd.f32 %v4993, %v5172
        %v5283 = vadd.f32 %v4994, %v5175
        %v5284 = vadd.f32 %v4995, %v5178
        %v5285 = vadd.f32 %v4996, %v5181
        %v5286 = vadd.f32 %v4997, %v5184
        %v5287 = vadd.f32 %v4998, %v5187
        %v5288 = vadd.f32 %v4999, %v5190
        %v5289 = vadd.f32 %v5000, %v5193
        %v5290 = vadd.f32 %v5001, %v5196
        %v5291 = vadd.f32 %v5002, %v5199
        %v5292 = vadd.f32 %v5003, %v5202
        %v5293 = vadd.f32 %v5004, %v5205
        %v5294 = vadd.f32 %v5005, %v5208
        %v5295 = vadd.f32 %v5006, %v5211
        %v5296 = vadd.f32 %v5007, %v5214
        %v5297 = vadd.f32 %v5008, %v5217
        %v5298 = vadd.f32 %v5009, %v5220
        %v5299 = vadd.f32 %v5010, %v5223
        %v5300 = vadd.f32 %v5011, %v5226
        %v5301 = vadd.f32 %v5012, %v5229
        %v5302 = vadd.f32 %v5013, %v5232
        %v5303 = vadd.f32 %v5014, %v5235
        %v5304 = vadd.f32 %v5015, %v5238
        %v5305 = vadd.f32 %v5016, %v5241
        %v5306 = vperm.slane %v479, 7
        %v5307 = vmul.f32 %v399, %v5306
        %v5308 = vmul.f32 %v400, %v5306
        %v5309 = vmul.f32 %v401, %v5306
        %v5310 = vmul.f32 %v402, %v5306
        %v5311 = vmul.f32 %v403, %v5306
        %v5312 = vmul.f32 %v404, %v5306
        %v5313 = vmul.f32 %v405, %v5306
        %v5314 = vmul.f32 %v406, %v5306
        %v5315 = vmul.f32 %v407, %v5306
        %v5316 = vmul.f32 %v408, %v5306
        %v5317 = vmul.f32 %v409, %v5306
        %v5318 = vmul.f32 %v410, %v5306
        %v5319 = vmul.f32 %v411, %v5306
        %v5320 = vmul.f32 %v412, %v5306
        %v5321 = vmul.f32 %v413, %v5306
        %v5322 = vmul.f32 %v414, %v5306
        %v5323 = vmul.f32 %v419, %v5306
        %v5324 = vmul.f32 %v420, %v5306
        %v5325 = vmul.f32 %v421, %v5306
        %v5326 = vmul.f32 %v422, %v5306
        %v5327 = vmul.f32 %v423, %v5306
        %v5328 = vmul.f32 %v424, %v5306
        %v5329 = vmul.f32 %v425, %v5306
        %v5330 = vmul.f32 %v426, %v5306
        %v5331 = vmul.f32 %v427, %v5306
        %v5332 = vmul.f32 %v428, %v5306
        %v5333 = vmul.f32 %v429, %v5306
        %v5334 = vmul.f32 %v430, %v5306
        %v5335 = vmul.f32 %v431, %v5306
        %v5336 = vmul.f32 %v432, %v5306
        %v5337 = vmul.f32 %v433, %v5306
        %v5338 = vmul.f32 %v434, %v5306
        %v5339 = vmul.f32 %v439, %v5306
        %v5340 = vmul.f32 %v440, %v5306
        %v5341 = vmul.f32 %v441, %v5306
        %v5342 = vmul.f32 %v442, %v5306
        %v5343 = vmul.f32 %v443, %v5306
        %v5344 = vmul.f32 %v444, %v5306
        %v5345 = vmul.f32 %v445, %v5306
        %v5346 = vmul.f32 %v446, %v5306
        %v5347 = vmul.f32 %v447, %v5306
        %v5348 = vmul.f32 %v448, %v5306
        %v5349 = vmul.f32 %v449, %v5306
        %v5350 = vmul.f32 %v450, %v5306
        %v5351 = vmul.f32 %v451, %v5306
        %v5352 = vmul.f32 %v452, %v5306
        %v5353 = vmul.f32 %v453, %v5306
        %v5354 = vmul.f32 %v454, %v5306
        %v5355 = vmul.f32 %v459, %v5306
        %v5356 = vmul.f32 %v460, %v5306
        %v5357 = vmul.f32 %v461, %v5306
        %v5358 = vmul.f32 %v462, %v5306
        %v5359 = vmul.f32 %v463, %v5306
        %v5360 = vmul.f32 %v464, %v5306
        %v5361 = vmul.f32 %v465, %v5306
        %v5362 = vmul.f32 %v466, %v5306
        %v5363 = vmul.f32 %v467, %v5306
        %v5364 = vmul.f32 %v468, %v5306
        %v5365 = vmul.f32 %v469, %v5306
        %v5366 = vmul.f32 %v470, %v5306
        %v5367 = vmul.f32 %v471, %v5306
        %v5368 = vmul.f32 %v472, %v5306
        %v5369 = vmul.f32 %v473, %v5306
        %v5370 = vmul.f32 %v474, %v5306
        %v5435 = vrot.slane %v5307, 2
        %v5436 = vrot.slane %v5308, 2
        %v5437 = vsel %vm933, %v5435, %v5436
        %v5438 = vrot.slane %v5309, 2
        %v5439 = vrot.slane %v5310, 2
        %v5440 = vsel %vm933, %v5438, %v5439
        %v5441 = vrot.slane %v5311, 2
        %v5442 = vrot.slane %v5312, 2
        %v5443 = vsel %vm933, %v5441, %v5442
        %v5444 = vrot.slane %v5313, 2
        %v5445 = vrot.slane %v5314, 2
        %v5446 = vsel %vm933, %v5444, %v5445
        %v5447 = vrot.slane %v5315, 2
        %v5448 = vrot.slane %v5316, 2
        %v5449 = vsel %vm933, %v5447, %v5448
        %v5450 = vrot.slane %v5317, 2
        %v5451 = vrot.slane %v5318, 2
        %v5452 = vsel %vm933, %v5450, %v5451
        %v5453 = vrot.slane %v5319, 2
        %v5454 = vrot.slane %v5320, 2
        %v5455 = vsel %vm933, %v5453, %v5454
        %v5456 = vrot.slane %v5321, 2
        %v5457 = vrot.slane %v5322, 2
        %v5458 = vsel %vm933, %v5456, %v5457
        %v5459 = vrot.slane %v5323, 2
        %v5460 = vrot.slane %v5324, 2
        %v5461 = vsel %vm933, %v5459, %v5460
        %v5462 = vrot.slane %v5325, 2
        %v5463 = vrot.slane %v5326, 2
        %v5464 = vsel %vm933, %v5462, %v5463
        %v5465 = vrot.slane %v5327, 2
        %v5466 = vrot.slane %v5328, 2
        %v5467 = vsel %vm933, %v5465, %v5466
        %v5468 = vrot.slane %v5329, 2
        %v5469 = vrot.slane %v5330, 2
        %v5470 = vsel %vm933, %v5468, %v5469
        %v5471 = vrot.slane %v5331, 2
        %v5472 = vrot.slane %v5332, 2
        %v5473 = vsel %vm933, %v5471, %v5472
        %v5474 = vrot.slane %v5333, 2
        %v5475 = vrot.slane %v5334, 2
        %v5476 = vsel %vm933, %v5474, %v5475
        %v5477 = vrot.slane %v5335, 2
        %v5478 = vrot.slane %v5336, 2
        %v5479 = vsel %vm933, %v5477, %v5478
        %v5480 = vrot.slane %v5337, 2
        %v5481 = vrot.slane %v5338, 2
        %v5482 = vsel %vm933, %v5480, %v5481
        %v5483 = vrot.slane %v5339, 2
        %v5484 = vrot.slane %v5340, 2
        %v5485 = vsel %vm933, %v5483, %v5484
        %v5486 = vrot.slane %v5341, 2
        %v5487 = vrot.slane %v5342, 2
        %v5488 = vsel %vm933, %v5486, %v5487
        %v5489 = vrot.slane %v5343, 2
        %v5490 = vrot.slane %v5344, 2
        %v5491 = vsel %vm933, %v5489, %v5490
        %v5492 = vrot.slane %v5345, 2
        %v5493 = vrot.slane %v5346, 2
        %v5494 = vsel %vm933, %v5492, %v5493
        %v5495 = vrot.slane %v5347, 2
        %v5496 = vrot.slane %v5348, 2
        %v5497 = vsel %vm933, %v5495, %v5496
        %v5498 = vrot.slane %v5349, 2
        %v5499 = vrot.slane %v5350, 2
        %v5500 = vsel %vm933, %v5498, %v5499
        %v5501 = vrot.slane %v5351, 2
        %v5502 = vrot.slane %v5352, 2
        %v5503 = vsel %vm933, %v5501, %v5502
        %v5504 = vrot.slane %v5353, 2
        %v5505 = vrot.slane %v5354, 2
        %v5506 = vsel %vm933, %v5504, %v5505
        %v5507 = vrot.slane %v5355, 2
        %v5508 = vrot.slane %v5356, 2
        %v5509 = vsel %vm933, %v5507, %v5508
        %v5510 = vrot.slane %v5357, 2
        %v5511 = vrot.slane %v5358, 2
        %v5512 = vsel %vm933, %v5510, %v5511
        %v5513 = vrot.slane %v5359, 2
        %v5514 = vrot.slane %v5360, 2
        %v5515 = vsel %vm933, %v5513, %v5514
        %v5516 = vrot.slane %v5361, 2
        %v5517 = vrot.slane %v5362, 2
        %v5518 = vsel %vm933, %v5516, %v5517
        %v5519 = vrot.slane %v5363, 2
        %v5520 = vrot.slane %v5364, 2
        %v5521 = vsel %vm933, %v5519, %v5520
        %v5522 = vrot.slane %v5365, 2
        %v5523 = vrot.slane %v5366, 2
        %v5524 = vsel %vm933, %v5522, %v5523
        %v5525 = vrot.slane %v5367, 2
        %v5526 = vrot.slane %v5368, 2
        %v5527 = vsel %vm933, %v5525, %v5526
        %v5528 = vrot.slane %v5369, 2
        %v5529 = vrot.slane %v5370, 2
        %v5530 = vsel %vm933, %v5528, %v5529
        %v5563 = vadd.f32 %v5274, %v5437
        %v5564 = vadd.f32 %v5275, %v5440
        %v5565 = vadd.f32 %v5276, %v5443
        %v5566 = vadd.f32 %v5277, %v5446
        %v5567 = vadd.f32 %v5278, %v5449
        %v5568 = vadd.f32 %v5279, %v5452
        %v5569 = vadd.f32 %v5280, %v5455
        %v5570 = vadd.f32 %v5281, %v5458
        %v5571 = vadd.f32 %v5282, %v5461
        %v5572 = vadd.f32 %v5283, %v5464
        %v5573 = vadd.f32 %v5284, %v5467
        %v5574 = vadd.f32 %v5285, %v5470
        %v5575 = vadd.f32 %v5286, %v5473
        %v5576 = vadd.f32 %v5287, %v5476
        %v5577 = vadd.f32 %v5288, %v5479
        %v5578 = vadd.f32 %v5289, %v5482
        %v5579 = vadd.f32 %v5290, %v5485
        %v5580 = vadd.f32 %v5291, %v5488
        %v5581 = vadd.f32 %v5292, %v5491
        %v5582 = vadd.f32 %v5293, %v5494
        %v5583 = vadd.f32 %v5294, %v5497
        %v5584 = vadd.f32 %v5295, %v5500
        %v5585 = vadd.f32 %v5296, %v5503
        %v5586 = vadd.f32 %v5297, %v5506
        %v5587 = vadd.f32 %v5298, %v5509
        %v5588 = vadd.f32 %v5299, %v5512
        %v5589 = vadd.f32 %v5300, %v5515
        %v5590 = vadd.f32 %v5301, %v5518
        %v5591 = vadd.f32 %v5302, %v5521
        %v5592 = vadd.f32 %v5303, %v5524
        %v5593 = vadd.f32 %v5304, %v5527
        %v5594 = vadd.f32 %v5305, %v5530
        %v5595 = vperm.slane %v480, 0
        %v5596 = vmul.f32 %v401, %v5595
        %v5597 = vmul.f32 %v403, %v5595
        %v5598 = vmul.f32 %v405, %v5595
        %v5599 = vmul.f32 %v407, %v5595
        %v5600 = vmul.f32 %v409, %v5595
        %v5601 = vmul.f32 %v411, %v5595
        %v5602 = vmul.f32 %v413, %v5595
        %v5603 = vmul.f32 %v415, %v5595
        %v5604 = vmul.f32 %v421, %v5595
        %v5605 = vmul.f32 %v423, %v5595
        %v5606 = vmul.f32 %v425, %v5595
        %v5607 = vmul.f32 %v427, %v5595
        %v5608 = vmul.f32 %v429, %v5595
        %v5609 = vmul.f32 %v431, %v5595
        %v5610 = vmul.f32 %v433, %v5595
        %v5611 = vmul.f32 %v435, %v5595
        %v5612 = vmul.f32 %v441, %v5595
        %v5613 = vmul.f32 %v443, %v5595
        %v5614 = vmul.f32 %v445, %v5595
        %v5615 = vmul.f32 %v447, %v5595
        %v5616 = vmul.f32 %v449, %v5595
        %v5617 = vmul.f32 %v451, %v5595
        %v5618 = vmul.f32 %v453, %v5595
        %v5619 = vmul.f32 %v455, %v5595
        %v5620 = vmul.f32 %v461, %v5595
        %v5621 = vmul.f32 %v463, %v5595
        %v5622 = vmul.f32 %v465, %v5595
        %v5623 = vmul.f32 %v467, %v5595
        %v5624 = vmul.f32 %v469, %v5595
        %v5625 = vmul.f32 %v471, %v5595
        %v5626 = vmul.f32 %v473, %v5595
        %v5627 = vmul.f32 %v475, %v5595
        %v5628 = vadd.f32 %v5563, %v5596
        %v5629 = vadd.f32 %v5564, %v5597
        %v5630 = vadd.f32 %v5565, %v5598
        %v5631 = vadd.f32 %v5566, %v5599
        %v5632 = vadd.f32 %v5567, %v5600
        %v5633 = vadd.f32 %v5568, %v5601
        %v5634 = vadd.f32 %v5569, %v5602
        %v5635 = vadd.f32 %v5570, %v5603
        %v5636 = vadd.f32 %v5571, %v5604
        %v5637 = vadd.f32 %v5572, %v5605
        %v5638 = vadd.f32 %v5573, %v5606
        %v5639 = vadd.f32 %v5574, %v5607
        %v5640 = vadd.f32 %v5575, %v5608
        %v5641 = vadd.f32 %v5576, %v5609
        %v5642 = vadd.f32 %v5577, %v5610
        %v5643 = vadd.f32 %v5578, %v5611
        %v5644 = vadd.f32 %v5579, %v5612
        %v5645 = vadd.f32 %v5580, %v5613
        %v5646 = vadd.f32 %v5581, %v5614
        %v5647 = vadd.f32 %v5582, %v5615
        %v5648 = vadd.f32 %v5583, %v5616
        %v5649 = vadd.f32 %v5584, %v5617
        %v5650 = vadd.f32 %v5585, %v5618
        %v5651 = vadd.f32 %v5586, %v5619
        %v5652 = vadd.f32 %v5587, %v5620
        %v5653 = vadd.f32 %v5588, %v5621
        %v5654 = vadd.f32 %v5589, %v5622
        %v5655 = vadd.f32 %v5590, %v5623
        %v5656 = vadd.f32 %v5591, %v5624
        %v5657 = vadd.f32 %v5592, %v5625
        %v5658 = vadd.f32 %v5593, %v5626
        %v5659 = vadd.f32 %v5594, %v5627
        %v5660 = vperm.slane %v480, 1
        %v5661 = vmul.f32 %v401, %v5660
        %v5662 = vmul.f32 %v402, %v5660
        %v5663 = vmul.f32 %v403, %v5660
        %v5664 = vmul.f32 %v404, %v5660
        %v5665 = vmul.f32 %v405, %v5660
        %v5666 = vmul.f32 %v406, %v5660
        %v5667 = vmul.f32 %v407, %v5660
        %v5668 = vmul.f32 %v408, %v5660
        %v5669 = vmul.f32 %v409, %v5660
        %v5670 = vmul.f32 %v410, %v5660
        %v5671 = vmul.f32 %v411, %v5660
        %v5672 = vmul.f32 %v412, %v5660
        %v5673 = vmul.f32 %v413, %v5660
        %v5674 = vmul.f32 %v414, %v5660
        %v5675 = vmul.f32 %v415, %v5660
        %v5676 = vmul.f32 %v416, %v5660
        %v5677 = vmul.f32 %v421, %v5660
        %v5678 = vmul.f32 %v422, %v5660
        %v5679 = vmul.f32 %v423, %v5660
        %v5680 = vmul.f32 %v424, %v5660
        %v5681 = vmul.f32 %v425, %v5660
        %v5682 = vmul.f32 %v426, %v5660
        %v5683 = vmul.f32 %v427, %v5660
        %v5684 = vmul.f32 %v428, %v5660
        %v5685 = vmul.f32 %v429, %v5660
        %v5686 = vmul.f32 %v430, %v5660
        %v5687 = vmul.f32 %v431, %v5660
        %v5688 = vmul.f32 %v432, %v5660
        %v5689 = vmul.f32 %v433, %v5660
        %v5690 = vmul.f32 %v434, %v5660
        %v5691 = vmul.f32 %v435, %v5660
        %v5692 = vmul.f32 %v436, %v5660
        %v5693 = vmul.f32 %v441, %v5660
        %v5694 = vmul.f32 %v442, %v5660
        %v5695 = vmul.f32 %v443, %v5660
        %v5696 = vmul.f32 %v444, %v5660
        %v5697 = vmul.f32 %v445, %v5660
        %v5698 = vmul.f32 %v446, %v5660
        %v5699 = vmul.f32 %v447, %v5660
        %v5700 = vmul.f32 %v448, %v5660
        %v5701 = vmul.f32 %v449, %v5660
        %v5702 = vmul.f32 %v450, %v5660
        %v5703 = vmul.f32 %v451, %v5660
        %v5704 = vmul.f32 %v452, %v5660
        %v5705 = vmul.f32 %v453, %v5660
        %v5706 = vmul.f32 %v454, %v5660
        %v5707 = vmul.f32 %v455, %v5660
        %v5708 = vmul.f32 %v456, %v5660
        %v5709 = vmul.f32 %v461, %v5660
        %v5710 = vmul.f32 %v462, %v5660
        %v5711 = vmul.f32 %v463, %v5660
        %v5712 = vmul.f32 %v464, %v5660
        %v5713 = vmul.f32 %v465, %v5660
        %v5714 = vmul.f32 %v466, %v5660
        %v5715 = vmul.f32 %v467, %v5660
        %v5716 = vmul.f32 %v468, %v5660
        %v5717 = vmul.f32 %v469, %v5660
        %v5718 = vmul.f32 %v470, %v5660
        %v5719 = vmul.f32 %v471, %v5660
        %v5720 = vmul.f32 %v472, %v5660
        %v5721 = vmul.f32 %v473, %v5660
        %v5722 = vmul.f32 %v474, %v5660
        %v5723 = vmul.f32 %v475, %v5660
        %v5724 = vmul.f32 %v476, %v5660
        %v5789 = vrot.slane %v5661, 1
        %v5790 = vrot.slane %v5662, 1
        %v5791 = vsel %vm643, %v5789, %v5790
        %v5792 = vrot.slane %v5663, 1
        %v5793 = vrot.slane %v5664, 1
        %v5794 = vsel %vm643, %v5792, %v5793
        %v5795 = vrot.slane %v5665, 1
        %v5796 = vrot.slane %v5666, 1
        %v5797 = vsel %vm643, %v5795, %v5796
        %v5798 = vrot.slane %v5667, 1
        %v5799 = vrot.slane %v5668, 1
        %v5800 = vsel %vm643, %v5798, %v5799
        %v5801 = vrot.slane %v5669, 1
        %v5802 = vrot.slane %v5670, 1
        %v5803 = vsel %vm643, %v5801, %v5802
        %v5804 = vrot.slane %v5671, 1
        %v5805 = vrot.slane %v5672, 1
        %v5806 = vsel %vm643, %v5804, %v5805
        %v5807 = vrot.slane %v5673, 1
        %v5808 = vrot.slane %v5674, 1
        %v5809 = vsel %vm643, %v5807, %v5808
        %v5810 = vrot.slane %v5675, 1
        %v5811 = vrot.slane %v5676, 1
        %v5812 = vsel %vm643, %v5810, %v5811
        %v5813 = vrot.slane %v5677, 1
        %v5814 = vrot.slane %v5678, 1
        %v5815 = vsel %vm643, %v5813, %v5814
        %v5816 = vrot.slane %v5679, 1
        %v5817 = vrot.slane %v5680, 1
        %v5818 = vsel %vm643, %v5816, %v5817
        %v5819 = vrot.slane %v5681, 1
        %v5820 = vrot.slane %v5682, 1
        %v5821 = vsel %vm643, %v5819, %v5820
        %v5822 = vrot.slane %v5683, 1
        %v5823 = vrot.slane %v5684, 1
        %v5824 = vsel %vm643, %v5822, %v5823
        %v5825 = vrot.slane %v5685, 1
        %v5826 = vrot.slane %v5686, 1
        %v5827 = vsel %vm643, %v5825, %v5826
        %v5828 = vrot.slane %v5687, 1
        %v5829 = vrot.slane %v5688, 1
        %v5830 = vsel %vm643, %v5828, %v5829
        %v5831 = vrot.slane %v5689, 1
        %v5832 = vrot.slane %v5690, 1
        %v5833 = vsel %vm643, %v5831, %v5832
        %v5834 = vrot.slane %v5691, 1
        %v5835 = vrot.slane %v5692, 1
        %v5836 = vsel %vm643, %v5834, %v5835
        %v5837 = vrot.slane %v5693, 1
        %v5838 = vrot.slane %v5694, 1
        %v5839 = vsel %vm643, %v5837, %v5838
        %v5840 = vrot.slane %v5695, 1
        %v5841 = vrot.slane %v5696, 1
        %v5842 = vsel %vm643, %v5840, %v5841
        %v5843 = vrot.slane %v5697, 1
        %v5844 = vrot.slane %v5698, 1
        %v5845 = vsel %vm643, %v5843, %v5844
        %v5846 = vrot.slane %v5699, 1
        %v5847 = vrot.slane %v5700, 1
        %v5848 = vsel %vm643, %v5846, %v5847
        %v5849 = vrot.slane %v5701, 1
        %v5850 = vrot.slane %v5702, 1
        %v5851 = vsel %vm643, %v5849, %v5850
        %v5852 = vrot.slane %v5703, 1
        %v5853 = vrot.slane %v5704, 1
        %v5854 = vsel %vm643, %v5852, %v5853
        %v5855 = vrot.slane %v5705, 1
        %v5856 = vrot.slane %v5706, 1
        %v5857 = vsel %vm643, %v5855, %v5856
        %v5858 = vrot.slane %v5707, 1
        %v5859 = vrot.slane %v5708, 1
        %v5860 = vsel %vm643, %v5858, %v5859
        %v5861 = vrot.slane %v5709, 1
        %v5862 = vrot.slane %v5710, 1
        %v5863 = vsel %vm643, %v5861, %v5862
        %v5864 = vrot.slane %v5711, 1
        %v5865 = vrot.slane %v5712, 1
        %v5866 = vsel %vm643, %v5864, %v5865
        %v5867 = vrot.slane %v5713, 1
        %v5868 = vrot.slane %v5714, 1
        %v5869 = vsel %vm643, %v5867, %v5868
        %v5870 = vrot.slane %v5715, 1
        %v5871 = vrot.slane %v5716, 1
        %v5872 = vsel %vm643, %v5870, %v5871
        %v5873 = vrot.slane %v5717, 1
        %v5874 = vrot.slane %v5718, 1
        %v5875 = vsel %vm643, %v5873, %v5874
        %v5876 = vrot.slane %v5719, 1
        %v5877 = vrot.slane %v5720, 1
        %v5878 = vsel %vm643, %v5876, %v5877
        %v5879 = vrot.slane %v5721, 1
        %v5880 = vrot.slane %v5722, 1
        %v5881 = vsel %vm643, %v5879, %v5880
        %v5882 = vrot.slane %v5723, 1
        %v5883 = vrot.slane %v5724, 1
        %v5884 = vsel %vm643, %v5882, %v5883
        %v5917 = vadd.f32 %v5628, %v5791
        %v5918 = vadd.f32 %v5629, %v5794
        %v5919 = vadd.f32 %v5630, %v5797
        %v5920 = vadd.f32 %v5631, %v5800
        %v5921 = vadd.f32 %v5632, %v5803
        %v5922 = vadd.f32 %v5633, %v5806
        %v5923 = vadd.f32 %v5634, %v5809
        %v5924 = vadd.f32 %v5635, %v5812
        %v5925 = vadd.f32 %v5636, %v5815
        %v5926 = vadd.f32 %v5637, %v5818
        %v5927 = vadd.f32 %v5638, %v5821
        %v5928 = vadd.f32 %v5639, %v5824
        %v5929 = vadd.f32 %v5640, %v5827
        %v5930 = vadd.f32 %v5641, %v5830
        %v5931 = vadd.f32 %v5642, %v5833
        %v5932 = vadd.f32 %v5643, %v5836
        %v5933 = vadd.f32 %v5644, %v5839
        %v5934 = vadd.f32 %v5645, %v5842
        %v5935 = vadd.f32 %v5646, %v5845
        %v5936 = vadd.f32 %v5647, %v5848
        %v5937 = vadd.f32 %v5648, %v5851
        %v5938 = vadd.f32 %v5649, %v5854
        %v5939 = vadd.f32 %v5650, %v5857
        %v5940 = vadd.f32 %v5651, %v5860
        %v5941 = vadd.f32 %v5652, %v5863
        %v5942 = vadd.f32 %v5653, %v5866
        %v5943 = vadd.f32 %v5654, %v5869
        %v5944 = vadd.f32 %v5655, %v5872
        %v5945 = vadd.f32 %v5656, %v5875
        %v5946 = vadd.f32 %v5657, %v5878
        %v5947 = vadd.f32 %v5658, %v5881
        %v5948 = vadd.f32 %v5659, %v5884
        %v5949 = vperm.slane %v480, 2
        %v5950 = vmul.f32 %v401, %v5949
        %v5951 = vmul.f32 %v402, %v5949
        %v5952 = vmul.f32 %v403, %v5949
        %v5953 = vmul.f32 %v404, %v5949
        %v5954 = vmul.f32 %v405, %v5949
        %v5955 = vmul.f32 %v406, %v5949
        %v5956 = vmul.f32 %v407, %v5949
        %v5957 = vmul.f32 %v408, %v5949
        %v5958 = vmul.f32 %v409, %v5949
        %v5959 = vmul.f32 %v410, %v5949
        %v5960 = vmul.f32 %v411, %v5949
        %v5961 = vmul.f32 %v412, %v5949
        %v5962 = vmul.f32 %v413, %v5949
        %v5963 = vmul.f32 %v414, %v5949
        %v5964 = vmul.f32 %v415, %v5949
        %v5965 = vmul.f32 %v416, %v5949
        %v5966 = vmul.f32 %v421, %v5949
        %v5967 = vmul.f32 %v422, %v5949
        %v5968 = vmul.f32 %v423, %v5949
        %v5969 = vmul.f32 %v424, %v5949
        %v5970 = vmul.f32 %v425, %v5949
        %v5971 = vmul.f32 %v426, %v5949
        %v5972 = vmul.f32 %v427, %v5949
        %v5973 = vmul.f32 %v428, %v5949
        %v5974 = vmul.f32 %v429, %v5949
        %v5975 = vmul.f32 %v430, %v5949
        %v5976 = vmul.f32 %v431, %v5949
        %v5977 = vmul.f32 %v432, %v5949
        %v5978 = vmul.f32 %v433, %v5949
        %v5979 = vmul.f32 %v434, %v5949
        %v5980 = vmul.f32 %v435, %v5949
        %v5981 = vmul.f32 %v436, %v5949
        %v5982 = vmul.f32 %v441, %v5949
        %v5983 = vmul.f32 %v442, %v5949
        %v5984 = vmul.f32 %v443, %v5949
        %v5985 = vmul.f32 %v444, %v5949
        %v5986 = vmul.f32 %v445, %v5949
        %v5987 = vmul.f32 %v446, %v5949
        %v5988 = vmul.f32 %v447, %v5949
        %v5989 = vmul.f32 %v448, %v5949
        %v5990 = vmul.f32 %v449, %v5949
        %v5991 = vmul.f32 %v450, %v5949
        %v5992 = vmul.f32 %v451, %v5949
        %v5993 = vmul.f32 %v452, %v5949
        %v5994 = vmul.f32 %v453, %v5949
        %v5995 = vmul.f32 %v454, %v5949
        %v5996 = vmul.f32 %v455, %v5949
        %v5997 = vmul.f32 %v456, %v5949
        %v5998 = vmul.f32 %v461, %v5949
        %v5999 = vmul.f32 %v462, %v5949
        %v6000 = vmul.f32 %v463, %v5949
        %v6001 = vmul.f32 %v464, %v5949
        %v6002 = vmul.f32 %v465, %v5949
        %v6003 = vmul.f32 %v466, %v5949
        %v6004 = vmul.f32 %v467, %v5949
        %v6005 = vmul.f32 %v468, %v5949
        %v6006 = vmul.f32 %v469, %v5949
        %v6007 = vmul.f32 %v470, %v5949
        %v6008 = vmul.f32 %v471, %v5949
        %v6009 = vmul.f32 %v472, %v5949
        %v6010 = vmul.f32 %v473, %v5949
        %v6011 = vmul.f32 %v474, %v5949
        %v6012 = vmul.f32 %v475, %v5949
        %v6013 = vmul.f32 %v476, %v5949
        %v6078 = vrot.slane %v5950, 2
        %v6079 = vrot.slane %v5951, 2
        %v6080 = vsel %vm933, %v6078, %v6079
        %v6081 = vrot.slane %v5952, 2
        %v6082 = vrot.slane %v5953, 2
        %v6083 = vsel %vm933, %v6081, %v6082
        %v6084 = vrot.slane %v5954, 2
        %v6085 = vrot.slane %v5955, 2
        %v6086 = vsel %vm933, %v6084, %v6085
        %v6087 = vrot.slane %v5956, 2
        %v6088 = vrot.slane %v5957, 2
        %v6089 = vsel %vm933, %v6087, %v6088
        %v6090 = vrot.slane %v5958, 2
        %v6091 = vrot.slane %v5959, 2
        %v6092 = vsel %vm933, %v6090, %v6091
        %v6093 = vrot.slane %v5960, 2
        %v6094 = vrot.slane %v5961, 2
        %v6095 = vsel %vm933, %v6093, %v6094
        %v6096 = vrot.slane %v5962, 2
        %v6097 = vrot.slane %v5963, 2
        %v6098 = vsel %vm933, %v6096, %v6097
        %v6099 = vrot.slane %v5964, 2
        %v6100 = vrot.slane %v5965, 2
        %v6101 = vsel %vm933, %v6099, %v6100
        %v6102 = vrot.slane %v5966, 2
        %v6103 = vrot.slane %v5967, 2
        %v6104 = vsel %vm933, %v6102, %v6103
        %v6105 = vrot.slane %v5968, 2
        %v6106 = vrot.slane %v5969, 2
        %v6107 = vsel %vm933, %v6105, %v6106
        %v6108 = vrot.slane %v5970, 2
        %v6109 = vrot.slane %v5971, 2
        %v6110 = vsel %vm933, %v6108, %v6109
        %v6111 = vrot.slane %v5972, 2
        %v6112 = vrot.slane %v5973, 2
        %v6113 = vsel %vm933, %v6111, %v6112
        %v6114 = vrot.slane %v5974, 2
        %v6115 = vrot.slane %v5975, 2
        %v6116 = vsel %vm933, %v6114, %v6115
        %v6117 = vrot.slane %v5976, 2
        %v6118 = vrot.slane %v5977, 2
        %v6119 = vsel %vm933, %v6117, %v6118
        %v6120 = vrot.slane %v5978, 2
        %v6121 = vrot.slane %v5979, 2
        %v6122 = vsel %vm933, %v6120, %v6121
        %v6123 = vrot.slane %v5980, 2
        %v6124 = vrot.slane %v5981, 2
        %v6125 = vsel %vm933, %v6123, %v6124
        %v6126 = vrot.slane %v5982, 2
        %v6127 = vrot.slane %v5983, 2
        %v6128 = vsel %vm933, %v6126, %v6127
        %v6129 = vrot.slane %v5984, 2
        %v6130 = vrot.slane %v5985, 2
        %v6131 = vsel %vm933, %v6129, %v6130
        %v6132 = vrot.slane %v5986, 2
        %v6133 = vrot.slane %v5987, 2
        %v6134 = vsel %vm933, %v6132, %v6133
        %v6135 = vrot.slane %v5988, 2
        %v6136 = vrot.slane %v5989, 2
        %v6137 = vsel %vm933, %v6135, %v6136
        %v6138 = vrot.slane %v5990, 2
        %v6139 = vrot.slane %v5991, 2
        %v6140 = vsel %vm933, %v6138, %v6139
        %v6141 = vrot.slane %v5992, 2
        %v6142 = vrot.slane %v5993, 2
        %v6143 = vsel %vm933, %v6141, %v6142
        %v6144 = vrot.slane %v5994, 2
        %v6145 = vrot.slane %v5995, 2
        %v6146 = vsel %vm933, %v6144, %v6145
        %v6147 = vrot.slane %v5996, 2
        %v6148 = vrot.slane %v5997, 2
        %v6149 = vsel %vm933, %v6147, %v6148
        %v6150 = vrot.slane %v5998, 2
        %v6151 = vrot.slane %v5999, 2
        %v6152 = vsel %vm933, %v6150, %v6151
        %v6153 = vrot.slane %v6000, 2
        %v6154 = vrot.slane %v6001, 2
        %v6155 = vsel %vm933, %v6153, %v6154
        %v6156 = vrot.slane %v6002, 2
        %v6157 = vrot.slane %v6003, 2
        %v6158 = vsel %vm933, %v6156, %v6157
        %v6159 = vrot.slane %v6004, 2
        %v6160 = vrot.slane %v6005, 2
        %v6161 = vsel %vm933, %v6159, %v6160
        %v6162 = vrot.slane %v6006, 2
        %v6163 = vrot.slane %v6007, 2
        %v6164 = vsel %vm933, %v6162, %v6163
        %v6165 = vrot.slane %v6008, 2
        %v6166 = vrot.slane %v6009, 2
        %v6167 = vsel %vm933, %v6165, %v6166
        %v6168 = vrot.slane %v6010, 2
        %v6169 = vrot.slane %v6011, 2
        %v6170 = vsel %vm933, %v6168, %v6169
        %v6171 = vrot.slane %v6012, 2
        %v6172 = vrot.slane %v6013, 2
        %v6173 = vsel %vm933, %v6171, %v6172
        %v6206 = vadd.f32 %v5917, %v6080
        %v6207 = vadd.f32 %v5918, %v6083
        %v6208 = vadd.f32 %v5919, %v6086
        %v6209 = vadd.f32 %v5920, %v6089
        %v6210 = vadd.f32 %v5921, %v6092
        %v6211 = vadd.f32 %v5922, %v6095
        %v6212 = vadd.f32 %v5923, %v6098
        %v6213 = vadd.f32 %v5924, %v6101
        %v6214 = vadd.f32 %v5925, %v6104
        %v6215 = vadd.f32 %v5926, %v6107
        %v6216 = vadd.f32 %v5927, %v6110
        %v6217 = vadd.f32 %v5928, %v6113
        %v6218 = vadd.f32 %v5929, %v6116
        %v6219 = vadd.f32 %v5930, %v6119
        %v6220 = vadd.f32 %v5931, %v6122
        %v6221 = vadd.f32 %v5932, %v6125
        %v6222 = vadd.f32 %v5933, %v6128
        %v6223 = vadd.f32 %v5934, %v6131
        %v6224 = vadd.f32 %v5935, %v6134
        %v6225 = vadd.f32 %v5936, %v6137
        %v6226 = vadd.f32 %v5937, %v6140
        %v6227 = vadd.f32 %v5938, %v6143
        %v6228 = vadd.f32 %v5939, %v6146
        %v6229 = vadd.f32 %v5940, %v6149
        %v6230 = vadd.f32 %v5941, %v6152
        %v6231 = vadd.f32 %v5942, %v6155
        %v6232 = vadd.f32 %v5943, %v6158
        %v6233 = vadd.f32 %v5944, %v6161
        %v6234 = vadd.f32 %v5945, %v6164
        %v6235 = vadd.f32 %v5946, %v6167
        %v6236 = vadd.f32 %v5947, %v6170
        %v6237 = vadd.f32 %v5948, %v6173
        %v6238 = vpack.c.bf16 %v6207, %v6206
        %v6239 = vpack.c.bf16 %v6209, %v6208
        %v6240 = vpack.c.bf16 %v6211, %v6210
        %v6241 = vpack.c.bf16 %v6213, %v6212
        %v6242 = vpack.c.bf16 %v6215, %v6214
        %v6243 = vpack.c.bf16 %v6217, %v6216
        %v6244 = vpack.c.bf16 %v6219, %v6218
        %v6245 = vpack.c.bf16 %v6221, %v6220
        %v6246 = vpack.c.bf16 %v6223, %v6222
        %v6247 = vpack.c.bf16 %v6225, %v6224
        %v6248 = vpack.c.bf16 %v6227, %v6226
        %v6249 = vpack.c.bf16 %v6229, %v6228
        %v6250 = vpack.c.bf16 %v6231, %v6230
        %v6251 = vpack.c.bf16 %v6233, %v6232
        %v6252 = vpack.c.bf16 %v6235, %v6234
        %v6253 = vpack.c.bf16 %v6237, %v6236
        %v6254 = vld [vmem:[%s2] sm:$0xf]
        %vm6255 = vcmask 64512
        %v6257 = vsel %vm6255, %v6238, 0
        %v6260 = vsel %vm6255, %v6239, 0
        %v6263 = vsel %vm6255, %v6240, 0
        %v6266 = vsel %vm6255, %v6241, 0
        %v6269 = vsel %vm6255, %v6242, 0
        %v6272 = vsel %vm6255, %v6243, 0
        %v6275 = vsel %vm6255, %v6244, 0
        %v6278 = vsel %vm6255, %v6245, 0
        %v6281 = vsel %vm6255, %v6246, 0
        %v6284 = vsel %vm6255, %v6247, 0
        %v6287 = vsel %vm6255, %v6248, 0
        %v6290 = vsel %vm6255, %v6249, 0
        %v6293 = vsel %vm6255, %v6250, 0
        %v6296 = vsel %vm6255, %v6251, 0
        %v6299 = vsel %vm6255, %v6252, 0
        %v6302 = vsel %vm6255, %v6253, 0
        %vm6304 = vcmask 1043456
        %v6306 = vsel %vm6304, %v6254, 0
        %6308 = vmatpush.bf16.msra.mxu0 0
        %6309 = vmatpush.bf16.msra.mxu0 0
        %6310 = vmatpush.bf16.msra.mxu0 0
        %6311 = vmatpush.bf16.msra.mxu0 0
        %6312 = vmatpush.bf16.msra.mxu0 0
        %6313 = vmatpush.bf16.msra.mxu0 0
        %6314 = vmatpush.bf16.msra.mxu0 0
        %6315 = vmatpush.bf16.msra.mxu0 %v6306
        %6316 = vmatmul.bf16.gmra.mxu0 %v6257
        %v6317 = vpop.f32.mrf.mxu0
        %v6318 = vadd.f32 0.0, %v6317
        %v6319 = vpop.f32.mrf.mxu0
        %v6320 = vadd.f32 0.0, %v6319
        %6321 = vmatmul.bf16.gmra.mxu0 %v6260
        %v6322 = vpop.f32.mrf.mxu0
        %v6323 = vadd.f32 0.0, %v6322
        %v6324 = vpop.f32.mrf.mxu0
        %v6325 = vadd.f32 0.0, %v6324
        %6326 = vmatmul.bf16.gmra.mxu0 %v6263
        %v6327 = vpop.f32.mrf.mxu0
        %v6328 = vadd.f32 0.0, %v6327
        %v6329 = vpop.f32.mrf.mxu0
        %v6330 = vadd.f32 0.0, %v6329
        %6331 = vmatmul.bf16.gmra.mxu0 %v6266
        %v6332 = vpop.f32.mrf.mxu0
        %v6333 = vadd.f32 0.0, %v6332
        %v6334 = vpop.f32.mrf.mxu0
        %v6335 = vadd.f32 0.0, %v6334
        %6336 = vmatmul.bf16.gmra.mxu0 %v6269
        %v6337 = vpop.f32.mrf.mxu0
        %v6338 = vadd.f32 0.0, %v6337
        %v6339 = vpop.f32.mrf.mxu0
        %v6340 = vadd.f32 0.0, %v6339
        %6341 = vmatmul.bf16.gmra.mxu0 %v6272
        %v6342 = vpop.f32.mrf.mxu0
        %v6343 = vadd.f32 0.0, %v6342
        %v6344 = vpop.f32.mrf.mxu0
        %v6345 = vadd.f32 0.0, %v6344
        %6346 = vmatmul.bf16.gmra.mxu0 %v6275
        %v6347 = vpop.f32.mrf.mxu0
        %v6348 = vadd.f32 0.0, %v6347
        %v6349 = vpop.f32.mrf.mxu0
        %v6350 = vadd.f32 0.0, %v6349
        %6351 = vmatmul.bf16.gmra.mxu0 %v6278
        %v6352 = vpop.f32.mrf.mxu0
        %v6353 = vadd.f32 0.0, %v6352
        %v6354 = vpop.f32.mrf.mxu0
        %v6355 = vadd.f32 0.0, %v6354
        %6356 = vmatmul.bf16.gmra.mxu0 %v6281
        %v6357 = vpop.f32.mrf.mxu0
        %v6358 = vadd.f32 0.0, %v6357
        %v6359 = vpop.f32.mrf.mxu0
        %v6360 = vadd.f32 0.0, %v6359
        %6361 = vmatmul.bf16.gmra.mxu0 %v6284
        %v6362 = vpop.f32.mrf.mxu0
        %v6363 = vadd.f32 0.0, %v6362
        %v6364 = vpop.f32.mrf.mxu0
        %v6365 = vadd.f32 0.0, %v6364
        %6366 = vmatmul.bf16.gmra.mxu0 %v6287
        %v6367 = vpop.f32.mrf.mxu0
        %v6368 = vadd.f32 0.0, %v6367
        %v6369 = vpop.f32.mrf.mxu0
        %v6370 = vadd.f32 0.0, %v6369
        %6371 = vmatmul.bf16.gmra.mxu0 %v6290
        %v6372 = vpop.f32.mrf.mxu0
        %v6373 = vadd.f32 0.0, %v6372
        %v6374 = vpop.f32.mrf.mxu0
        %v6375 = vadd.f32 0.0, %v6374
        %6376 = vmatmul.bf16.gmra.mxu0 %v6293
        %v6377 = vpop.f32.mrf.mxu0
        %v6378 = vadd.f32 0.0, %v6377
        %v6379 = vpop.f32.mrf.mxu0
        %v6380 = vadd.f32 0.0, %v6379
        %6381 = vmatmul.bf16.gmra.mxu0 %v6296
        %v6382 = vpop.f32.mrf.mxu0
        %v6383 = vadd.f32 0.0, %v6382
        %v6384 = vpop.f32.mrf.mxu0
        %v6385 = vadd.f32 0.0, %v6384
        %6386 = vmatmul.bf16.gmra.mxu0 %v6299
        %v6387 = vpop.f32.mrf.mxu0
        %v6388 = vadd.f32 0.0, %v6387
        %v6389 = vpop.f32.mrf.mxu0
        %v6390 = vadd.f32 0.0, %v6389
        %6391 = vmatmul.bf16.gmra.mxu0 %v6302
        %v6392 = vpop.f32.mrf.mxu0
        %v6393 = vadd.f32 0.0, %v6392
        %v6394 = vpop.f32.mrf.mxu0
        %v6395 = vadd.f32 0.0, %v6394
        %6396 = vdwg.mxu0
        %p6397 = scmp.eq.s32.totalorder %s27, 0
        // Predicated region
        $region33: #{tpu_custom_call.1} parent=31 // pred_check
          %p6398 = pneg %p6397
        $region34: #{tpu_custom_call.1} parent=31 // pred_check_branch
          %6400 = sbr.rel (%p6398) target = $region36
        $region35: #{tpu_custom_call.1} parent=31 // pred_region
          %vm6401 = vcmask 58368
          %6402 = vst.msk [vmem:[%s225] sm:$0x3] %vm6401, 0.0
        $region36: #{tpu_custom_call.1} parent=31 // pred_fallthru
          _
        %v6403 = vsel %vm6255, %v6318, 0.0
        %v6404 = vsel %vm6255, %v6320, 0.0
        %v6405 = vadd.f32 %v6403, %v6404
        %v6406 = vsel %vm6255, %v6323, 0.0
        %v6407 = vadd.f32 %v6405, %v6406
        %v6408 = vsel %vm6255, %v6325, 0.0
        %v6409 = vadd.f32 %v6407, %v6408
        %v6410 = vsel %vm6255, %v6328, 0.0
        %v6411 = vadd.f32 %v6409, %v6410
        %v6412 = vsel %vm6255, %v6330, 0.0
        %v6413 = vadd.f32 %v6411, %v6412
        %v6414 = vsel %vm6255, %v6333, 0.0
        %v6415 = vadd.f32 %v6413, %v6414
        %v6416 = vsel %vm6255, %v6335, 0.0
        %v6417 = vadd.f32 %v6415, %v6416
        %v6418 = vsel %vm6255, %v6338, 0.0
        %v6419 = vadd.f32 %v6417, %v6418
        %v6420 = vsel %vm6255, %v6340, 0.0
        %v6421 = vadd.f32 %v6419, %v6420
        %v6422 = vsel %vm6255, %v6343, 0.0
        %v6423 = vadd.f32 %v6421, %v6422
        %v6424 = vsel %vm6255, %v6345, 0.0
        %v6425 = vadd.f32 %v6423, %v6424
        %v6426 = vsel %vm6255, %v6348, 0.0
        %v6427 = vadd.f32 %v6425, %v6426
        %v6428 = vsel %vm6255, %v6350, 0.0
        %v6429 = vadd.f32 %v6427, %v6428
        %v6430 = vsel %vm6255, %v6353, 0.0
        %v6431 = vadd.f32 %v6429, %v6430
        %v6432 = vsel %vm6255, %v6355, 0.0
        %v6433 = vadd.f32 %v6431, %v6432
        %v6434 = vsel %vm6255, %v6358, 0.0
        %v6435 = vadd.f32 %v6433, %v6434
        %v6436 = vsel %vm6255, %v6360, 0.0
        %v6437 = vadd.f32 %v6435, %v6436
        %v6438 = vsel %vm6255, %v6363, 0.0
        %v6439 = vadd.f32 %v6437, %v6438
        %v6440 = vsel %vm6255, %v6365, 0.0
        %v6441 = vadd.f32 %v6439, %v6440
        %v6442 = vsel %vm6255, %v6368, 0.0
        %v6443 = vadd.f32 %v6441, %v6442
        %v6444 = vsel %vm6255, %v6370, 0.0
        %v6445 = vadd.f32 %v6443, %v6444
        %v6446 = vsel %vm6255, %v6373, 0.0
        %v6447 = vadd.f32 %v6445, %v6446
        %v6448 = vsel %vm6255, %v6375, 0.0
        %v6449 = vadd.f32 %v6447, %v6448
        %v6450 = vsel %vm6255, %v6378, 0.0
        %v6451 = vadd.f32 %v6449, %v6450
        %v6452 = vsel %vm6255, %v6380, 0.0
        %v6453 = vadd.f32 %v6451, %v6452
        %v6454 = vsel %vm6255, %v6383, 0.0
        %v6455 = vadd.f32 %v6453, %v6454
        %v6456 = vsel %vm6255, %v6385, 0.0
        %v6457 = vadd.f32 %v6455, %v6456
        %v6458 = vsel %vm6255, %v6388, 0.0
        %v6459 = vadd.f32 %v6457, %v6458
        %v6460 = vsel %vm6255, %v6390, 0.0
        %v6461 = vadd.f32 %v6459, %v6460
        %v6462 = vsel %vm6255, %v6393, 0.0
        %v6463 = vadd.f32 %v6461, %v6462
        %v6464 = vsel %vm6255, %v6395, 0.0
        %v6465 = vadd.f32 %v6463, %v6464
        %v6466 = vrot.slane %v6465, 4
        %v6467 = vadd.f32 %v6465, %v6466
        %v6468 = vrot.slane %v6467, 2
        %v6469 = vadd.f32 %v6467, %v6468
        %v6470 = vrot.slane %v6469, 1
        %v6471 = vadd.f32 %v6469, %v6470
        %v6472 = vmul.f32 %v6318, %v6318
        %v6473 = vmul.f32 %v6320, %v6320
        %v6474 = vmul.f32 %v6323, %v6323
        %v6475 = vmul.f32 %v6325, %v6325
        %v6476 = vmul.f32 %v6328, %v6328
        %v6477 = vmul.f32 %v6330, %v6330
        %v6478 = vmul.f32 %v6333, %v6333
        %v6479 = vmul.f32 %v6335, %v6335
        %v6480 = vmul.f32 %v6338, %v6338
        %v6481 = vmul.f32 %v6340, %v6340
        %v6482 = vmul.f32 %v6343, %v6343
        %v6483 = vmul.f32 %v6345, %v6345
        %v6484 = vmul.f32 %v6348, %v6348
        %v6485 = vmul.f32 %v6350, %v6350
        %v6486 = vmul.f32 %v6353, %v6353
        %v6487 = vmul.f32 %v6355, %v6355
        %v6488 = vmul.f32 %v6358, %v6358
        %v6489 = vmul.f32 %v6360, %v6360
        %v6490 = vmul.f32 %v6363, %v6363
        %v6491 = vmul.f32 %v6365, %v6365
        %v6492 = vmul.f32 %v6368, %v6368
        %v6493 = vmul.f32 %v6370, %v6370
        %v6494 = vmul.f32 %v6373, %v6373
        %v6495 = vmul.f32 %v6375, %v6375
        %v6496 = vmul.f32 %v6378, %v6378
        %v6497 = vmul.f32 %v6380, %v6380
        %v6498 = vmul.f32 %v6383, %v6383
        %v6499 = vmul.f32 %v6385, %v6385
        %v6500 = vmul.f32 %v6388, %v6388
        %v6501 = vmul.f32 %v6390, %v6390
        %v6502 = vmul.f32 %v6393, %v6393
        %v6503 = vmul.f32 %v6395, %v6395
        %v6504 = vsel %vm6255, %v6472, 0.0
        %v6505 = vsel %vm6255, %v6473, 0.0
        %v6506 = vadd.f32 %v6504, %v6505
        %v6507 = vsel %vm6255, %v6474, 0.0
        %v6508 = vadd.f32 %v6506, %v6507
        %v6509 = vsel %vm6255, %v6475, 0.0
        %v6510 = vadd.f32 %v6508, %v6509
        %v6511 = vsel %vm6255, %v6476, 0.0
        %v6512 = vadd.f32 %v6510, %v6511
        %v6513 = vsel %vm6255, %v6477, 0.0
        %v6514 = vadd.f32 %v6512, %v6513
        %v6515 = vsel %vm6255, %v6478, 0.0
        %v6516 = vadd.f32 %v6514, %v6515
        %v6517 = vsel %vm6255, %v6479, 0.0
        %v6518 = vadd.f32 %v6516, %v6517
        %v6519 = vsel %vm6255, %v6480, 0.0
        %v6520 = vadd.f32 %v6518, %v6519
        %v6521 = vsel %vm6255, %v6481, 0.0
        %v6522 = vadd.f32 %v6520, %v6521
        %v6523 = vsel %vm6255, %v6482, 0.0
        %v6524 = vadd.f32 %v6522, %v6523
        %v6525 = vsel %vm6255, %v6483, 0.0
        %v6526 = vadd.f32 %v6524, %v6525
        %v6527 = vsel %vm6255, %v6484, 0.0
        %v6528 = vadd.f32 %v6526, %v6527
        %v6529 = vsel %vm6255, %v6485, 0.0
        %v6530 = vadd.f32 %v6528, %v6529
        %v6531 = vsel %vm6255, %v6486, 0.0
        %v6532 = vadd.f32 %v6530, %v6531
        %v6533 = vsel %vm6255, %v6487, 0.0
        %v6534 = vadd.f32 %v6532, %v6533
        %v6535 = vsel %vm6255, %v6488, 0.0
        %v6536 = vadd.f32 %v6534, %v6535
        %v6537 = vsel %vm6255, %v6489, 0.0
        %v6538 = vadd.f32 %v6536, %v6537
        %v6539 = vsel %vm6255, %v6490, 0.0
        %v6540 = vadd.f32 %v6538, %v6539
        %v6541 = vsel %vm6255, %v6491, 0.0
        %v6542 = vadd.f32 %v6540, %v6541
        %v6543 = vsel %vm6255, %v6492, 0.0
        %v6544 = vadd.f32 %v6542, %v6543
        %v6545 = vsel %vm6255, %v6493, 0.0
        %v6546 = vadd.f32 %v6544, %v6545
        %v6547 = vsel %vm6255, %v6494, 0.0
        %v6548 = vadd.f32 %v6546, %v6547
        %v6549 = vsel %vm6255, %v6495, 0.0
        %v6550 = vadd.f32 %v6548, %v6549
        %v6551 = vsel %vm6255, %v6496, 0.0
        %v6552 = vadd.f32 %v6550, %v6551
        %v6553 = vsel %vm6255, %v6497, 0.0
        %v6554 = vadd.f32 %v6552, %v6553
        %v6555 = vsel %vm6255, %v6498, 0.0
        %v6556 = vadd.f32 %v6554, %v6555
        %v6557 = vsel %vm6255, %v6499, 0.0
        %v6558 = vadd.f32 %v6556, %v6557
        %v6559 = vsel %vm6255, %v6500, 0.0
        %v6560 = vadd.f32 %v6558, %v6559
        %v6561 = vsel %vm6255, %v6501, 0.0
        %v6562 = vadd.f32 %v6560, %v6561
        %v6563 = vsel %vm6255, %v6502, 0.0
        %v6564 = vadd.f32 %v6562, %v6563
        %v6565 = vsel %vm6255, %v6503, 0.0
        %v6566 = vadd.f32 %v6564, %v6565
        %v6567 = vrot.slane %v6566, 4
        %v6568 = vadd.f32 %v6566, %v6567
        %v6569 = vrot.slane %v6568, 2
        %v6570 = vadd.f32 %v6568, %v6569
        %v6571 = vrot.slane %v6570, 1
        %v6572 = vadd.f32 %v6570, %v6571
        %v6573 = vld [vmem:[%s225] sm:$0x3]
        %vm6574 = vcmask 1040384
        %v6575 = vsel %vm6574, %v6471, %v6572
        %v6576 = vadd.f32 %v6573, %v6575
        %vm6577 = vcmask 58368
        %6578 = vst.msk [vmem:[%s225] sm:$0x3] %vm6577, %v6576
        %v6579 = vpack.c.bf16 %v6318, %v6318
        %v6580 = vpack.c.bf16 %v6320, %v6320
        %v6581 = vpack.c.bf16 %v6323, %v6323
        %v6582 = vpack.c.bf16 %v6325, %v6325
        %v6583 = vpack.c.bf16 %v6328, %v6328
        %v6584 = vpack.c.bf16 %v6330, %v6330
        %v6585 = vpack.c.bf16 %v6333, %v6333
        %v6586 = vpack.c.bf16 %v6335, %v6335
        %v6587 = vpack.c.bf16 %v6338, %v6338
        %v6588 = vpack.c.bf16 %v6340, %v6340
        %v6589 = vpack.c.bf16 %v6343, %v6343
        %v6590 = vpack.c.bf16 %v6345, %v6345
        %v6591 = vpack.c.bf16 %v6348, %v6348
        %v6592 = vpack.c.bf16 %v6350, %v6350
        %v6593 = vpack.c.bf16 %v6353, %v6353
        %v6594 = vpack.c.bf16 %v6355, %v6355
        %v6595 = vpack.c.bf16 %v6358, %v6358
        %v6596 = vpack.c.bf16 %v6360, %v6360
        %v6597 = vpack.c.bf16 %v6363, %v6363
        %v6598 = vpack.c.bf16 %v6365, %v6365
        %v6599 = vpack.c.bf16 %v6368, %v6368
        %v6600 = vpack.c.bf16 %v6370, %v6370
        %v6601 = vpack.c.bf16 %v6373, %v6373
        %v6602 = vpack.c.bf16 %v6375, %v6375
        %v6603 = vpack.c.bf16 %v6378, %v6378
        %v6604 = vpack.c.bf16 %v6380, %v6380
        %v6605 = vpack.c.bf16 %v6383, %v6383
        %v6606 = vpack.c.bf16 %v6385, %v6385
        %v6607 = vpack.c.bf16 %v6388, %v6388
        %v6608 = vpack.c.bf16 %v6390, %v6390
        %v6609 = vpack.c.bf16 %v6393, %v6393
        %v6610 = vpack.c.bf16 %v6395, %v6395
        %vm6611 = vcmask 60416
        %6612 = vst.msk [vmem:[%s218] sm:$0xf] %vm6611, %v6579
        %6613 = vst.msk [vmem:[%s218 + $0x4] sm:$0xf] %vm6611, %v6580
        %6614 = vst.msk [vmem:[%s218 + $0x8] sm:$0xf] %vm6611, %v6581
        %6615 = vst.msk [vmem:[%s218 + $0xc] sm:$0xf] %vm6611, %v6582
        %6616 = vst.msk [vmem:[%s218 + $0x10] sm:$0xf] %vm6611, %v6583
        %6617 = vst.msk [vmem:[%s218 + $0x14] sm:$0xf] %vm6611, %v6584
        %6618 = vst.msk [vmem:[%s218 + $0x18] sm:$0xf] %vm6611, %v6585
        %6619 = vst.msk [vmem:[%s218 + $0x1c] sm:$0xf] %vm6611, %v6586
        %6620 = vst.msk [vmem:[%s218 + $0x20] sm:$0xf] %vm6611, %v6587
        %6621 = vst.msk [vmem:[%s218 + $0x24] sm:$0xf] %vm6611, %v6588
        %6622 = vst.msk [vmem:[%s218 + $0x28] sm:$0xf] %vm6611, %v6589
        %6623 = vst.msk [vmem:[%s218 + $0x2c] sm:$0xf] %vm6611, %v6590
        %6624 = vst.msk [vmem:[%s218 + $0x30] sm:$0xf] %vm6611, %v6591
        %6625 = vst.msk [vmem:[%s218 + $0x34] sm:$0xf] %vm6611, %v6592
        %6626 = vst.msk [vmem:[%s218 + $0x38] sm:$0xf] %vm6611, %v6593
        %6627 = vst.msk [vmem:[%s218 + $0x3c] sm:$0xf] %vm6611, %v6594
        %6628 = vst.msk [vmem:[%s218 + $0x40] sm:$0xf] %vm6611, %v6595
        %6629 = vst.msk [vmem:[%s218 + $0x44] sm:$0xf] %vm6611, %v6596
        %6630 = vst.msk [vmem:[%s218 + $0x48] sm:$0xf] %vm6611, %v6597
        %6631 = vst.msk [vmem:[%s218 + $0x4c] sm:$0xf] %vm6611, %v6598
        %6632 = vst.msk [vmem:[%s218 + $0x50] sm:$0xf] %vm6611, %v6599
        %6633 = vst.msk [vmem:[%s218 + $0x54] sm:$0xf] %vm6611, %v6600
        %6634 = vst.msk [vmem:[%s218 + $0x58] sm:$0xf] %vm6611, %v6601
        %6635 = vst.msk [vmem:[%s218 + $0x5c] sm:$0xf] %vm6611, %v6602
        %6636 = vst.msk [vmem:[%s218 + $0x60] sm:$0xf] %vm6611, %v6603
        %6637 = vst.msk [vmem:[%s218 + $0x64] sm:$0xf] %vm6611, %v6604
        %6638 = vst.msk [vmem:[%s218 + $0x68] sm:$0xf] %vm6611, %v6605
        %6639 = vst.msk [vmem:[%s218 + $0x6c] sm:$0xf] %vm6611, %v6606
        %6640 = vst.msk [vmem:[%s218 + $0x70] sm:$0xf] %vm6611, %v6607
        %6641 = vst.msk [vmem:[%s218 + $0x74] sm:$0xf] %vm6611, %v6608
        %6642 = vst.msk [vmem:[%s218 + $0x78] sm:$0xf] %vm6611, %v6609
        %6643 = vst.msk [vmem:[%s218 + $0x7c] sm:$0xf] %vm6611, %v6610
        %s6644 = sand.u32 %s114, 1
        %s6645 = scalar_lea.sflag [#allocation3], %s6644
        %s6646 = sand.u32 %s114, 1
        %s6647 = smul.addr %s6646, 128
        %s6648 = scalar_lea.vmem [#allocation2], %s6647
        %s6649 = sand.u32 %s140, 1
        %s6650 = scalar_lea.sflag [#allocation5], %s6649
        %s6651 = sand.u32 %s140, 1
        %s6652 = smul.addr %s6651, 2
        %s6653 = scalar_lea.vmem [#allocation4], %s6652
        // Predicated region
        $region37: #{tpu_custom_call.1} parent=31 // pred_check
          %p6654 = pneg %p124
        $region38: #{tpu_custom_call.1} parent=31 // pred_check_branch
          %6656 = sbr.rel (%p6654) target = $region40
        $region39: #{tpu_custom_call.1} parent=31 // pred_region
          %s6657 = smul.u32 4, %s27
          %6659 = vsyncadd %s6645, 0
          %s6660 = smul.addr %s6657, 8
          %s6661 = smul.addr %s26, 64
          %s6662 = sadd.s32 %s6660, %s6661
          %s6663 = smul.addr %s6662, 4
          %s6664 = scalar_lea.hbm %s3, %s6663
          %s6665 = sshll.u32 %s6648, 4
          %s6666 = int_to_ptr.vmem [resolvable:$true] %s6665
          %s6667 = sshll.u32 %s6664, 4
          %s6668 = int_to_ptr.hbm [resolvable:$true] %s6667
          %6673 = dma.vmem_to_hbm [thread:$0]  %s6666, 2048, %s6668, %s6645, 64, 64, 4
        $region40: #{tpu_custom_call.1} parent=31 // pred_fallthru
          _
        // Predicated region
        $region41: #{tpu_custom_call.1} parent=31 // pred_check
          %p6674 = pneg %p150
        $region42: #{tpu_custom_call.1} parent=31 // pred_check_branch
          %6676 = sbr.rel (%p6674) target = $region44
        $region43: #{tpu_custom_call.1} parent=31 // pred_region
          %6678 = vsyncadd %s6650, 0
          %s6679 = smul.addr %s26, 2
          %s6680 = scalar_lea.hbm %s4, %s6679
          %s6682 = sshll.u32 %s6653, 4
          %s6683 = int_to_ptr.vmem [resolvable:$true] %s6682
          %s6684 = sshll.u32 %s6680, 4
          %s6685 = int_to_ptr.hbm [resolvable:$true] %s6684
          %6687 = dma.vmem_to_hbm [thread:$0]  %s6683, 32, %s6685, %s6650
        $region44: #{tpu_custom_call.1} parent=31 // pred_fallthru
          _
      $region32: #{tpu_custom_call.1} parent=5 // pred_fallthru
        _
      %p6688 = scmp.le.s32.totalorder 2, %s17
      // Predicated region
      $region45: #{tpu_custom_call.1} parent=5 // pred_check
        %p6689 = pneg %p6688
      $region46: #{tpu_custom_call.1} parent=5 // pred_check_branch
        %6691 = sbr.rel (%p6689) target = $region48
      $region47: #{tpu_custom_call.1} parent=5 // pred_region
        %s6692 = ssub.s32 %s17, 2
        // Predicated region
        $region49: #{tpu_custom_call.1} parent=47 // pred_check
          %p6693 = pneg %p130
        $region50: #{tpu_custom_call.1} parent=47 // pred_check_branch
          %6695 = sbr.rel (%p6693) target = $region52
        $region51: #{tpu_custom_call.1} parent=47 // pred_region
          %s6696 = sand.u32 %s115, 1
          %s6697 = scalar_lea.sflag [#allocation3], %s6696
          %s6698 = sand.u32 %s115, 1
          %s6699 = smul.addr %s6698, 128
          %s6700 = scalar_lea.vmem [#allocation2], %s6699
          %6702 = dma.done %s6697, 2048
        $region52: #{tpu_custom_call.1} parent=47 // pred_fallthru
          _
        // Predicated region
        $region53: #{tpu_custom_call.1} parent=47 // pred_check
          %p6703 = pneg %p156
        $region54: #{tpu_custom_call.1} parent=47 // pred_check_branch
          %6705 = sbr.rel (%p6703) target = $region56
        $region55: #{tpu_custom_call.1} parent=47 // pred_region
          %s6706 = sand.u32 %s141, 1
          %s6707 = scalar_lea.sflag [#allocation5], %s6706
          %s6708 = sand.u32 %s141, 1
          %s6709 = smul.addr %s6708, 2
          %s6710 = scalar_lea.vmem [#allocation4], %s6709
          %6712 = dma.done %s6707, 32
        $region56: #{tpu_custom_call.1} parent=47 // pred_fallthru
          _
      $region48: #{tpu_custom_call.1} parent=5 // pred_fallthru
        _
    $region6: #{tpu_custom_call.1} parent=1 // loop_footer
      %s21 = sadd.s32 1, %s17
    $region7: #{tpu_custom_call.1} parent=1 // loop_footer_branch
      %16 = sbr.rel target = $region3
    $region8: #{tpu_custom_call.1} parent=1 // loop_exit
      _
    %6713 = vsyncpa [#allocation3], 1
    %s6714 = scalar_lea.sflag [#allocation3], 1
    %6715 = vsyncpa %s6714, 1
    %6716 = vsyncpa [#allocation5], 1
    %s6717 = scalar_lea.sflag [#allocation5], 1
    %6718 = vsyncpa %s6717, 1

</llo_original>
